<compile_context>
chip_gen: v6e
topology: v6e:2x2x1
jax: 0.10.0
libtpu: 0.0.40
codegen_flags: <defaults>
</compile_context>

<pallas_src>
import functools
import math

import jax
import jax.numpy as jnp
from jax import lax
from jax.experimental import pallas as pl
from jax.experimental.pallas import tpu as pltpu


# ---------------------------------------------------------------------------
# small helpers
# ---------------------------------------------------------------------------
def _vmem_capacity_bytes():
    """Physical VMEM per TensorCore; conservative (v7x-sized) fallback."""
    try:
        return int(pltpu.get_tpu_info().vmem_capacity_bytes)
    except Exception:
        return 64 * 1024 * 1024


def _pick_tile(n, cand):
    """Largest tile in {cand, 512, 256, 128} (<= cand) dividing n, else n."""
    for t in (cand, 512, 256, 128):
        if t <= cand and n % t == 0:
            return t
    return n


def prepare_rope(cos, sin):
    """(S, HD//2) interleaved-rope tables -> (S, HD) rotate-half tables.

    With the even/odd de-interleave folded into Wq/Wk columns, RoPE becomes
    q' = q * cos_full + roll(q, HD//2) * sin_signed (full-width lanes only).
    """
    return (jnp.concatenate([cos, cos], axis=-1),
            jnp.concatenate([-sin, sin], axis=-1))


def prepare_block_params(params, *, num_heads):
    """One-time weight prep. Cache the result across forward calls: these
    reshapes/concats/casts touch every weight in HBM and must not run per
    step."""
    D = params['wq'].shape[0]
    H = num_heads
    HD = D // H
    F = params['w1'].shape[1]
    assert D % H == 0 and HD % 2 == 0

    big = _vmem_capacity_bytes() >= 96 * (1 << 20)

    # Head grouping: fill the 256-deep MXU K dim of the Wo contraction.
    G = max(1, min(H, 256 // HD))
    while H % G:
        G -= 1
    n_hg = H // G

    # Fold the rotary even/odd de-interleave into Wq/Wk columns and the
    # 1/sqrt(HD) score scale into Wq; fuse per-head Q/K/V into (H, D, 3*HD).
    perm = jnp.concatenate([jnp.arange(0, HD, 2), jnp.arange(1, HD, 2)])
    scale = 1.0 / math.sqrt(HD)

    def per_head(w):                        # (D, H*HD) -> (H, D, HD)
        return w.reshape(D, H, HD).transpose(1, 0, 2)

    wqkv = jnp.concatenate(
        [per_head(params['wq'] * scale)[:, :, perm],
         per_head(params['wk'])[:, :, perm],
         per_head(params['wv'])], axis=-1).astype(jnp.bfloat16)   # (H,D,3HD)

    # Wo rows grouped per head-group -> one K = G*HD contraction per step.
    wo_g = params['wo'].reshape(n_hg, G * HD, D).astype(jnp.bfloat16)

    # MLP: interleave w1/w3 column tiles of width TF so one (D, 2*TF) block
    # carries matching gate/up tiles; w2 streamed row-tile-wise.
    TF = _pick_tile(F, 512 if big else 256)
    n_f = F // TF
    w13 = jnp.concatenate(
        [params['w1'].reshape(D, n_f, TF),
         params['w3'].reshape(D, n_f, TF)],
        axis=-1).reshape(D, 2 * F).astype(jnp.bfloat16)
    w2 = params['w2'].astype(jnp.bfloat16)

    return dict(rms1=params['rms1'], rms2=params['rms2'],
                wqkv=wqkv, wo=wo_g, w13=w13, w2=w2,
                num_heads=H, head_dim=HD, group=G, tf=TF, ffn=F)


# ---------------------------------------------------------------------------
# Kernel 1: h = RMSNorm(x); per-head q/k/v = h @ Wqkv; RoPE(q, k); bf16 out.
# grid = (head-group, batch, token-tile) -- weights stay resident across the
# inner token sweep; RMSNorm is recomputed per step (negligible vs. matmul).
# ---------------------------------------------------------------------------
def _qkv_rope_kernel(x_ref, cos_ref, sin_ref, rms1_ref, wqkv_ref,
                     q_ref, k_ref, v_ref, *, eps):
    hd = cos_ref.shape[-1]
    half = hd // 2

    xb = x_ref[...]                                          # (TT, D) f32
    ms = jnp.mean(xb * xb, axis=-1, keepdims=True)
    hn = (xb * lax.rsqrt(ms + eps) * rms1_ref[0]).astype(jnp.bfloat16)

    cosf = cos_ref[...]                                      # (TT, HD)
    sinf = sin_ref[...]                                      # signed

    G = wqkv_ref.shape[0]
    for g in range(G):                                       # static unroll
        qkv = jnp.dot(hn, wqkv_ref[g],
                      preferred_element_type=jnp.float32)    # (TT, 3*HD)
        qg = qkv[:, :hd]
        kg = qkv[:, hd:2 * hd]
        vg = qkv[:, 2 * hd:]
        # rotate-half RoPE on full-width lanes (XLU roll, no slice+concat).
        q_ref[g] = (qg * cosf +
                    pltpu.roll(qg, shift=half, axis=1) * sinf
                    ).astype(jnp.bfloat16)
        k_ref[g] = (kg * cosf +
                    pltpu.roll(kg, shift=half, axis=1) * sinf
                    ).astype(jnp.bfloat16)
        v_ref[g] = vg.astype(jnp.bfloat16)


# ---------------------------------------------------------------------------
# Kernel 2: x1 = x + Wo(flash_softmax(q k^T + causal) @ v)
# grid = (batch, q-tile, head-group); head-group axis accumulates into o_ref.
# KV loop: `qi` unmasked tiles below the diagonal + one masked diagonal tile.
# ---------------------------------------------------------------------------
def _flash_attn_kernel(x_ref, q_ref, k_ref, v_ref, wo_ref, o_ref):
    qi = pl.program_id(1)
    hg = pl.program_id(2)
    G, TQ, HD = q_ref.shape

    q = q_ref[...]                              # (G, TQ, HD) bf16, pre-scaled

    acc0 = jnp.zeros((G, TQ, HD), jnp.float32)
    m0 = jnp.full((G, TQ, 1), -1e30, jnp.float32)
    l0 = jnp.zeros((G, TQ, 1), jnp.float32)

    def flash_update(kt, vt, carry, mask):
        acc, m_i, l_i = carry
        s = jnp.einsum('gqd,gkd->gqk', q, kt,
                       preferred_element_type=jnp.float32)   # (G, TQ, TKV)
        if mask is not None:
            s = jnp.where(mask, s, -1e30)
        m_new = jnp.maximum(m_i, jnp.max(s, axis=-1, keepdims=True))
        alpha = jnp.exp(m_i - m_new)
        p = jnp.exp(s - m_new)
        l_new = alpha * l_i + jnp.sum(p, axis=-1, keepdims=True)
        acc_new = alpha * acc + jnp.einsum(
            'gqk,gkd->gqd', p.astype(jnp.bfloat16), vt,
            preferred_element_type=jnp.float32)
        return acc_new, m_new, l_new

    # KV tiles strictly below the diagonal: no mask needed, count = qi.
    # (Dynamic trip count -> cannot unroll; bound skips all future KV tiles.)
    def unmasked_step(i, carry):
        start = pl.multiple_of(i * TQ, TQ)
        kt = k_ref[:, pl.ds(start, TQ), :]
        vt = v_ref[:, pl.ds(start, TQ), :]
        return flash_update(kt, vt, carry, None)

    carry = lax.fori_loop(0, qi, unmasked_step, (acc0, m0, l0))

    # Diagonal KV tile: causal mask with local indices (tiles are aligned).
    dstart = pl.multiple_of(qi * TQ, TQ)
    kt = k_ref[:, pl.ds(dstart, TQ), :]
    vt = v_ref[:, pl.ds(dstart, TQ), :]
    row = lax.broadcasted_iota(jnp.int32, (TQ, TQ), 0)
    col = lax.broadcasted_iota(jnp.int32, (TQ, TQ), 1)
    acc, _, l = flash_update(kt, vt, carry, (col <= row)[None, :, :])

    out = (acc * pl.reciprocal(l, approx=True)).astype(jnp.bfloat16)
    # concat the G head outputs -> (TQ, G*HD), single K=G*HD Wo contraction.
    out_cat = jnp.concatenate([out[g] for g in range(G)], axis=-1)
    contrib = jnp.dot(out_cat, wo_ref[...],
                      preferred_element_type=jnp.float32)    # (TQ, D)

    @pl.when(hg == 0)
    def _():
        o_ref[...] = x_ref[...] + contrib      # residual + first group

    @pl.when(hg != 0)
    def _():
        o_ref[...] = o_ref[...] + contrib      # accumulate remaining groups


# ---------------------------------------------------------------------------
# Kernel 3: out = x1 + (silu(h2 @ w1) * (h2 @ w3)) @ w2,  h2 = RMSNorm(x1)
# grid = (token-tile, ffn-tile); weights streamed tile-wise, f accumulates.
# ---------------------------------------------------------------------------
def _mlp_kernel(x1_ref, rms2_ref, w13_ref, w2_ref, o_ref, h2_ref, acc_ref,
                *, eps):
    f = pl.program_id(1)
    tf = w2_ref.shape[0]

    @pl.when(f == 0)
    def _():
        x1 = x1_ref[...]
        ms = jnp.mean(x1 * x1, axis=-1, keepdims=True)
        h2_ref[...] = (x1 * lax.rsqrt(ms + eps) * rms2_ref[0]
                       ).astype(jnp.bfloat16)
        acc_ref[...] = jnp.zeros_like(acc_ref)

    gu = jnp.dot(h2_ref[...], w13_ref[...],
                 preferred_element_type=jnp.float32)          # (TM, 2*TF)
    g, u = gu[:, :tf], gu[:, tf:]
    ff = (jax.nn.silu(g) * u).astype(jnp.bfloat16)
    acc_ref[...] += jnp.dot(ff, w2_ref[...],
                            preferred_element_type=jnp.float32)

    @pl.when(f == pl.num_programs(1) - 1)
    def _():
        o_ref[...] = x1_ref[...] + acc_ref[...]


# ---------------------------------------------------------------------------
# Wrapper
# ---------------------------------------------------------------------------
def llama_block(x, cos_full, sin_signed, prep, *, eps=1e-6):
    """Forward of Block. Returns (out, None), matching the PyTorch module
    with return_attn_weight=False, attn_mask=None, start_pos=None."""
    # TODO(synk): external attn_mask, KV-cache (start_pos), attention-weight
    # return and GQA (num_kv_heads != num_heads) are not implemented.
    # TODO(synk): on v5e the f32 inter-kernel residual stream (x1 / out)
    # could be emitted in bf16 to halve HBM traffic (precision tradeoff).
    B, S, D = x.shape
    H = prep['num_heads']
    HD = prep['head_dim']
    G = prep['group']
    n_hg = H // G
    F = prep['ffn']
    TF = prep['tf']
    n_f = F // TF

    cap = _vmem_capacity_bytes()
    vlimit = (cap * 3) // 4                 # leave headroom for DMA/scratch
    big = cap >= 96 * (1 << 20)

    TQ = _pick_tile(S, 256)                 # q / token / kv tile (aligned)
    n_qt = S // TQ

    # ---- Kernel 1: RMSNorm + fused per-head QKV + rotary -------------------
    qkv_shape = jax.ShapeDtypeStruct((B, H, S, HD), jnp.bfloat16)
    qkv_out_specs = [
        pl.BlockSpec((None, G, TQ, HD), lambda g, b, t: (b, g, t, 0))
        for _ in range(3)]
    q_rot, k_rot, v_heads = pl.pallas_call(
        functools.partial(_qkv_rope_kernel, eps=eps),
        out_shape=(qkv_shape, qkv_shape, qkv_shape),
        grid=(n_hg, B, n_qt),
        in_specs=[
            pl.BlockSpec((None, TQ, D), lambda g, b, t: (b, t, 0)),   # x
            pl.BlockSpec((TQ, HD), lambda g, b, t: (t, 0)),           # cos
            pl.BlockSpec((TQ, HD), lambda g, b, t: (t, 0)),           # sin
            pl.BlockSpec((1, D), lambda g, b, t: (0, 0)),             # rms_1
            pl.BlockSpec((G, D, 3 * HD), lambda g, b, t: (g, 0, 0)),  # Wqkv
        ],
        out_specs=qkv_out_specs,
        compiler_params=pltpu.CompilerParams(
            dimension_semantics=("parallel", "parallel", "parallel"),
            vmem_limit_bytes=vlimit),
    )(x, cos_full, sin_signed, prep['rms1'], prep['wqkv'])

    # ---- Kernel 2: flash attention + output projection + residual ----------
    x1 = pl.pallas_call(
        _flash_attn_kernel,
        out_shape=jax.ShapeDtypeStruct((B, S, D), jnp.float32),
        grid=(B, n_qt, n_hg),
        in_specs=[
            pl.BlockSpec((None, TQ, D), lambda b, q, g: (b, q, 0)),        # x
            pl.BlockSpec((None, G, TQ, HD), lambda b, q, g: (b, g, q, 0)),
            pl.BlockSpec((None, G, S, HD), lambda b, q, g: (b, g, 0, 0)),  # k
            pl.BlockSpec((None, G, S, HD), lambda b, q, g: (b, g, 0, 0)),  # v
            pl.BlockSpec((None, G * HD, D), lambda b, q, g: (g, 0, 0)),    # Wo
        ],
        out_specs=pl.BlockSpec((None, TQ, D), lambda b, q, g: (b, q, 0)),
        compiler_params=pltpu.CompilerParams(
            dimension_semantics=("parallel", "parallel", "arbitrary"),
            vmem_limit_bytes=vlimit),
    )(x, q_rot, k_rot, v_heads, prep['wo'])

    # ---- Kernel 3: SwiGLU MLP + residual ------------------------------------
    M = B * S
    TM = _pick_tile(M, 512 if big else 256)
    x1_2d = x1.reshape(M, D)

    out2d = pl.pallas_call(
        functools.partial(_mlp_kernel, eps=eps),
        out_shape=jax.ShapeDtypeStruct((M, D), jnp.float32),
        grid=(M // TM, n_f),
        in_specs=[
            pl.BlockSpec((TM, D), lambda m, f: (m, 0)),           # x1 tokens
            pl.BlockSpec((1, D), lambda m, f: (0, 0)),            # rms_2.w
            pl.BlockSpec((D, 2 * TF), lambda m, f: (0, f)),       # [w1|w3]
            pl.BlockSpec((TF, D), lambda m, f: (f, 0)),           # w2 tile
        ],
        out_specs=pl.BlockSpec((TM, D), lambda m, f: (m, 0)),
        scratch_shapes=[pltpu.VMEM((TM, D), jnp.bfloat16),        # RMSNorm(x1)
                        pltpu.VMEM((TM, D), jnp.float32)],        # f32 accum
        compiler_params=pltpu.CompilerParams(
            dimension_semantics=("parallel", "arbitrary"),
            vmem_limit_bytes=vlimit),
    )(x1_2d, prep['rms2'], prep['w13'], prep['w2'])

    return out2d.reshape(B, S, D), None


# ---------------------------------------------------------------------------
# Pure-JAX f32 reference (mirrors the PyTorch semantics) for validation.
# ---------------------------------------------------------------------------
def reference_block(x, cos, sin, p, *, num_heads, eps=1e-6):
    B, S, D = x.shape
    H = num_heads
    HD = D // H

    def rms(v, w):
        return v * lax.rsqrt(jnp.mean(v * v, -1, keepdims=True) + eps) * w

    h = rms(x, p['rms1'][0])
    q = (h @ p['wq']).reshape(B, S, H, HD)
    k = (h @ p['wk']).reshape(B, S, H, HD)
    v = (h @ p['wv']).reshape(B, S, H, HD)

    def rope(t):
        t = t.reshape(B, S, H, HD // 2, 2)
        te, to = t[..., 0], t[..., 1]
        c = cos[None, :, None, :]
        s = sin[None, :, None, :]
        return jnp.stack([te * c - to * s, te * s + to * c], -1
                         ).reshape(B, S, H, HD)

    q, k = rope(q), rope(k)
    scores = jnp.einsum('bshd,bthd->bhst', q, k) / math.sqrt(HD)
    causal = jnp.tril(jnp.ones((S, S), bool))
    scores = jnp.where(causal[None, None], scores, -1e30)
    pr = jax.nn.softmax(scores, axis=-1)
    attn = jnp.einsum('bhst,bthd->bshd', pr, v).reshape(B, S, D) @ p['wo']
    x1 = x + attn
    h2 = rms(x1, p['rms2'][0])
    ff = (jax.nn.silu(h2 @ p['w1']) * (h2 @ p['w3'])) @ p['w2']
    return x1 + ff


# ---------------------------------------------------------------------------
if __name__ == "__main__":
    # Shapes chosen so every tiling path is exercised: 2 q-tiles (causal
    # early-exit + diagonal mask), 2 head groups (o_ref accumulation),
    # multiple MLP ffn tiles -- while staying small.
    B, S, D, H = 2, 512, 512, 4
    HD = D // H
    eps = 1e-6

    # SwiGLU hidden dim (llama rule): 4*dim -> 2/3 -> round to multiple_of.
    multiple_of = 256
    hidden = int(2 * (4 * D) / 3)
    F = multiple_of * ((hidden + multiple_of - 1) // multiple_of)

    key = jax.random.PRNGKey(0)
    kx, *kw = jax.random.split(key, 9)
    scale = 0.02
    params = {
        'rms1': jnp.ones((1, D), jnp.float32),
        'rms2': jnp.ones((1, D), jnp.float32),
        'wq': scale * jax.random.normal(kw[0], (D, D), jnp.float32),
        'wk': scale * jax.random.normal(kw[1], (D, D), jnp.float32),
        'wv': scale * jax.random.normal(kw[2], (D, D), jnp.float32),
        'wo': scale * jax.random.normal(kw[3], (D, D), jnp.float32),
        'w1': scale * jax.random.normal(kw[4], (D, F), jnp.float32),
        'w3': scale * jax.random.normal(kw[5], (D, F), jnp.float32),
        'w2': scale * jax.random.normal(kw[6], (F, D), jnp.float32),
    }

    x = jax.random.normal(kx, (B, S, D), jnp.float32)

    # rotary frequencies (theta = 10000), real cos/sin of freqs_cis
    theta = 10000.0
    inv_freq = 1.0 / (theta ** (jnp.arange(0, HD, 2, dtype=jnp.float32) / HD))
    t = jnp.arange(S, dtype=jnp.float32)
    ang = jnp.outer(t, inv_freq)                      # (S, HD//2)
    cos, sin = jnp.cos(ang), jnp.sin(ang)

    # One-time prep (cached across calls in a real deployment).
    prep = prepare_block_params(params, num_heads=H)
    cos_full, sin_signed = prepare_rope(cos, sin)

    out, attn_w = llama_block(x, cos_full, sin_signed, prep, eps=eps)
    out = jax.block_until_ready(out)

    ref = reference_block(x, cos, sin, params, num_heads=H, eps=eps)
    assert out.shape == (B, S, D) and attn_w is None
    # bf16 matmul operands in the kernel vs f32 reference -> looser tolerance
    max_err = float(jnp.max(jnp.abs(out - ref)))
    assert jnp.allclose(out, ref, rtol=5e-2, atol=5e-2), max_err

    print("KERNEL_OK")
</pallas_src>

<mosaic_0001>
module attributes {stable_mosaic.version = 11 : i64} {
  func.func @_qkv_rope_kernel(%arg0: i32, %arg1: i32, %arg2: i32, %arg3: memref<1x256x512xf32, #tpu.memory_space<vmem>>, %arg4: memref<256x128xf32, #tpu.memory_space<vmem>>, %arg5: memref<256x128xf32, #tpu.memory_space<vmem>>, %arg6: memref<1x512xf32, #tpu.memory_space<vmem>>, %arg7: memref<2x512x384xbf16, #tpu.memory_space<vmem>>, %arg8: memref<1x2x256x128xbf16, #tpu.memory_space<vmem>>, %arg9: memref<1x2x256x128xbf16, #tpu.memory_space<vmem>>, %arg10: memref<1x2x256x128xbf16, #tpu.memory_space<vmem>>) attributes {dimension_semantics = [#tpu.dimension_semantics<parallel>, #tpu.dimension_semantics<parallel>, #tpu.dimension_semantics<parallel>], iteration_bounds = array<i64: 2, 2, 2>, scalar_prefetch = 0 : i64, scratch_operands = 0 : i64, tpu.core_type = #tpu.core_type<tc>, window_params = [{transform_indices = @transform_0, window_bounds = array<i64: 1, 256, 512>}, {transform_indices = @transform_1, window_bounds = array<i64: 256, 128>}, {transform_indices = @transform_2, window_bounds = array<i64: 256, 128>}, {pipeline_mode = #tpu.pipeline_mode<synchronous>, transform_indices = @transform_3, window_bounds = array<i64: 1, 512>}, {transform_indices = @transform_4, window_bounds = array<i64: 2, 512, 384>}, {transform_indices = @transform_5, window_bounds = array<i64: 1, 2, 256, 128>}, {transform_indices = @transform_6, window_bounds = array<i64: 1, 2, 256, 128>}, {transform_indices = @transform_7, window_bounds = array<i64: 1, 2, 256, 128>}]} {
    %c0 = arith.constant 0 : index
    %c0_0 = arith.constant 0 : index
    %c0_1 = arith.constant 0 : index
    %0 = vector.load %arg3[%c0, %c0_0, %c0_1] : memref<1x256x512xf32, #tpu.memory_space<vmem>>, vector<1x256x512xf32>
    %1 = vector.shape_cast %0 : vector<1x256x512xf32> to vector<256x512xf32>
    %2 = arith.mulf %1, %1 : vector<256x512xf32>
    %cst = arith.constant dense<0.000000e+00> : vector<256xf32>
    %3 = vector.multi_reduction <add>, %2, %cst [1] : vector<256x512xf32> to vector<256xf32>
    %4 = vector.shape_cast %3 : vector<256xf32> to vector<256x1xf32>
    %cst_2 = arith.constant 5.120000e+02 : f32
    %5 = vector.broadcast %cst_2 : f32 to vector<256x1xf32>
    %6 = arith.divf %4, %5 : vector<256x1xf32>
    %cst_3 = arith.constant 9.99999997E-7 : f32
    %7 = vector.broadcast %cst_3 : f32 to vector<256x1xf32>
    %8 = arith.addf %6, %7 : vector<256x1xf32>
    %9 = math.rsqrt %8 : vector<256x1xf32>
    %10 = vector.broadcast %9 : vector<256x1xf32> to vector<256x512xf32>
    %11 = arith.mulf %1, %10 : vector<256x512xf32>
    %c0_4 = arith.constant 0 : index
    %c0_5 = arith.constant 0 : index
    %12 = vector.load %arg6[%c0_4, %c0_5] : memref<1x512xf32, #tpu.memory_space<vmem>>, vector<1x512xf32>
    %13 = vector.shape_cast %12 : vector<1x512xf32> to vector<512xf32>
    %14 = vector.shape_cast %13 : vector<512xf32> to vector<1x512xf32>
    %15 = vector.broadcast %14 : vector<1x512xf32> to vector<256x512xf32>
    %16 = arith.mulf %11, %15 : vector<256x512xf32>
    %17 = arith.truncf %16 : vector<256x512xf32> to vector<256x512xbf16>
    %c0_6 = arith.constant 0 : index
    %c0_7 = arith.constant 0 : index
    %18 = vector.load %arg4[%c0_6, %c0_7] : memref<256x128xf32, #tpu.memory_space<vmem>>, vector<256x128xf32>
    %c0_8 = arith.constant 0 : index
    %c0_9 = arith.constant 0 : index
    %19 = vector.load %arg5[%c0_8, %c0_9] : memref<256x128xf32, #tpu.memory_space<vmem>>, vector<256x128xf32>
    %c0_10 = arith.constant 0 : index
    %c0_11 = arith.constant 0 : index
    %c0_12 = arith.constant 0 : index
    %20 = vector.load %arg7[%c0_10, %c0_11, %c0_12] : memref<2x512x384xbf16, #tpu.memory_space<vmem>>, vector<1x512x384xbf16>
    %21 = vector.shape_cast %20 : vector<1x512x384xbf16> to vector<512x384xbf16>
    %cst_13 = arith.constant dense<0.000000e+00> : vector<256x384xf32>
    %22 = tpu.matmul %17, %21, %cst_13 {dimension_numbers = #tpu.dot_dimension_numbers<[1], [0], [0], [1], [0, 0, 1, 1], [], []>} : vector<256x512xbf16>, vector<512x384xbf16>, vector<256x384xf32> -> vector<256x384xf32>
    %23 = vector.extract_strided_slice %22 {offsets = [0, 0], sizes = [256, 128], strides = [1, 1]} : vector<256x384xf32> to vector<256x128xf32>
    %24 = vector.extract_strided_slice %22 {offsets = [0, 128], sizes = [256, 128], strides = [1, 1]} : vector<256x384xf32> to vector<256x128xf32>
    %25 = vector.extract_strided_slice %22 {offsets = [0, 256], sizes = [256, 128], strides = [1, 1]} : vector<256x384xf32> to vector<256x128xf32>
    %26 = arith.mulf %23, %18 : vector<256x128xf32>
    %c64_i32 = arith.constant 64 : i32
    %27 = tpu.dynamic_rotate %23 by %c64_i32 dim 1 : vector<256x128xf32>, i32 -> vector<256x128xf32>
    %28 = arith.mulf %27, %19 : vector<256x128xf32>
    %29 = arith.addf %26, %28 : vector<256x128xf32>
    %30 = arith.truncf %29 : vector<256x128xf32> to vector<256x128xbf16>
    %c0_14 = arith.constant 0 : index
    %c0_15 = arith.constant 0 : index
    %c0_16 = arith.constant 0 : index
    %c0_17 = arith.constant 0 : index
    %31 = vector.load %arg8[%c0_14, %c0_15, %c0_16, %c0_17] : memref<1x2x256x128xbf16, #tpu.memory_space<vmem>>, vector<1x1x256x128xbf16>
    %32 = vector.shape_cast %31 : vector<1x1x256x128xbf16> to vector<256x128xbf16>
    %33 = vector.shape_cast %30 : vector<256x128xbf16> to vector<1x1x256x128xbf16>
    tpu.vector_store %arg8[%c0_14, %c0_15, %c0_16, %c0_17], %33 {strides = array<i32>} : memref<1x2x256x128xbf16, #tpu.memory_space<vmem>>, vector<1x1x256x128xbf16>,
    %34 = arith.mulf %24, %18 : vector<256x128xf32>
    %c64_i32_18 = arith.constant 64 : i32
    %35 = tpu.dynamic_rotate %24 by %c64_i32_18 dim 1 : vector<256x128xf32>, i32 -> vector<256x128xf32>
    %36 = arith.mulf %35, %19 : vector<256x128xf32>
    %37 = arith.addf %34, %36 : vector<256x128xf32>
    %38 = arith.truncf %37 : vector<256x128xf32> to vector<256x128xbf16>
    %c0_19 = arith.constant 0 : index
    %c0_20 = arith.constant 0 : index
    %c0_21 = arith.constant 0 : index
    %c0_22 = arith.constant 0 : index
    %39 = vector.load %arg9[%c0_19, %c0_20, %c0_21, %c0_22] : memref<1x2x256x128xbf16, #tpu.memory_space<vmem>>, vector<1x1x256x128xbf16>
    %40 = vector.shape_cast %39 : vector<1x1x256x128xbf16> to vector<256x128xbf16>
    %41 = vector.shape_cast %38 : vector<256x128xbf16> to vector<1x1x256x128xbf16>
    tpu.vector_store %arg9[%c0_19, %c0_20, %c0_21, %c0_22], %41 {strides = array<i32>} : memref<1x2x256x128xbf16, #tpu.memory_space<vmem>>, vector<1x1x256x128xbf16>,
    %42 = arith.truncf %25 : vector<256x128xf32> to vector<256x128xbf16>
    %c0_23 = arith.constant 0 : index
    %c0_24 = arith.constant 0 : index
    %c0_25 = arith.constant 0 : index
    %c0_26 = arith.constant 0 : index
    %43 = vector.load %arg10[%c0_23, %c0_24, %c0_25, %c0_26] : memref<1x2x256x128xbf16, #tpu.memory_space<vmem>>, vector<1x1x256x128xbf16>
    %44 = vector.shape_cast %43 : vector<1x1x256x128xbf16> to vector<256x128xbf16>
    %45 = vector.shape_cast %42 : vector<256x128xbf16> to vector<1x1x256x128xbf16>
    tpu.vector_store %arg10[%c0_23, %c0_24, %c0_25, %c0_26], %45 {strides = array<i32>} : memref<1x2x256x128xbf16, #tpu.memory_space<vmem>>, vector<1x1x256x128xbf16>,
    %c1 = arith.constant 1 : index
    %c0_27 = arith.constant 0 : index
    %c0_28 = arith.constant 0 : index
    %46 = vector.load %arg7[%c1, %c0_27, %c0_28] : memref<2x512x384xbf16, #tpu.memory_space<vmem>>, vector<1x512x384xbf16>
    %47 = vector.shape_cast %46 : vector<1x512x384xbf16> to vector<512x384xbf16>
    %cst_29 = arith.constant dense<0.000000e+00> : vector<256x384xf32>
    %48 = tpu.matmul %17, %47, %cst_29 {dimension_numbers = #tpu.dot_dimension_numbers<[1], [0], [0], [1], [0, 0, 1, 1], [], []>} : vector<256x512xbf16>, vector<512x384xbf16>, vector<256x384xf32> -> vector<256x384xf32>
    %49 = vector.extract_strided_slice %48 {offsets = [0, 0], sizes = [256, 128], strides = [1, 1]} : vector<256x384xf32> to vector<256x128xf32>
    %50 = vector.extract_strided_slice %48 {offsets = [0, 128], sizes = [256, 128], strides = [1, 1]} : vector<256x384xf32> to vector<256x128xf32>
    %51 = vector.extract_strided_slice %48 {offsets = [0, 256], sizes = [256, 128], strides = [1, 1]} : vector<256x384xf32> to vector<256x128xf32>
    %52 = arith.mulf %49, %18 : vector<256x128xf32>
    %c64_i32_30 = arith.constant 64 : i32
    %53 = tpu.dynamic_rotate %49 by %c64_i32_30 dim 1 : vector<256x128xf32>, i32 -> vector<256x128xf32>
    %54 = arith.mulf %53, %19 : vector<256x128xf32>
    %55 = arith.addf %52, %54 : vector<256x128xf32>
    %56 = arith.truncf %55 : vector<256x128xf32> to vector<256x128xbf16>
    %c0_31 = arith.constant 0 : index
    %c1_32 = arith.constant 1 : index
    %c0_33 = arith.constant 0 : index
    %c0_34 = arith.constant 0 : index
    %57 = vector.load %arg8[%c0_31, %c1_32, %c0_33, %c0_34] : memref<1x2x256x128xbf16, #tpu.memory_space<vmem>>, vector<1x1x256x128xbf16>
    %58 = vector.shape_cast %57 : vector<1x1x256x128xbf16> to vector<256x128xbf16>
    %59 = vector.shape_cast %56 : vector<256x128xbf16> to vector<1x1x256x128xbf16>
    tpu.vector_store %arg8[%c0_31, %c1_32, %c0_33, %c0_34], %59 {strides = array<i32>} : memref<1x2x256x128xbf16, #tpu.memory_space<vmem>>, vector<1x1x256x128xbf16>,
    %60 = arith.mulf %50, %18 : vector<256x128xf32>
    %c64_i32_35 = arith.constant 64 : i32
    %61 = tpu.dynamic_rotate %50 by %c64_i32_35 dim 1 : vector<256x128xf32>, i32 -> vector<256x128xf32>
    %62 = arith.mulf %61, %19 : vector<256x128xf32>
    %63 = arith.addf %60, %62 : vector<256x128xf32>
    %64 = arith.truncf %63 : vector<256x128xf32> to vector<256x128xbf16>
    %c0_36 = arith.constant 0 : index
    %c1_37 = arith.constant 1 : index
    %c0_38 = arith.constant 0 : index
    %c0_39 = arith.constant 0 : index
    %65 = vector.load %arg9[%c0_36, %c1_37, %c0_38, %c0_39] : memref<1x2x256x128xbf16, #tpu.memory_space<vmem>>, vector<1x1x256x128xbf16>
    %66 = vector.shape_cast %65 : vector<1x1x256x128xbf16> to vector<256x128xbf16>
    %67 = vector.shape_cast %64 : vector<256x128xbf16> to vector<1x1x256x128xbf16>
    tpu.vector_store %arg9[%c0_36, %c1_37, %c0_38, %c0_39], %67 {strides = array<i32>} : memref<1x2x256x128xbf16, #tpu.memory_space<vmem>>, vector<1x1x256x128xbf16>,
    %68 = arith.truncf %51 : vector<256x128xf32> to vector<256x128xbf16>
    %c0_40 = arith.constant 0 : index
    %c1_41 = arith.constant 1 : index
    %c0_42 = arith.constant 0 : index
    %c0_43 = arith.constant 0 : index
    %69 = vector.load %arg10[%c0_40, %c1_41, %c0_42, %c0_43] : memref<1x2x256x128xbf16, #tpu.memory_space<vmem>>, vector<1x1x256x128xbf16>
    %70 = vector.shape_cast %69 : vector<1x1x256x128xbf16> to vector<256x128xbf16>
    %71 = vector.shape_cast %68 : vector<256x128xbf16> to vector<1x1x256x128xbf16>
    tpu.vector_store %arg10[%c0_40, %c1_41, %c0_42, %c0_43], %71 {strides = array<i32>} : memref<1x2x256x128xbf16, #tpu.memory_space<vmem>>, vector<1x1x256x128xbf16>,
    return
  }
  func.func @transform_0(%arg0: i32, %arg1: i32, %arg2: i32) -> (i32, i32, i32) {
    %c0_i32 = arith.constant 0 : i32
    %c0_i32_0 = arith.constant 0 : i32
    return %arg1, %arg2, %c0_i32 : i32, i32, i32
  }
  func.func @transform_1(%arg0: i32, %arg1: i32, %arg2: i32) -> (i32, i32) {
    %c0_i32 = arith.constant 0 : i32
    %c0_i32_0 = arith.constant 0 : i32
    return %arg2, %c0_i32 : i32, i32
  }
  func.func @transform_2(%arg0: i32, %arg1: i32, %arg2: i32) -> (i32, i32) {
    %c0_i32 = arith.constant 0 : i32
    %c0_i32_0 = arith.constant 0 : i32
    return %arg2, %c0_i32 : i32, i32
  }
  func.func @transform_3(%arg0: i32, %arg1: i32, %arg2: i32) -> (i32, i32) {
    %c0_i32 = arith.constant 0 : i32
    %c0_i32_0 = arith.constant 0 : i32
    %c0_i32_1 = arith.constant 0 : i32
    return %c0_i32, %c0_i32_0 : i32, i32
  }
  func.func @transform_4(%arg0: i32, %arg1: i32, %arg2: i32) -> (i32, i32, i32) {
    %c0_i32 = arith.constant 0 : i32
    %c0_i32_0 = arith.constant 0 : i32
    %c0_i32_1 = arith.constant 0 : i32
    return %arg0, %c0_i32, %c0_i32_0 : i32, i32, i32
  }
  func.func @transform_5(%arg0: i32, %arg1: i32, %arg2: i32) -> (i32, i32, i32, i32) {
    %c0_i32 = arith.constant 0 : i32
    %c0_i32_0 = arith.constant 0 : i32
    return %arg1, %arg0, %arg2, %c0_i32 : i32, i32, i32, i32
  }
  func.func @transform_6(%arg0: i32, %arg1: i32, %arg2: i32) -> (i32, i32, i32, i32) {
    %c0_i32 = arith.constant 0 : i32
    %c0_i32_0 = arith.constant 0 : i32
    return %arg1, %arg0, %arg2, %c0_i32 : i32, i32, i32, i32
  }
  func.func @transform_7(%arg0: i32, %arg1: i32, %arg2: i32) -> (i32, i32, i32, i32) {
    %c0_i32 = arith.constant 0 : i32
    %c0_i32_0 = arith.constant 0 : i32
    return %arg1, %arg0, %arg2, %c0_i32 : i32, i32, i32, i32
  }
}

</mosaic_0001>

<llo_original>
// kernel: tpu_custom_call.1
$region0: #{tpu_custom_call.1}
  #allocation0 [shape = 'u32[]', space=smem, size = 0x4, offset = 0x4, fixed_abs, tag = 'smem constant byte address 0x4 - core index']
  #allocation1 [shape = 'u32[144,128]{1,0:T(1,128)}', space=vmem, size = 0x12000, scoped, tag = 'internal scratch']
  #allocation15 [shape = 's32[]', space=sflag, size = 0x4, offset = 0, fixed_abs, tag = 'sflag constant byte address 0x0 - dummy sync flag']
  #allocation17 [shape = 's32[]', space=sflag, size = 0x4, offset = 0, fixed_abs, tag = 'sflag constant byte address 0x0 - dummy sync flag']
  #allocation19 [shape = 's32[]', space=sflag, size = 0x4, offset = 0, fixed_abs, tag = 'sflag constant byte address 0x0 - dummy sync flag']
  %s0 = inlined_call_operand.hbm [shape: f32[2,512,512], index: 0, kind: input, shape index: {}]
  %s1 = inlined_call_operand.hbm [shape: f32[512,128], index: 1, kind: input, shape index: {}]
  %s2 = inlined_call_operand.hbm [shape: f32[512,128], index: 2, kind: input, shape index: {}]
  %s3 = inlined_call_operand.hbm [shape: f32[1,512], index: 3, kind: input, shape index: {}]
  %s4 = inlined_call_operand.hbm [shape: bf16[4,512,384], index: 4, kind: input, shape index: {}]
  %s5 = inlined_call_operand.hbm [shape: bf16[2,4,512,128], index: 5, kind: output, shape index: {0}]
  %s6 = inlined_call_operand.hbm [shape: bf16[2,4,512,128], index: 6, kind: output, shape index: {1}]
  %s7 = inlined_call_operand.hbm [shape: bf16[2,4,512,128], index: 7, kind: output, shape index: {2}]
  %8 = xla_tuple %s5, %s6, %s7
  %s9 = sld [smem:[#allocation0]]
  $region89: #{tpu_custom_call.1} parent=0
    _
  %s11 = ssub.s32 1, %s9
  %s12 = scalar_select 0, %s11, %s9
  $region1: #{tpu_custom_call.1} parent=0
    #allocation2 [shape = 'u8[1048576]{0}', space=vmem, size = 0x100000, scoped, tag = 'input window, operand 0']
    #allocation3 [shape = 's32[2]{0}', space=sflag, size = 0x8, scoped, tag = 'scoped memory for tpu_custom_call.1']
    #allocation4 [shape = 's32[2]{0}', space=sflag, size = 0x8, scoped, tag = 'scoped memory for tpu_custom_call.1']
    #allocation5 [shape = 'u8[262144]{0}', space=vmem, size = 0x40000, scoped, tag = 'input window, operand 1']
    #allocation6 [shape = 's32[2]{0}', space=sflag, size = 0x8, scoped, tag = 'scoped memory for tpu_custom_call.1']
    #allocation7 [shape = 'u8[262144]{0}', space=vmem, size = 0x40000, scoped, tag = 'input window, operand 2']
    #allocation8 [shape = 'u8[2048]{0}', space=vmem, size = 0x800, scoped, tag = 'input window, operand 3, single buffered']
    #allocation9 [shape = 's32[1]{0}', space=sflag, size = 0x4, scoped, tag = 'scoped memory for tpu_custom_call.1']
    #allocation10 [shape = 'u8[1572864]{0}', space=vmem, size = 0x180000, scoped, tag = 'input window, operand 4']
    #allocation11 [shape = 'u8[262144]{0}', space=vmem, size = 0x40000, scoped, tag = 'output window, operand 0']
    #allocation12 [shape = 'u8[262144]{0}', space=vmem, size = 0x40000, scoped, tag = 'output window, operand 1']
    #allocation13 [shape = 's32[2]{0}', space=sflag, size = 0x8, scoped, tag = 'scoped memory for tpu_custom_call.1']
    #allocation14 [shape = 'u8[262144]{0}', space=vmem, size = 0x40000, scoped, tag = 'output window, operand 2']
    %13 = vsyncpa [#allocation3], 0
    %s14 = scalar_lea.sflag [#allocation3], 1
    %15 = vsyncpa %s14, 0
    %16 = vsyncpa [#allocation6], 0
    %s17 = scalar_lea.sflag [#allocation6], 1
    %18 = vsyncpa %s17, 0
    %19 = vsyncpa [#allocation9], 0
    %20 = vsyncpa [#allocation4], 0
    %s21 = scalar_lea.sflag [#allocation4], 1
    %22 = vsyncpa %s21, 0
    %23 = vsyncpa [#allocation13], 0
    %s24 = scalar_lea.sflag [#allocation13], 1
    %25 = vsyncpa %s24, 0
    loop: start=0, step=1, limit=10
    $region2: #{tpu_custom_call.1} parent=1 // loop_pre_header
      _
    $region3: #{tpu_custom_call.1} parent=1 // loop_header
      %s27 = sphi 0, %s31
      %p28 = scmp.ge.s32.totalorder %s27, 10
      %s34 = sphi 0, %s53
      %s35 = sphi 0, %s49
      %s36 = sphi 0, %s45
      %s37 = sphi 0, %s34
      %s38 = sphi 0, %s35
      %s39 = sphi 0, %s36
      %s40 = sphi 0, %s37
      %s41 = sphi 0, %s38
      %s42 = sphi 0, %s39
      %s58 = sphi 0, %s60
      %s61 = sphi 0, %s58
      %s62 = sphi 0, %s61
      %s78 = sphi 0, %s62
      %s84 = sphi 0, %s86
      %s87 = sphi 0, %s84
      %s88 = sphi 0, %s87
      %s104 = sphi 0, %s88
      %s110 = sphi 0, %s112
      %s113 = sphi 0, %s110
      %s114 = sphi 0, %s113
      %s130 = sphi 0, %s114
      %s134 = sphi 0, %s134
      %s136 = sphi 0, %s134
      %s137 = sphi 0, %s136
      %s151 = sphi 0, %s137
      %s157 = sphi 0, %s159
      %s160 = sphi 0, %s157
      %s161 = sphi 0, %s160
      %s177 = sphi 0, %s161
      %s187 = sphi 0, %s189
      %s190 = sphi 0, %s187
      %s191 = sphi 0, %s190
      %s207 = sphi 0, %s191
      %s217 = sphi 0, %s219
      %s220 = sphi 0, %s217
      %s221 = sphi 0, %s220
      %s237 = sphi 0, %s221
      %s247 = sphi 0, %s249
      %s250 = sphi 0, %s247
      %s251 = sphi 0, %s250
      %s267 = sphi 0, %s251
    $region4: #{tpu_custom_call.1} parent=1 // loop_header_branch
      %30 = sbr.rel (%p28) target = $region8
    $region5: #{tpu_custom_call.1} parent=1 // loop_body
      %s32 = ssub.s32 %s27, 1
      %s33 = ssub.s32 %s27, 2
      %s43 = sadd.s32 1, %s36
      %p44 = scmp.ge.s32.totalorder %s43, 2
      %s45 = scalar_select %p44, 0, %s43
      %s46 = sadd.s32 1, %s35
      %s47 = scalar_select %p44, %s46, %s35
      %p48 = scmp.ge.s32.totalorder %s47, 2
      %s49 = scalar_select %p48, 0, %s47
      %s50 = sadd.s32 1, %s34
      %s51 = scalar_select %p48, %s50, %s34
      %p52 = scmp.ge.s32.totalorder %s51, 2
      %s53 = scalar_select %p52, 0, %s51
      %s54 = ssub.s32 %s35, %s49
      %s55 = ssub.s32 %s36, %s45
      %s56 = sor.u32 %s54, %s55
      %p57 = scmp.eq.s32.totalorder %s56, 0
      %s59 = sadd.s32 %s58, 1
      %s60 = scalar_select %p57, %s58, %s59
      %p63 = pneg %p57
      %p64 = scmp.eq.s32.totalorder %s27, 7
      %p65 = por %p63, %p64
      %p66 = scmp.ne.s32.totalorder %s58, %s61
      %p67 = scmp.eq.s32.totalorder %s27, 0
      %p68 = por %p66, %p67
      %p69 = scmp.ne.s32.totalorder %s58, %s61
      %p70 = scmp.eq.s32.totalorder %s32, 7
      %p71 = por %p69, %p70
      %p72 = scmp.ne.s32.totalorder %s61, %s62
      %p73 = scmp.eq.s32.totalorder %s32, 0
      %p74 = por %p72, %p73
      %p75 = scmp.ne.s32.totalorder %s61, %s62
      %p76 = scmp.eq.s32.totalorder %s33, 7
      %p77 = por %p75, %p76
      %p79 = scmp.ne.s32.totalorder %s62, %s78
      %p80 = scmp.eq.s32.totalorder %s33, 0
      %p81 = por %p79, %p80
      %s82 = ssub.s32 %s36, %s45
      %p83 = scmp.eq.s32.totalorder %s82, 0
      %s85 = sadd.s32 %s84, 1
      %s86 = scalar_select %p83, %s84, %s85
      %p89 = pneg %p83
      %p90 = scmp.eq.s32.totalorder %s27, 7
      %p91 = por %p89, %p90
      %p92 = scmp.ne.s32.totalorder %s84, %s87
      %p93 = scmp.eq.s32.totalorder %s27, 0
      %p94 = por %p92, %p93
      %p95 = scmp.ne.s32.totalorder %s84, %s87
      %p96 = scmp.eq.s32.totalorder %s32, 7
      %p97 = por %p95, %p96
      %p98 = scmp.ne.s32.totalorder %s87, %s88
      %p99 = scmp.eq.s32.totalorder %s32, 0
      %p100 = por %p98, %p99
      %p101 = scmp.ne.s32.totalorder %s87, %s88
      %p102 = scmp.eq.s32.totalorder %s33, 7
      %p103 = por %p101, %p102
      %p105 = scmp.ne.s32.totalorder %s88, %s104
      %p106 = scmp.eq.s32.totalorder %s33, 0
      %p107 = por %p105, %p106
      %s108 = ssub.s32 %s36, %s45
      %p109 = scmp.eq.s32.totalorder %s108, 0
      %s111 = sadd.s32 %s110, 1
      %s112 = scalar_select %p109, %s110, %s111
      %p115 = pneg %p109
      %p116 = scmp.eq.s32.totalorder %s27, 7
      %p117 = por %p115, %p116
      %p118 = scmp.ne.s32.totalorder %s110, %s113
      %p119 = scmp.eq.s32.totalorder %s27, 0
      %p120 = por %p118, %p119
      %p121 = scmp.ne.s32.totalorder %s110, %s113
      %p122 = scmp.eq.s32.totalorder %s32, 7
      %p123 = por %p121, %p122
      %p124 = scmp.ne.s32.totalorder %s113, %s114
      %p125 = scmp.eq.s32.totalorder %s32, 0
      %p126 = por %p124, %p125
      %p127 = scmp.ne.s32.totalorder %s113, %s114
      %p128 = scmp.eq.s32.totalorder %s33, 7
      %p129 = por %p127, %p128
      %p131 = scmp.ne.s32.totalorder %s114, %s130
      %p132 = scmp.eq.s32.totalorder %s33, 0
      %p133 = por %p131, %p132
      %s135 = sadd.s32 %s134, 1
      %p138 = scmp.eq.s32.totalorder %s27, 7
      %p139 = scmp.ne.s32.totalorder %s134, %s136
      %p140 = scmp.eq.s32.totalorder %s27, 0
      %p141 = por %p139, %p140
      %p142 = scmp.ne.s32.totalorder %s134, %s136
      %p143 = scmp.eq.s32.totalorder %s32, 7
      %p144 = por %p142, %p143
      %p145 = scmp.ne.s32.totalorder %s136, %s137
      %p146 = scmp.eq.s32.totalorder %s32, 0
      %p147 = por %p145, %p146
      %p148 = scmp.ne.s32.totalorder %s136, %s137
      %p149 = scmp.eq.s32.totalorder %s33, 7
      %p150 = por %p148, %p149
      %p152 = scmp.ne.s32.totalorder %s137, %s151
      %p153 = scmp.eq.s32.totalorder %s33, 0
      %p154 = por %p152, %p153
      %s155 = ssub.s32 %s34, %s53
      %p156 = scmp.eq.s32.totalorder %s155, 0
      %s158 = sadd.s32 %s157, 1
      %s159 = scalar_select %p156, %s157, %s158
      %p162 = pneg %p156
      %p163 = scmp.eq.s32.totalorder %s27, 7
      %p164 = por %p162, %p163
      %p165 = scmp.ne.s32.totalorder %s157, %s160
      %p166 = scmp.eq.s32.totalorder %s27, 0
      %p167 = por %p165, %p166
      %p168 = scmp.ne.s32.totalorder %s157, %s160
      %p169 = scmp.eq.s32.totalorder %s32, 7
      %p170 = por %p168, %p169
      %p171 = scmp.ne.s32.totalorder %s160, %s161
      %p172 = scmp.eq.s32.totalorder %s32, 0
      %p173 = por %p171, %p172
      %p174 = scmp.ne.s32.totalorder %s160, %s161
      %p175 = scmp.eq.s32.totalorder %s33, 7
      %p176 = por %p174, %p175
      %p178 = scmp.ne.s32.totalorder %s161, %s177
      %p179 = scmp.eq.s32.totalorder %s33, 0
      %p180 = por %p178, %p179
      %s181 = ssub.s32 %s35, %s49
      %s182 = ssub.s32 %s34, %s53
      %s183 = sor.u32 %s181, %s182
      %s184 = ssub.s32 %s36, %s45
      %s185 = sor.u32 %s183, %s184
      %p186 = scmp.eq.s32.totalorder %s185, 0
      %s188 = sadd.s32 %s187, 1
      %s189 = scalar_select %p186, %s187, %s188
      %p192 = pneg %p186
      %p193 = scmp.eq.s32.totalorder %s27, 7
      %p194 = por %p192, %p193
      %p195 = scmp.ne.s32.totalorder %s187, %s190
      %p196 = scmp.eq.s32.totalorder %s27, 0
      %p197 = por %p195, %p196
      %p198 = scmp.ne.s32.totalorder %s187, %s190
      %p199 = scmp.eq.s32.totalorder %s32, 7
      %p200 = por %p198, %p199
      %p201 = scmp.ne.s32.totalorder %s190, %s191
      %p202 = scmp.eq.s32.totalorder %s32, 0
      %p203 = por %p201, %p202
      %p204 = scmp.ne.s32.totalorder %s190, %s191
      %p205 = scmp.eq.s32.totalorder %s33, 7
      %p206 = por %p204, %p205
      %p208 = scmp.ne.s32.totalorder %s191, %s207
      %p209 = scmp.eq.s32.totalorder %s33, 0
      %p210 = por %p208, %p209
      %s211 = ssub.s32 %s35, %s49
      %s212 = ssub.s32 %s34, %s53
      %s213 = sor.u32 %s211, %s212
      %s214 = ssub.s32 %s36, %s45
      %s215 = sor.u32 %s213, %s214
      %p216 = scmp.eq.s32.totalorder %s215, 0
      %s218 = sadd.s32 %s217, 1
      %s219 = scalar_select %p216, %s217, %s218
      %p222 = pneg %p216
      %p223 = scmp.eq.s32.totalorder %s27, 7
      %p224 = por %p222, %p223
      %p225 = scmp.ne.s32.totalorder %s217, %s220
      %p226 = scmp.eq.s32.totalorder %s27, 0
      %p227 = por %p225, %p226
      %p228 = scmp.ne.s32.totalorder %s217, %s220
      %p229 = scmp.eq.s32.totalorder %s32, 7
      %p230 = por %p228, %p229
      %p231 = scmp.ne.s32.totalorder %s220, %s221
      %p232 = scmp.eq.s32.totalorder %s32, 0
      %p233 = por %p231, %p232
      %p234 = scmp.ne.s32.totalorder %s220, %s221
      %p235 = scmp.eq.s32.totalorder %s33, 7
      %p236 = por %p234, %p235
      %p238 = scmp.ne.s32.totalorder %s221, %s237
      %p239 = scmp.eq.s32.totalorder %s33, 0
      %p240 = por %p238, %p239
      %s241 = ssub.s32 %s35, %s49
      %s242 = ssub.s32 %s34, %s53
      %s243 = sor.u32 %s241, %s242
      %s244 = ssub.s32 %s36, %s45
      %s245 = sor.u32 %s243, %s244
      %p246 = scmp.eq.s32.totalorder %s245, 0
      %s248 = sadd.s32 %s247, 1
      %s249 = scalar_select %p246, %s247, %s248
      %p252 = pneg %p246
      %p253 = scmp.eq.s32.totalorder %s27, 7
      %p254 = por %p252, %p253
      %p255 = scmp.ne.s32.totalorder %s247, %s250
      %p256 = scmp.eq.s32.totalorder %s27, 0
      %p257 = por %p255, %p256
      %p258 = scmp.ne.s32.totalorder %s247, %s250
      %p259 = scmp.eq.s32.totalorder %s32, 7
      %p260 = por %p258, %p259
      %p261 = scmp.ne.s32.totalorder %s250, %s251
      %p262 = scmp.eq.s32.totalorder %s32, 0
      %p263 = por %p261, %p262
      %p264 = scmp.ne.s32.totalorder %s250, %s251
      %p265 = scmp.eq.s32.totalorder %s33, 7
      %p266 = por %p264, %p265
      %p268 = scmp.ne.s32.totalorder %s251, %s267
      %p269 = scmp.eq.s32.totalorder %s33, 0
      %p270 = por %p268, %p269
      %p271 = scmp.le.s32.totalorder 1, %s27
      %p272 = scmp.lt.s32.totalorder %s27, 9
      %p273 = pnand %p271, %p272
      %p274 = pneg %p273
      // Predicated region
      $region9: #{tpu_custom_call.1} parent=5 // pred_check
        _
      $region10: #{tpu_custom_call.1} parent=5 // pred_check_branch
        %276 = sbr.rel (%p273) target = $region12
      $region11: #{tpu_custom_call.1} parent=5 // pred_region
        %s277 = ssub.s32 %s27, 1
        // Predicated region
        $region13: #{tpu_custom_call.1} parent=11 // pred_check
          %p278 = pneg %p147
        $region14: #{tpu_custom_call.1} parent=11 // pred_check_branch
          %280 = sbr.rel (%p278) target = $region16
        $region15: #{tpu_custom_call.1} parent=11 // pred_region
          %s282 = ssub.s32 64, 64
          %283 = vsyncadd [#allocation9], %s282
          %s285 = sshll.u32 [#allocation8], 4
          %s286 = int_to_ptr.vmem [resolvable:$true] %s285
          %288 = dma.hbm_to_vmem [thread:$0]  %s3, 64, %s286, [#allocation9]
        $region16: #{tpu_custom_call.1} parent=11 // pred_fallthru
          _
      $region12: #{tpu_custom_call.1} parent=5 // pred_fallthru
        _
      %p289 = scmp.lt.s32.totalorder %s27, 8
      // Predicated region
      $region17: #{tpu_custom_call.1} parent=5 // pred_check
        %p290 = pneg %p289
      $region18: #{tpu_custom_call.1} parent=5 // pred_check_branch
        %292 = sbr.rel (%p290) target = $region20
      $region19: #{tpu_custom_call.1} parent=5 // pred_region
        // Predicated region
        $region21: #{tpu_custom_call.1} parent=19 // pred_check
          %p293 = pneg %p68
        $region22: #{tpu_custom_call.1} parent=19 // pred_check_branch
          %295 = sbr.rel (%p293) target = $region24
        $region23: #{tpu_custom_call.1} parent=19 // pred_region
          %s296 = sand.u32 %s27, 1
          %s297 = scalar_lea.sflag [#allocation3], %s296
          %s298 = sand.u32 %s58, 1
          %s299 = smul.addr %s298, 1024
          %s300 = scalar_lea.vmem [#allocation2], %s299
          %s301 = smul.u32 32, %s36
          %s303 = ssub.s32 16384, 16384
          %304 = vsyncadd %s297, %s303
          %s305 = smul.addr %s301, 4
          %s306 = smul.addr %s35, 256
          %s307 = sadd.s32 %s305, %s306
          %s308 = smul.addr %s307, 128
          %s309 = scalar_lea.hbm %s0, %s308
          %s310 = sshll.u32 %s300, 4
          %s311 = int_to_ptr.vmem [resolvable:$true] %s310
          %316 = dma.hbm_to_vmem [thread:$0]  %s309, 16384, %s311, %s297, 512, 512, 32
        $region24: #{tpu_custom_call.1} parent=19 // pred_fallthru
          _
        // Predicated region
        $region25: #{tpu_custom_call.1} parent=19 // pred_check
          %p317 = pneg %p94
        $region26: #{tpu_custom_call.1} parent=19 // pred_check_branch
          %319 = sbr.rel (%p317) target = $region28
        $region27: #{tpu_custom_call.1} parent=19 // pred_region
          %s320 = sand.u32 %s27, 1
          %s321 = scalar_lea.sflag [#allocation6], %s320
          %s322 = sand.u32 %s84, 1
          %s323 = smul.addr %s322, 256
          %s324 = scalar_lea.vmem [#allocation5], %s323
          %s325 = smul.u32 32, %s36
          %s327 = ssub.s32 4096, 4096
          %328 = vsyncadd %s321, %s327
          %s329 = smul.addr %s325, 128
          %s330 = scalar_lea.hbm %s1, %s329
          %s331 = sshll.u32 %s324, 4
          %s332 = int_to_ptr.vmem [resolvable:$true] %s331
          %337 = dma.hbm_to_vmem [thread:$0]  %s330, 4096, %s332, %s321, 128, 128, 8
        $region28: #{tpu_custom_call.1} parent=19 // pred_fallthru
          _
        // Predicated region
        $region29: #{tpu_custom_call.1} parent=19 // pred_check
          %p338 = pneg %p120
        $region30: #{tpu_custom_call.1} parent=19 // pred_check_branch
          %340 = sbr.rel (%p338) target = $region32
        $region31: #{tpu_custom_call.1} parent=19 // pred_region
          %s341 = sand.u32 %s27, 1
          %s342 = scalar_lea.sflag [#allocation6], %s341
          %s343 = sand.u32 %s110, 1
          %s344 = smul.addr %s343, 256
          %s345 = scalar_lea.vmem [#allocation7], %s344
          %s346 = smul.u32 32, %s36
          %s348 = ssub.s32 4096, 4096
          %349 = vsyncadd %s342, %s348
          %s350 = smul.addr %s346, 128
          %s351 = scalar_lea.hbm %s2, %s350
          %s352 = sshll.u32 %s345, 4
          %s353 = int_to_ptr.vmem [resolvable:$true] %s352
          %358 = dma.hbm_to_vmem [thread:$0]  %s351, 4096, %s353, %s342, 128, 128, 8
        $region32: #{tpu_custom_call.1} parent=19 // pred_fallthru
          _
        // Predicated region
        $region33: #{tpu_custom_call.1} parent=19 // pred_check
          %p359 = pneg %p167
        $region34: #{tpu_custom_call.1} parent=19 // pred_check_branch
          %361 = sbr.rel (%p359) target = $region36
        $region35: #{tpu_custom_call.1} parent=19 // pred_region
          %s362 = sand.u32 %s27, 1
          %s363 = scalar_lea.sflag [#allocation3], %s362
          %s364 = sand.u32 %s157, 1
          %s365 = smul.addr %s364, 1536
          %s366 = scalar_lea.vmem [#allocation10], %s365
          %s367 = smul.u32 2, %s34
          %s369 = ssub.s32 24576, 24576
          %370 = vsyncadd %s363, %s369
          %s371 = smul.addr %s367, 192
          %s372 = smul.addr %s371, 64
          %s373 = scalar_lea.hbm %s4, %s372
          %s374 = sshll.u32 %s366, 4
          %s375 = int_to_ptr.vmem [resolvable:$true] %s374
          %380 = dma.hbm_to_vmem [thread:$0]  %s373, 24576, %s375, %s363, 192, 192, 12
        $region36: #{tpu_custom_call.1} parent=19 // pred_fallthru
          _
      $region20: #{tpu_custom_call.1} parent=5 // pred_fallthru
        _
      %p381 = scmp.le.s32.totalorder 1, %s27
      %p382 = scmp.lt.s32.totalorder %s27, 9
      %p383 = pnand %p381, %p382
      %p384 = pneg %p383
      // Predicated region
      $region37: #{tpu_custom_call.1} parent=5 // pred_check
        _
      $region38: #{tpu_custom_call.1} parent=5 // pred_check_branch
        %386 = sbr.rel (%p383) target = $region40
      $region39: #{tpu_custom_call.1} parent=5 // pred_region
        %s387 = ssub.s32 %s27, 1
        %s388 = sand.u32 %s32, 1
        %s389 = scalar_lea.sflag [#allocation3], %s388
        %s390 = sand.u32 %s61, 1
        %s391 = smul.addr %s390, 1024
        %s392 = scalar_lea.vmem [#allocation2], %s391
        // Predicated region
        $region41: #{tpu_custom_call.1} parent=39 // pred_check
          %p393 = pneg %p74
        $region42: #{tpu_custom_call.1} parent=39 // pred_check_branch
          %395 = sbr.rel (%p393) target = $region44
        $region43: #{tpu_custom_call.1} parent=39 // pred_region
          %396 = dma.done %s389, 16384
        $region44: #{tpu_custom_call.1} parent=39 // pred_fallthru
          _
        %s397 = sand.u32 %s32, 1
        %s398 = scalar_lea.sflag [#allocation6], %s397
        %s399 = sand.u32 %s87, 1
        %s400 = smul.addr %s399, 256
        %s401 = scalar_lea.vmem [#allocation5], %s400
        // Predicated region
        $region45: #{tpu_custom_call.1} parent=39 // pred_check
          %p402 = pneg %p100
        $region46: #{tpu_custom_call.1} parent=39 // pred_check_branch
          %404 = sbr.rel (%p402) target = $region48
        $region47: #{tpu_custom_call.1} parent=39 // pred_region
          %405 = dma.done %s398, 4096
        $region48: #{tpu_custom_call.1} parent=39 // pred_fallthru
          _
        %s406 = sand.u32 %s32, 1
        %s407 = scalar_lea.sflag [#allocation6], %s406
        %s408 = sand.u32 %s113, 1
        %s409 = smul.addr %s408, 256
        %s410 = scalar_lea.vmem [#allocation7], %s409
        // Predicated region
        $region49: #{tpu_custom_call.1} parent=39 // pred_check
          %p411 = pneg %p126
        $region50: #{tpu_custom_call.1} parent=39 // pred_check_branch
          %413 = sbr.rel (%p411) target = $region52
        $region51: #{tpu_custom_call.1} parent=39 // pred_region
          %414 = dma.done %s407, 4096
        $region52: #{tpu_custom_call.1} parent=39 // pred_fallthru
          _
        // Predicated region
        $region53: #{tpu_custom_call.1} parent=39 // pred_check
          %p415 = pneg %p147
        $region54: #{tpu_custom_call.1} parent=39 // pred_check_branch
          %417 = sbr.rel (%p415) target = $region56
        $region55: #{tpu_custom_call.1} parent=39 // pred_region
          %418 = dma.done [#allocation9], 64
        $region56: #{tpu_custom_call.1} parent=39 // pred_fallthru
          _
        %s419 = sand.u32 %s32, 1
        %s420 = scalar_lea.sflag [#allocation3], %s419
        %s421 = sand.u32 %s160, 1
        %s422 = smul.addr %s421, 1536
        %s423 = scalar_lea.vmem [#allocation10], %s422
        // Predicated region
        $region57: #{tpu_custom_call.1} parent=39 // pred_check
          %p424 = pneg %p173
        $region58: #{tpu_custom_call.1} parent=39 // pred_check_branch
          %426 = sbr.rel (%p424) target = $region60
        $region59: #{tpu_custom_call.1} parent=39 // pred_region
          %427 = dma.done %s420, 24576
        $region60: #{tpu_custom_call.1} parent=39 // pred_fallthru
          _
        %s428 = sand.u32 %s32, 1
        %s429 = scalar_lea.sflag [#allocation3], %s428
        %s430 = sand.u32 %s61, 1
        %s431 = smul.addr %s430, 1024
        %s432 = scalar_lea.vmem [#allocation2], %s431
        %p433 = pneg %p74
        %p434 = pneg %p71
        %s435 = sand.u32 %s32, 1
        %s436 = scalar_lea.sflag [#allocation6], %s435
        %s437 = sand.u32 %s87, 1
        %s438 = smul.addr %s437, 256
        %s439 = scalar_lea.vmem [#allocation5], %s438
        %p440 = pneg %p100
        %p441 = pneg %p97
        %s442 = sand.u32 %s32, 1
        %s443 = scalar_lea.sflag [#allocation6], %s442
        %s444 = sand.u32 %s113, 1
        %s445 = smul.addr %s444, 256
        %s446 = scalar_lea.vmem [#allocation7], %s445
        %p447 = pneg %p126
        %p448 = pneg %p123
        %p449 = pneg %p147
        %p450 = pneg %p144
        %s451 = sand.u32 %s32, 1
        %s452 = scalar_lea.sflag [#allocation3], %s451
        %s453 = sand.u32 %s160, 1
        %s454 = smul.addr %s453, 1536
        %s455 = scalar_lea.vmem [#allocation10], %s454
        %p456 = pneg %p173
        %p457 = pneg %p170
        %p458 = pneg %p203
        %p459 = pneg %p200
        %s460 = sand.u32 %s190, 1
        %s461 = scalar_lea.sflag [#allocation4], %s460
        %s462 = sand.u32 %s190, 1
        %s463 = smul.addr %s462, 256
        %s464 = scalar_lea.vmem [#allocation11], %s463
        %p465 = pneg %p233
        %p466 = pneg %p230
        %s467 = sand.u32 %s32, 1
        %s468 = scalar_lea.sflag [#allocation13], %s467
        %s469 = sand.u32 %s220, 1
        %s470 = smul.addr %s469, 256
        %s471 = scalar_lea.vmem [#allocation12], %s470
        %p472 = pneg %p263
        %p473 = pneg %p260
        %s474 = sand.u32 %s32, 1
        %s475 = scalar_lea.sflag [#allocation13], %s474
        %s476 = sand.u32 %s250, 1
        %s477 = smul.addr %s476, 256
        %s478 = scalar_lea.vmem [#allocation14], %s477
        %s479 = smul.u32 32, %s39
        %s480 = smul.u32 32, %s39
        %s481 = smul.u32 32, %s39
        %s482 = smul.u32 2, %s37
        %s483 = smul.u32 2, %s37
        %s484 = smul.u32 32, %s39
        %s485 = smul.u32 2, %s37
        %s486 = smul.u32 32, %s39
        %s487 = smul.u32 2, %s37
        %s488 = smul.u32 32, %s39
        %v490 = vld [vmem:[%s392] sm:$0xff]
        %v491 = vld [vmem:[%s392 + $0x8] sm:$0xff]
        %v492 = vld [vmem:[%s392 + $0x10] sm:$0xff]
        %v493 = vld [vmem:[%s392 + $0x18] sm:$0xff]
        %v494 = vld [vmem:[%s392 + $0x20] sm:$0xff]
        %v495 = vld [vmem:[%s392 + $0x28] sm:$0xff]
        %v496 = vld [vmem:[%s392 + $0x30] sm:$0xff]
        %v497 = vld [vmem:[%s392 + $0x38] sm:$0xff]
        %v498 = vld [vmem:[%s392 + $0x40] sm:$0xff]
        %v499 = vld [vmem:[%s392 + $0x48] sm:$0xff]
        %v500 = vld [vmem:[%s392 + $0x50] sm:$0xff]
        %v501 = vld [vmem:[%s392 + $0x58] sm:$0xff]
        %v502 = vld [vmem:[%s392 + $0x60] sm:$0xff]
        %v503 = vld [vmem:[%s392 + $0x68] sm:$0xff]
        %v504 = vld [vmem:[%s392 + $0x70] sm:$0xff]
        %v505 = vld [vmem:[%s392 + $0x78] sm:$0xff]
        %v506 = vld [vmem:[%s392 + $0x80] sm:$0xff]
        %v507 = vld [vmem:[%s392 + $0x88] sm:$0xff]
        %v508 = vld [vmem:[%s392 + $0x90] sm:$0xff]
        %v509 = vld [vmem:[%s392 + $0x98] sm:$0xff]
        %v510 = vld [vmem:[%s392 + $0xa0] sm:$0xff]
        %v511 = vld [vmem:[%s392 + $0xa8] sm:$0xff]
        %v512 = vld [vmem:[%s392 + $0xb0] sm:$0xff]
        %v513 = vld [vmem:[%s392 + $0xb8] sm:$0xff]
        %v514 = vld [vmem:[%s392 + $0xc0] sm:$0xff]
        %v515 = vld [vmem:[%s392 + $0xc8] sm:$0xff]
        %v516 = vld [vmem:[%s392 + $0xd0] sm:$0xff]
        %v517 = vld [vmem:[%s392 + $0xd8] sm:$0xff]
        %v518 = vld [vmem:[%s392 + $0xe0] sm:$0xff]
        %v519 = vld [vmem:[%s392 + $0xe8] sm:$0xff]
        %v520 = vld [vmem:[%s392 + $0xf0] sm:$0xff]
        %v521 = vld [vmem:[%s392 + $0xf8] sm:$0xff]
        %v522 = vld [vmem:[%s392 + $0x100] sm:$0xff]
        %v523 = vld [vmem:[%s392 + $0x108] sm:$0xff]
        %v524 = vld [vmem:[%s392 + $0x110] sm:$0xff]
        %v525 = vld [vmem:[%s392 + $0x118] sm:$0xff]
        %v526 = vld [vmem:[%s392 + $0x120] sm:$0xff]
        %v527 = vld [vmem:[%s392 + $0x128] sm:$0xff]
        %v528 = vld [vmem:[%s392 + $0x130] sm:$0xff]
        %v529 = vld [vmem:[%s392 + $0x138] sm:$0xff]
        %v530 = vld [vmem:[%s392 + $0x140] sm:$0xff]
        %v531 = vld [vmem:[%s392 + $0x148] sm:$0xff]
        %v532 = vld [vmem:[%s392 + $0x150] sm:$0xff]
        %v533 = vld [vmem:[%s392 + $0x158] sm:$0xff]
        %v534 = vld [vmem:[%s392 + $0x160] sm:$0xff]
        %v535 = vld [vmem:[%s392 + $0x168] sm:$0xff]
        %v536 = vld [vmem:[%s392 + $0x170] sm:$0xff]
        %v537 = vld [vmem:[%s392 + $0x178] sm:$0xff]
        %v538 = vld [vmem:[%s392 + $0x180] sm:$0xff]
        %v539 = vld [vmem:[%s392 + $0x188] sm:$0xff]
        %v540 = vld [vmem:[%s392 + $0x190] sm:$0xff]
        %v541 = vld [vmem:[%s392 + $0x198] sm:$0xff]
        %v542 = vld [vmem:[%s392 + $0x1a0] sm:$0xff]
        %v543 = vld [vmem:[%s392 + $0x1a8] sm:$0xff]
        %v544 = vld [vmem:[%s392 + $0x1b0] sm:$0xff]
        %v545 = vld [vmem:[%s392 + $0x1b8] sm:$0xff]
        %v546 = vld [vmem:[%s392 + $0x1c0] sm:$0xff]
        %v547 = vld [vmem:[%s392 + $0x1c8] sm:$0xff]
        %v548 = vld [vmem:[%s392 + $0x1d0] sm:$0xff]
        %v549 = vld [vmem:[%s392 + $0x1d8] sm:$0xff]
        %v550 = vld [vmem:[%s392 + $0x1e0] sm:$0xff]
        %v551 = vld [vmem:[%s392 + $0x1e8] sm:$0xff]
        %v552 = vld [vmem:[%s392 + $0x1f0] sm:$0xff]
        %v553 = vld [vmem:[%s392 + $0x1f8] sm:$0xff]
        %v554 = vld [vmem:[%s392 + $0x200] sm:$0xff]
        %v555 = vld [vmem:[%s392 + $0x208] sm:$0xff]
        %v556 = vld [vmem:[%s392 + $0x210] sm:$0xff]
        %v557 = vld [vmem:[%s392 + $0x218] sm:$0xff]
        %v558 = vld [vmem:[%s392 + $0x220] sm:$0xff]
        %v559 = vld [vmem:[%s392 + $0x228] sm:$0xff]
        %v560 = vld [vmem:[%s392 + $0x230] sm:$0xff]
        %v561 = vld [vmem:[%s392 + $0x238] sm:$0xff]
        %v562 = vld [vmem:[%s392 + $0x240] sm:$0xff]
        %v563 = vld [vmem:[%s392 + $0x248] sm:$0xff]
        %v564 = vld [vmem:[%s392 + $0x250] sm:$0xff]
        %v565 = vld [vmem:[%s392 + $0x258] sm:$0xff]
        %v566 = vld [vmem:[%s392 + $0x260] sm:$0xff]
        %v567 = vld [vmem:[%s392 + $0x268] sm:$0xff]
        %v568 = vld [vmem:[%s392 + $0x270] sm:$0xff]
        %v569 = vld [vmem:[%s392 + $0x278] sm:$0xff]
        %v570 = vld [vmem:[%s392 + $0x280] sm:$0xff]
        %v571 = vld [vmem:[%s392 + $0x288] sm:$0xff]
        %v572 = vld [vmem:[%s392 + $0x290] sm:$0xff]
        %v573 = vld [vmem:[%s392 + $0x298] sm:$0xff]
        %v574 = vld [vmem:[%s392 + $0x2a0] sm:$0xff]
        %v575 = vld [vmem:[%s392 + $0x2a8] sm:$0xff]
        %v576 = vld [vmem:[%s392 + $0x2b0] sm:$0xff]
        %v577 = vld [vmem:[%s392 + $0x2b8] sm:$0xff]
        %v578 = vld [vmem:[%s392 + $0x2c0] sm:$0xff]
        %v579 = vld [vmem:[%s392 + $0x2c8] sm:$0xff]
        %v580 = vld [vmem:[%s392 + $0x2d0] sm:$0xff]
        %v581 = vld [vmem:[%s392 + $0x2d8] sm:$0xff]
        %v582 = vld [vmem:[%s392 + $0x2e0] sm:$0xff]
        %v583 = vld [vmem:[%s392 + $0x2e8] sm:$0xff]
        %v584 = vld [vmem:[%s392 + $0x2f0] sm:$0xff]
        %v585 = vld [vmem:[%s392 + $0x2f8] sm:$0xff]
        %v586 = vld [vmem:[%s392 + $0x300] sm:$0xff]
        %v587 = vld [vmem:[%s392 + $0x308] sm:$0xff]
        %v588 = vld [vmem:[%s392 + $0x310] sm:$0xff]
        %v589 = vld [vmem:[%s392 + $0x318] sm:$0xff]
        %v590 = vld [vmem:[%s392 + $0x320] sm:$0xff]
        %v591 = vld [vmem:[%s392 + $0x328] sm:$0xff]
        %v592 = vld [vmem:[%s392 + $0x330] sm:$0xff]
        %v593 = vld [vmem:[%s392 + $0x338] sm:$0xff]
        %v594 = vld [vmem:[%s392 + $0x340] sm:$0xff]
        %v595 = vld [vmem:[%s392 + $0x348] sm:$0xff]
        %v596 = vld [vmem:[%s392 + $0x350] sm:$0xff]
        %v597 = vld [vmem:[%s392 + $0x358] sm:$0xff]
        %v598 = vld [vmem:[%s392 + $0x360] sm:$0xff]
        %v599 = vld [vmem:[%s392 + $0x368] sm:$0xff]
        %v600 = vld [vmem:[%s392 + $0x370] sm:$0xff]
        %v601 = vld [vmem:[%s392 + $0x378] sm:$0xff]
        %v602 = vld [vmem:[%s392 + $0x380] sm:$0xff]
        %v603 = vld [vmem:[%s392 + $0x388] sm:$0xff]
        %v604 = vld [vmem:[%s392 + $0x390] sm:$0xff]
        %v605 = vld [vmem:[%s392 + $0x398] sm:$0xff]
        %v606 = vld [vmem:[%s392 + $0x3a0] sm:$0xff]
        %v607 = vld [vmem:[%s392 + $0x3a8] sm:$0xff]
        %v608 = vld [vmem:[%s392 + $0x3b0] sm:$0xff]
        %v609 = vld [vmem:[%s392 + $0x3b8] sm:$0xff]
        %v610 = vld [vmem:[%s392 + $0x3c0] sm:$0xff]
        %v611 = vld [vmem:[%s392 + $0x3c8] sm:$0xff]
        %v612 = vld [vmem:[%s392 + $0x3d0] sm:$0xff]
        %v613 = vld [vmem:[%s392 + $0x3d8] sm:$0xff]
        %v614 = vld [vmem:[%s392 + $0x3e0] sm:$0xff]
        %v615 = vld [vmem:[%s392 + $0x3e8] sm:$0xff]
        %v616 = vld [vmem:[%s392 + $0x3f0] sm:$0xff]
        %v617 = vld [vmem:[%s392 + $0x3f8] sm:$0xff]
        %v618 = vmul.f32 %v490, %v490
        %v619 = vmul.f32 %v491, %v491
        %v620 = vmul.f32 %v492, %v492
        %v621 = vmul.f32 %v493, %v493
        %v622 = vmul.f32 %v494, %v494
        %v623 = vmul.f32 %v495, %v495
        %v624 = vmul.f32 %v496, %v496
        %v625 = vmul.f32 %v497, %v497
        %v626 = vmul.f32 %v498, %v498
        %v627 = vmul.f32 %v499, %v499
        %v628 = vmul.f32 %v500, %v500
        %v629 = vmul.f32 %v501, %v501
        %v630 = vmul.f32 %v502, %v502
        %v631 = vmul.f32 %v503, %v503
        %v632 = vmul.f32 %v504, %v504
        %v633 = vmul.f32 %v505, %v505
        %v634 = vmul.f32 %v506, %v506
        %v635 = vmul.f32 %v507, %v507
        %v636 = vmul.f32 %v508, %v508
        %v637 = vmul.f32 %v509, %v509
        %v638 = vmul.f32 %v510, %v510
        %v639 = vmul.f32 %v511, %v511
        %v640 = vmul.f32 %v512, %v512
        %v641 = vmul.f32 %v513, %v513
        %v642 = vmul.f32 %v514, %v514
        %v643 = vmul.f32 %v515, %v515
        %v644 = vmul.f32 %v516, %v516
        %v645 = vmul.f32 %v517, %v517
        %v646 = vmul.f32 %v518, %v518
        %v647 = vmul.f32 %v519, %v519
        %v648 = vmul.f32 %v520, %v520
        %v649 = vmul.f32 %v521, %v521
        %v650 = vmul.f32 %v522, %v522
        %v651 = vmul.f32 %v523, %v523
        %v652 = vmul.f32 %v524, %v524
        %v653 = vmul.f32 %v525, %v525
        %v654 = vmul.f32 %v526, %v526
        %v655 = vmul.f32 %v527, %v527
        %v656 = vmul.f32 %v528, %v528
        %v657 = vmul.f32 %v529, %v529
        %v658 = vmul.f32 %v530, %v530
        %v659 = vmul.f32 %v531, %v531
        %v660 = vmul.f32 %v532, %v532
        %v661 = vmul.f32 %v533, %v533
        %v662 = vmul.f32 %v534, %v534
        %v663 = vmul.f32 %v535, %v535
        %v664 = vmul.f32 %v536, %v536
        %v665 = vmul.f32 %v537, %v537
        %v666 = vmul.f32 %v538, %v538
        %v667 = vmul.f32 %v539, %v539
        %v668 = vmul.f32 %v540, %v540
        %v669 = vmul.f32 %v541, %v541
        %v670 = vmul.f32 %v542, %v542
        %v671 = vmul.f32 %v543, %v543
        %v672 = vmul.f32 %v544, %v544
        %v673 = vmul.f32 %v545, %v545
        %v674 = vmul.f32 %v546, %v546
        %v675 = vmul.f32 %v547, %v547
        %v676 = vmul.f32 %v548, %v548
        %v677 = vmul.f32 %v549, %v549
        %v678 = vmul.f32 %v550, %v550
        %v679 = vmul.f32 %v551, %v551
        %v680 = vmul.f32 %v552, %v552
        %v681 = vmul.f32 %v553, %v553
        %v682 = vmul.f32 %v554, %v554
        %v683 = vmul.f32 %v555, %v555
        %v684 = vmul.f32 %v556, %v556
        %v685 = vmul.f32 %v557, %v557
        %v686 = vmul.f32 %v558, %v558
        %v687 = vmul.f32 %v559, %v559
        %v688 = vmul.f32 %v560, %v560
        %v689 = vmul.f32 %v561, %v561
        %v690 = vmul.f32 %v562, %v562
        %v691 = vmul.f32 %v563, %v563
        %v692 = vmul.f32 %v564, %v564
        %v693 = vmul.f32 %v565, %v565
        %v694 = vmul.f32 %v566, %v566
        %v695 = vmul.f32 %v567, %v567
        %v696 = vmul.f32 %v568, %v568
        %v697 = vmul.f32 %v569, %v569
        %v698 = vmul.f32 %v570, %v570
        %v699 = vmul.f32 %v571, %v571
        %v700 = vmul.f32 %v572, %v572
        %v701 = vmul.f32 %v573, %v573
        %v702 = vmul.f32 %v574, %v574
        %v703 = vmul.f32 %v575, %v575
        %v704 = vmul.f32 %v576, %v576
        %v705 = vmul.f32 %v577, %v577
        %v706 = vmul.f32 %v578, %v578
        %v707 = vmul.f32 %v579, %v579
        %v708 = vmul.f32 %v580, %v580
        %v709 = vmul.f32 %v581, %v581
        %v710 = vmul.f32 %v582, %v582
        %v711 = vmul.f32 %v583, %v583
        %v712 = vmul.f32 %v584, %v584
        %v713 = vmul.f32 %v585, %v585
        %v714 = vmul.f32 %v586, %v586
        %v715 = vmul.f32 %v587, %v587
        %v716 = vmul.f32 %v588, %v588
        %v717 = vmul.f32 %v589, %v589
        %v718 = vmul.f32 %v590, %v590
        %v719 = vmul.f32 %v591, %v591
        %v720 = vmul.f32 %v592, %v592
        %v721 = vmul.f32 %v593, %v593
        %v722 = vmul.f32 %v594, %v594
        %v723 = vmul.f32 %v595, %v595
        %v724 = vmul.f32 %v596, %v596
        %v725 = vmul.f32 %v597, %v597
        %v726 = vmul.f32 %v598, %v598
        %v727 = vmul.f32 %v599, %v599
        %v728 = vmul.f32 %v600, %v600
        %v729 = vmul.f32 %v601, %v601
        %v730 = vmul.f32 %v602, %v602
        %v731 = vmul.f32 %v603, %v603
        %v732 = vmul.f32 %v604, %v604
        %v733 = vmul.f32 %v605, %v605
        %v734 = vmul.f32 %v606, %v606
        %v735 = vmul.f32 %v607, %v607
        %v736 = vmul.f32 %v608, %v608
        %v737 = vmul.f32 %v609, %v609
        %v738 = vmul.f32 %v610, %v610
        %v739 = vmul.f32 %v611, %v611
        %v740 = vmul.f32 %v612, %v612
        %v741 = vmul.f32 %v613, %v613
        %v742 = vmul.f32 %v614, %v614
        %v743 = vmul.f32 %v615, %v615
        %v744 = vmul.f32 %v616, %v616
        %v745 = vmul.f32 %v617, %v617
        %v746 = vadd.f32 %v618, %v619
        %v747 = vadd.f32 %v746, %v620
        %v748 = vadd.f32 %v747, %v621
        %749 = vadd.xlane.f32.xlu0 %v748
        %v750 = vpop.xlane.xlu0 %749
        %v751 = vadd.f32 %v622, %v623
        %v752 = vadd.f32 %v751, %v624
        %v753 = vadd.f32 %v752, %v625
        %754 = vadd.xlane.f32.xlu0 %v753
        %v755 = vpop.xlane.xlu0 %754
        %v756 = vadd.f32 %v626, %v627
        %v757 = vadd.f32 %v756, %v628
        %v758 = vadd.f32 %v757, %v629
        %759 = vadd.xlane.f32.xlu0 %v758
        %v760 = vpop.xlane.xlu0 %759
        %v761 = vadd.f32 %v630, %v631
        %v762 = vadd.f32 %v761, %v632
        %v763 = vadd.f32 %v762, %v633
        %764 = vadd.xlane.f32.xlu0 %v763
        %v765 = vpop.xlane.xlu0 %764
        %v766 = vadd.f32 %v634, %v635
        %v767 = vadd.f32 %v766, %v636
        %v768 = vadd.f32 %v767, %v637
        %769 = vadd.xlane.f32.xlu0 %v768
        %v770 = vpop.xlane.xlu0 %769
        %v771 = vadd.f32 %v638, %v639
        %v772 = vadd.f32 %v771, %v640
        %v773 = vadd.f32 %v772, %v641
        %774 = vadd.xlane.f32.xlu0 %v773
        %v775 = vpop.xlane.xlu0 %774
        %v776 = vadd.f32 %v642, %v643
        %v777 = vadd.f32 %v776, %v644
        %v778 = vadd.f32 %v777, %v645
        %779 = vadd.xlane.f32.xlu0 %v778
        %v780 = vpop.xlane.xlu0 %779
        %v781 = vadd.f32 %v646, %v647
        %v782 = vadd.f32 %v781, %v648
        %v783 = vadd.f32 %v782, %v649
        %784 = vadd.xlane.f32.xlu0 %v783
        %v785 = vpop.xlane.xlu0 %784
        %v786 = vadd.f32 %v650, %v651
        %v787 = vadd.f32 %v786, %v652
        %v788 = vadd.f32 %v787, %v653
        %789 = vadd.xlane.f32.xlu0 %v788
        %v790 = vpop.xlane.xlu0 %789
        %v791 = vadd.f32 %v654, %v655
        %v792 = vadd.f32 %v791, %v656
        %v793 = vadd.f32 %v792, %v657
        %794 = vadd.xlane.f32.xlu0 %v793
        %v795 = vpop.xlane.xlu0 %794
        %v796 = vadd.f32 %v658, %v659
        %v797 = vadd.f32 %v796, %v660
        %v798 = vadd.f32 %v797, %v661
        %799 = vadd.xlane.f32.xlu0 %v798
        %v800 = vpop.xlane.xlu0 %799
        %v801 = vadd.f32 %v662, %v663
        %v802 = vadd.f32 %v801, %v664
        %v803 = vadd.f32 %v802, %v665
        %804 = vadd.xlane.f32.xlu0 %v803
        %v805 = vpop.xlane.xlu0 %804
        %v806 = vadd.f32 %v666, %v667
        %v807 = vadd.f32 %v806, %v668
        %v808 = vadd.f32 %v807, %v669
        %809 = vadd.xlane.f32.xlu0 %v808
        %v810 = vpop.xlane.xlu0 %809
        %v811 = vadd.f32 %v670, %v671
        %v812 = vadd.f32 %v811, %v672
        %v813 = vadd.f32 %v812, %v673
        %814 = vadd.xlane.f32.xlu0 %v813
        %v815 = vpop.xlane.xlu0 %814
        %v816 = vadd.f32 %v674, %v675
        %v817 = vadd.f32 %v816, %v676
        %v818 = vadd.f32 %v817, %v677
        %819 = vadd.xlane.f32.xlu0 %v818
        %v820 = vpop.xlane.xlu0 %819
        %v821 = vadd.f32 %v678, %v679
        %v822 = vadd.f32 %v821, %v680
        %v823 = vadd.f32 %v822, %v681
        %824 = vadd.xlane.f32.xlu0 %v823
        %v825 = vpop.xlane.xlu0 %824
        %v826 = vadd.f32 %v682, %v683
        %v827 = vadd.f32 %v826, %v684
        %v828 = vadd.f32 %v827, %v685
        %829 = vadd.xlane.f32.xlu0 %v828
        %v830 = vpop.xlane.xlu0 %829
        %v831 = vadd.f32 %v686, %v687
        %v832 = vadd.f32 %v831, %v688
        %v833 = vadd.f32 %v832, %v689
        %834 = vadd.xlane.f32.xlu0 %v833
        %v835 = vpop.xlane.xlu0 %834
        %v836 = vadd.f32 %v690, %v691
        %v837 = vadd.f32 %v836, %v692
        %v838 = vadd.f32 %v837, %v693
        %839 = vadd.xlane.f32.xlu0 %v838
        %v840 = vpop.xlane.xlu0 %839
        %v841 = vadd.f32 %v694, %v695
        %v842 = vadd.f32 %v841, %v696
        %v843 = vadd.f32 %v842, %v697
        %844 = vadd.xlane.f32.xlu0 %v843
        %v845 = vpop.xlane.xlu0 %844
        %v846 = vadd.f32 %v698, %v699
        %v847 = vadd.f32 %v846, %v700
        %v848 = vadd.f32 %v847, %v701
        %849 = vadd.xlane.f32.xlu0 %v848
        %v850 = vpop.xlane.xlu0 %849
        %v851 = vadd.f32 %v702, %v703
        %v852 = vadd.f32 %v851, %v704
        %v853 = vadd.f32 %v852, %v705
        %854 = vadd.xlane.f32.xlu0 %v853
        %v855 = vpop.xlane.xlu0 %854
        %v856 = vadd.f32 %v706, %v707
        %v857 = vadd.f32 %v856, %v708
        %v858 = vadd.f32 %v857, %v709
        %859 = vadd.xlane.f32.xlu0 %v858
        %v860 = vpop.xlane.xlu0 %859
        %v861 = vadd.f32 %v710, %v711
        %v862 = vadd.f32 %v861, %v712
        %v863 = vadd.f32 %v862, %v713
        %864 = vadd.xlane.f32.xlu0 %v863
        %v865 = vpop.xlane.xlu0 %864
        %v866 = vadd.f32 %v714, %v715
        %v867 = vadd.f32 %v866, %v716
        %v868 = vadd.f32 %v867, %v717
        %869 = vadd.xlane.f32.xlu0 %v868
        %v870 = vpop.xlane.xlu0 %869
        %v871 = vadd.f32 %v718, %v719
        %v872 = vadd.f32 %v871, %v720
        %v873 = vadd.f32 %v872, %v721
        %874 = vadd.xlane.f32.xlu0 %v873
        %v875 = vpop.xlane.xlu0 %874
        %v876 = vadd.f32 %v722, %v723
        %v877 = vadd.f32 %v876, %v724
        %v878 = vadd.f32 %v877, %v725
        %879 = vadd.xlane.f32.xlu0 %v878
        %v880 = vpop.xlane.xlu0 %879
        %v881 = vadd.f32 %v726, %v727
        %v882 = vadd.f32 %v881, %v728
        %v883 = vadd.f32 %v882, %v729
        %884 = vadd.xlane.f32.xlu0 %v883
        %v885 = vpop.xlane.xlu0 %884
        %v886 = vadd.f32 %v730, %v731
        %v887 = vadd.f32 %v886, %v732
        %v888 = vadd.f32 %v887, %v733
        %889 = vadd.xlane.f32.xlu0 %v888
        %v890 = vpop.xlane.xlu0 %889
        %v891 = vadd.f32 %v734, %v735
        %v892 = vadd.f32 %v891, %v736
        %v893 = vadd.f32 %v892, %v737
        %894 = vadd.xlane.f32.xlu0 %v893
        %v895 = vpop.xlane.xlu0 %894
        %v896 = vadd.f32 %v738, %v739
        %v897 = vadd.f32 %v896, %v740
        %v898 = vadd.f32 %v897, %v741
        %899 = vadd.xlane.f32.xlu0 %v898
        %v900 = vpop.xlane.xlu0 %899
        %v901 = vadd.f32 %v742, %v743
        %v902 = vadd.f32 %v901, %v744
        %v903 = vadd.f32 %v902, %v745
        %904 = vadd.xlane.f32.xlu0 %v903
        %v905 = vpop.xlane.xlu0 %904
        %v906 = vrcp.pop 512.0
        %v907 = vmul.f32 %v750, %v906
        %v908 = vmul.f32 %v755, %v906
        %v909 = vmul.f32 %v760, %v906
        %v910 = vmul.f32 %v765, %v906
        %v911 = vmul.f32 %v770, %v906
        %v912 = vmul.f32 %v775, %v906
        %v913 = vmul.f32 %v780, %v906
        %v914 = vmul.f32 %v785, %v906
        %v915 = vmul.f32 %v790, %v906
        %v916 = vmul.f32 %v795, %v906
        %v917 = vmul.f32 %v800, %v906
        %v918 = vmul.f32 %v805, %v906
        %v919 = vmul.f32 %v810, %v906
        %v920 = vmul.f32 %v815, %v906
        %v921 = vmul.f32 %v820, %v906
        %v922 = vmul.f32 %v825, %v906
        %v923 = vmul.f32 %v830, %v906
        %v924 = vmul.f32 %v835, %v906
        %v925 = vmul.f32 %v840, %v906
        %v926 = vmul.f32 %v845, %v906
        %v927 = vmul.f32 %v850, %v906
        %v928 = vmul.f32 %v855, %v906
        %v929 = vmul.f32 %v860, %v906
        %v930 = vmul.f32 %v865, %v906
        %v931 = vmul.f32 %v870, %v906
        %v932 = vmul.f32 %v875, %v906
        %v933 = vmul.f32 %v880, %v906
        %v934 = vmul.f32 %v885, %v906
        %v935 = vmul.f32 %v890, %v906
        %v936 = vmul.f32 %v895, %v906
        %v937 = vmul.f32 %v900, %v906
        %v938 = vmul.f32 %v905, %v906
        %v939 = vadd.f32 %v907, 1e-06
        %v940 = vadd.f32 %v908, 1e-06
        %v941 = vadd.f32 %v909, 1e-06
        %v942 = vadd.f32 %v910, 1e-06
        %v943 = vadd.f32 %v911, 1e-06
        %v944 = vadd.f32 %v912, 1e-06
        %v945 = vadd.f32 %v913, 1e-06
        %v946 = vadd.f32 %v914, 1e-06
        %v947 = vadd.f32 %v915, 1e-06
        %v948 = vadd.f32 %v916, 1e-06
        %v949 = vadd.f32 %v917, 1e-06
        %v950 = vadd.f32 %v918, 1e-06
        %v951 = vadd.f32 %v919, 1e-06
        %v952 = vadd.f32 %v920, 1e-06
        %v953 = vadd.f32 %v921, 1e-06
        %v954 = vadd.f32 %v922, 1e-06
        %v955 = vadd.f32 %v923, 1e-06
        %v956 = vadd.f32 %v924, 1e-06
        %v957 = vadd.f32 %v925, 1e-06
        %v958 = vadd.f32 %v926, 1e-06
        %v959 = vadd.f32 %v927, 1e-06
        %v960 = vadd.f32 %v928, 1e-06
        %v961 = vadd.f32 %v929, 1e-06
        %v962 = vadd.f32 %v930, 1e-06
        %v963 = vadd.f32 %v931, 1e-06
        %v964 = vadd.f32 %v932, 1e-06
        %v965 = vadd.f32 %v933, 1e-06
        %v966 = vadd.f32 %v934, 1e-06
        %v967 = vadd.f32 %v935, 1e-06
        %v968 = vadd.f32 %v936, 1e-06
        %v969 = vadd.f32 %v937, 1e-06
        %v970 = vadd.f32 %v938, 1e-06
        %v971 = vrsqrt.pop %v939
        %v972 = vrsqrt.pop %v940
        %v973 = vrsqrt.pop %v941
        %v974 = vrsqrt.pop %v942
        %v975 = vrsqrt.pop %v943
        %v976 = vrsqrt.pop %v944
        %v977 = vrsqrt.pop %v945
        %v978 = vrsqrt.pop %v946
        %v979 = vrsqrt.pop %v947
        %v980 = vrsqrt.pop %v948
        %v981 = vrsqrt.pop %v949
        %v982 = vrsqrt.pop %v950
        %v983 = vrsqrt.pop %v951
        %v984 = vrsqrt.pop %v952
        %v985 = vrsqrt.pop %v953
        %v986 = vrsqrt.pop %v954
        %v987 = vrsqrt.pop %v955
        %v988 = vrsqrt.pop %v956
        %v989 = vrsqrt.pop %v957
        %v990 = vrsqrt.pop %v958
        %v991 = vrsqrt.pop %v959
        %v992 = vrsqrt.pop %v960
        %v993 = vrsqrt.pop %v961
        %v994 = vrsqrt.pop %v962
        %v995 = vrsqrt.pop %v963
        %v996 = vrsqrt.pop %v964
        %v997 = vrsqrt.pop %v965
        %v998 = vrsqrt.pop %v966
        %v999 = vrsqrt.pop %v967
        %v1000 = vrsqrt.pop %v968
        %v1001 = vrsqrt.pop %v969
        %v1002 = vrsqrt.pop %v970
        %v1003 = vmul.f32 %v490, %v971
        %v1004 = vmul.f32 %v491, %v971
        %v1005 = vmul.f32 %v492, %v971
        %v1006 = vmul.f32 %v493, %v971
        %v1007 = vmul.f32 %v494, %v972
        %v1008 = vmul.f32 %v495, %v972
        %v1009 = vmul.f32 %v496, %v972
        %v1010 = vmul.f32 %v497, %v972
        %v1011 = vmul.f32 %v498, %v973
        %v1012 = vmul.f32 %v499, %v973
        %v1013 = vmul.f32 %v500, %v973
        %v1014 = vmul.f32 %v501, %v973
        %v1015 = vmul.f32 %v502, %v974
        %v1016 = vmul.f32 %v503, %v974
        %v1017 = vmul.f32 %v504, %v974
        %v1018 = vmul.f32 %v505, %v974
        %v1019 = vmul.f32 %v506, %v975
        %v1020 = vmul.f32 %v507, %v975
        %v1021 = vmul.f32 %v508, %v975
        %v1022 = vmul.f32 %v509, %v975
        %v1023 = vmul.f32 %v510, %v976
        %v1024 = vmul.f32 %v511, %v976
        %v1025 = vmul.f32 %v512, %v976
        %v1026 = vmul.f32 %v513, %v976
        %v1027 = vmul.f32 %v514, %v977
        %v1028 = vmul.f32 %v515, %v977
        %v1029 = vmul.f32 %v516, %v977
        %v1030 = vmul.f32 %v517, %v977
        %v1031 = vmul.f32 %v518, %v978
        %v1032 = vmul.f32 %v519, %v978
        %v1033 = vmul.f32 %v520, %v978
        %v1034 = vmul.f32 %v521, %v978
        %v1035 = vmul.f32 %v522, %v979
        %v1036 = vmul.f32 %v523, %v979
        %v1037 = vmul.f32 %v524, %v979
        %v1038 = vmul.f32 %v525, %v979
        %v1039 = vmul.f32 %v526, %v980
        %v1040 = vmul.f32 %v527, %v980
        %v1041 = vmul.f32 %v528, %v980
        %v1042 = vmul.f32 %v529, %v980
        %v1043 = vmul.f32 %v530, %v981
        %v1044 = vmul.f32 %v531, %v981
        %v1045 = vmul.f32 %v532, %v981
        %v1046 = vmul.f32 %v533, %v981
        %v1047 = vmul.f32 %v534, %v982
        %v1048 = vmul.f32 %v535, %v982
        %v1049 = vmul.f32 %v536, %v982
        %v1050 = vmul.f32 %v537, %v982
        %v1051 = vmul.f32 %v538, %v983
        %v1052 = vmul.f32 %v539, %v983
        %v1053 = vmul.f32 %v540, %v983
        %v1054 = vmul.f32 %v541, %v983
        %v1055 = vmul.f32 %v542, %v984
        %v1056 = vmul.f32 %v543, %v984
        %v1057 = vmul.f32 %v544, %v984
        %v1058 = vmul.f32 %v545, %v984
        %v1059 = vmul.f32 %v546, %v985
        %v1060 = vmul.f32 %v547, %v985
        %v1061 = vmul.f32 %v548, %v985
        %v1062 = vmul.f32 %v549, %v985
        %v1063 = vmul.f32 %v550, %v986
        %v1064 = vmul.f32 %v551, %v986
        %v1065 = vmul.f32 %v552, %v986
        %v1066 = vmul.f32 %v553, %v986
        %v1067 = vmul.f32 %v554, %v987
        %v1068 = vmul.f32 %v555, %v987
        %v1069 = vmul.f32 %v556, %v987
        %v1070 = vmul.f32 %v557, %v987
        %v1071 = vmul.f32 %v558, %v988
        %v1072 = vmul.f32 %v559, %v988
        %v1073 = vmul.f32 %v560, %v988
        %v1074 = vmul.f32 %v561, %v988
        %v1075 = vmul.f32 %v562, %v989
        %v1076 = vmul.f32 %v563, %v989
        %v1077 = vmul.f32 %v564, %v989
        %v1078 = vmul.f32 %v565, %v989
        %v1079 = vmul.f32 %v566, %v990
        %v1080 = vmul.f32 %v567, %v990
        %v1081 = vmul.f32 %v568, %v990
        %v1082 = vmul.f32 %v569, %v990
        %v1083 = vmul.f32 %v570, %v991
        %v1084 = vmul.f32 %v571, %v991
        %v1085 = vmul.f32 %v572, %v991
        %v1086 = vmul.f32 %v573, %v991
        %v1087 = vmul.f32 %v574, %v992
        %v1088 = vmul.f32 %v575, %v992
        %v1089 = vmul.f32 %v576, %v992
        %v1090 = vmul.f32 %v577, %v992
        %v1091 = vmul.f32 %v578, %v993
        %v1092 = vmul.f32 %v579, %v993
        %v1093 = vmul.f32 %v580, %v993
        %v1094 = vmul.f32 %v581, %v993
        %v1095 = vmul.f32 %v582, %v994
        %v1096 = vmul.f32 %v583, %v994
        %v1097 = vmul.f32 %v584, %v994
        %v1098 = vmul.f32 %v585, %v994
        %v1099 = vmul.f32 %v586, %v995
        %v1100 = vmul.f32 %v587, %v995
        %v1101 = vmul.f32 %v588, %v995
        %v1102 = vmul.f32 %v589, %v995
        %v1103 = vmul.f32 %v590, %v996
        %v1104 = vmul.f32 %v591, %v996
        %v1105 = vmul.f32 %v592, %v996
        %v1106 = vmul.f32 %v593, %v996
        %v1107 = vmul.f32 %v594, %v997
        %v1108 = vmul.f32 %v595, %v997
        %v1109 = vmul.f32 %v596, %v997
        %v1110 = vmul.f32 %v597, %v997
        %v1111 = vmul.f32 %v598, %v998
        %v1112 = vmul.f32 %v599, %v998
        %v1113 = vmul.f32 %v600, %v998
        %v1114 = vmul.f32 %v601, %v998
        %v1115 = vmul.f32 %v602, %v999
        %v1116 = vmul.f32 %v603, %v999
        %v1117 = vmul.f32 %v604, %v999
        %v1118 = vmul.f32 %v605, %v999
        %v1119 = vmul.f32 %v606, %v1000
        %v1120 = vmul.f32 %v607, %v1000
        %v1121 = vmul.f32 %v608, %v1000
        %v1122 = vmul.f32 %v609, %v1000
        %v1123 = vmul.f32 %v610, %v1001
        %v1124 = vmul.f32 %v611, %v1001
        %v1125 = vmul.f32 %v612, %v1001
        %v1126 = vmul.f32 %v613, %v1001
        %v1127 = vmul.f32 %v614, %v1002
        %v1128 = vmul.f32 %v615, %v1002
        %v1129 = vmul.f32 %v616, %v1002
        %v1130 = vmul.f32 %v617, %v1002
        %v1131 = vld [vmem:[#allocation8] sm:$0xf]
        %v1133 = vlaneseq
        %v1134 = vshrl.u32 %v1133, 7
        %v1135 = vsub.s32 0, %v1134
        %v1136 = vrot.slane %v1131, %v1135
        %v1137 = vlaneseq
        %v1138 = vshrl.u32 %v1137, 7
        %v1139 = vsub.s32 1, %v1138
        %v1140 = vrot.slane %v1131, %v1139
        %v1141 = vlaneseq
        %v1142 = vshrl.u32 %v1141, 7
        %v1143 = vsub.s32 2, %v1142
        %v1144 = vrot.slane %v1131, %v1143
        %v1145 = vlaneseq
        %v1146 = vshrl.u32 %v1145, 7
        %v1147 = vsub.s32 3, %v1146
        %v1148 = vrot.slane %v1131, %v1147
        %v1153 = vmul.f32 %v1003, %v1136
        %v1154 = vmul.f32 %v1004, %v1140
        %v1155 = vmul.f32 %v1005, %v1144
        %v1156 = vmul.f32 %v1006, %v1148
        %v1157 = vmul.f32 %v1007, %v1136
        %v1158 = vmul.f32 %v1008, %v1140
        %v1159 = vmul.f32 %v1009, %v1144
        %v1160 = vmul.f32 %v1010, %v1148
        %v1161 = vmul.f32 %v1011, %v1136
        %v1162 = vmul.f32 %v1012, %v1140
        %v1163 = vmul.f32 %v1013, %v1144
        %v1164 = vmul.f32 %v1014, %v1148
        %v1165 = vmul.f32 %v1015, %v1136
        %v1166 = vmul.f32 %v1016, %v1140
        %v1167 = vmul.f32 %v1017, %v1144
        %v1168 = vmul.f32 %v1018, %v1148
        %v1169 = vmul.f32 %v1019, %v1136
        %v1170 = vmul.f32 %v1020, %v1140
        %v1171 = vmul.f32 %v1021, %v1144
        %v1172 = vmul.f32 %v1022, %v1148
        %v1173 = vmul.f32 %v1023, %v1136
        %v1174 = vmul.f32 %v1024, %v1140
        %v1175 = vmul.f32 %v1025, %v1144
        %v1176 = vmul.f32 %v1026, %v1148
        %v1177 = vmul.f32 %v1027, %v1136
        %v1178 = vmul.f32 %v1028, %v1140
        %v1179 = vmul.f32 %v1029, %v1144
        %v1180 = vmul.f32 %v1030, %v1148
        %v1181 = vmul.f32 %v1031, %v1136
        %v1182 = vmul.f32 %v1032, %v1140
        %v1183 = vmul.f32 %v1033, %v1144
        %v1184 = vmul.f32 %v1034, %v1148
        %v1185 = vmul.f32 %v1035, %v1136
        %v1186 = vmul.f32 %v1036, %v1140
        %v1187 = vmul.f32 %v1037, %v1144
        %v1188 = vmul.f32 %v1038, %v1148
        %v1189 = vmul.f32 %v1039, %v1136
        %v1190 = vmul.f32 %v1040, %v1140
        %v1191 = vmul.f32 %v1041, %v1144
        %v1192 = vmul.f32 %v1042, %v1148
        %v1193 = vmul.f32 %v1043, %v1136
        %v1194 = vmul.f32 %v1044, %v1140
        %v1195 = vmul.f32 %v1045, %v1144
        %v1196 = vmul.f32 %v1046, %v1148
        %v1197 = vmul.f32 %v1047, %v1136
        %v1198 = vmul.f32 %v1048, %v1140
        %v1199 = vmul.f32 %v1049, %v1144
        %v1200 = vmul.f32 %v1050, %v1148
        %v1201 = vmul.f32 %v1051, %v1136
        %v1202 = vmul.f32 %v1052, %v1140
        %v1203 = vmul.f32 %v1053, %v1144
        %v1204 = vmul.f32 %v1054, %v1148
        %v1205 = vmul.f32 %v1055, %v1136
        %v1206 = vmul.f32 %v1056, %v1140
        %v1207 = vmul.f32 %v1057, %v1144
        %v1208 = vmul.f32 %v1058, %v1148
        %v1209 = vmul.f32 %v1059, %v1136
        %v1210 = vmul.f32 %v1060, %v1140
        %v1211 = vmul.f32 %v1061, %v1144
        %v1212 = vmul.f32 %v1062, %v1148
        %v1213 = vmul.f32 %v1063, %v1136
        %v1214 = vmul.f32 %v1064, %v1140
        %v1215 = vmul.f32 %v1065, %v1144
        %v1216 = vmul.f32 %v1066, %v1148
        %v1217 = vmul.f32 %v1067, %v1136
        %v1218 = vmul.f32 %v1068, %v1140
        %v1219 = vmul.f32 %v1069, %v1144
        %v1220 = vmul.f32 %v1070, %v1148
        %v1221 = vmul.f32 %v1071, %v1136
        %v1222 = vmul.f32 %v1072, %v1140
        %v1223 = vmul.f32 %v1073, %v1144
        %v1224 = vmul.f32 %v1074, %v1148
        %v1225 = vmul.f32 %v1075, %v1136
        %v1226 = vmul.f32 %v1076, %v1140
        %v1227 = vmul.f32 %v1077, %v1144
        %v1228 = vmul.f32 %v1078, %v1148
        %v1229 = vmul.f32 %v1079, %v1136
        %v1230 = vmul.f32 %v1080, %v1140
        %v1231 = vmul.f32 %v1081, %v1144
        %v1232 = vmul.f32 %v1082, %v1148
        %v1233 = vmul.f32 %v1083, %v1136
        %v1234 = vmul.f32 %v1084, %v1140
        %v1235 = vmul.f32 %v1085, %v1144
        %v1236 = vmul.f32 %v1086, %v1148
        %v1237 = vmul.f32 %v1087, %v1136
        %v1238 = vmul.f32 %v1088, %v1140
        %v1239 = vmul.f32 %v1089, %v1144
        %v1240 = vmul.f32 %v1090, %v1148
        %v1241 = vmul.f32 %v1091, %v1136
        %v1242 = vmul.f32 %v1092, %v1140
        %v1243 = vmul.f32 %v1093, %v1144
        %v1244 = vmul.f32 %v1094, %v1148
        %v1245 = vmul.f32 %v1095, %v1136
        %v1246 = vmul.f32 %v1096, %v1140
        %v1247 = vmul.f32 %v1097, %v1144
        %v1248 = vmul.f32 %v1098, %v1148
        %v1249 = vmul.f32 %v1099, %v1136
        %v1250 = vmul.f32 %v1100, %v1140
        %v1251 = vmul.f32 %v1101, %v1144
        %v1252 = vmul.f32 %v1102, %v1148
        %v1253 = vmul.f32 %v1103, %v1136
        %v1254 = vmul.f32 %v1104, %v1140
        %v1255 = vmul.f32 %v1105, %v1144
        %v1256 = vmul.f32 %v1106, %v1148
        %v1257 = vmul.f32 %v1107, %v1136
        %v1258 = vmul.f32 %v1108, %v1140
        %v1259 = vmul.f32 %v1109, %v1144
        %v1260 = vmul.f32 %v1110, %v1148
        %v1261 = vmul.f32 %v1111, %v1136
        %v1262 = vmul.f32 %v1112, %v1140
        %v1263 = vmul.f32 %v1113, %v1144
        %v1264 = vmul.f32 %v1114, %v1148
        %v1265 = vmul.f32 %v1115, %v1136
        %v1266 = vmul.f32 %v1116, %v1140
        %v1267 = vmul.f32 %v1117, %v1144
        %v1268 = vmul.f32 %v1118, %v1148
        %v1269 = vmul.f32 %v1119, %v1136
        %v1270 = vmul.f32 %v1120, %v1140
        %v1271 = vmul.f32 %v1121, %v1144
        %v1272 = vmul.f32 %v1122, %v1148
        %v1273 = vmul.f32 %v1123, %v1136
        %v1274 = vmul.f32 %v1124, %v1140
        %v1275 = vmul.f32 %v1125, %v1144
        %v1276 = vmul.f32 %v1126, %v1148
        %v1277 = vmul.f32 %v1127, %v1136
        %v1278 = vmul.f32 %v1128, %v1140
        %v1279 = vmul.f32 %v1129, %v1144
        %v1280 = vmul.f32 %v1130, %v1148
        %v1281 = vpack.c.bf16 %v1157, %v1153
        %v1282 = vpack.c.bf16 %v1158, %v1154
        %v1283 = vpack.c.bf16 %v1159, %v1155
        %v1284 = vpack.c.bf16 %v1160, %v1156
        %v1285 = vpack.c.bf16 %v1165, %v1161
        %v1286 = vpack.c.bf16 %v1166, %v1162
        %v1287 = vpack.c.bf16 %v1167, %v1163
        %v1288 = vpack.c.bf16 %v1168, %v1164
        %v1289 = vpack.c.bf16 %v1173, %v1169
        %v1290 = vpack.c.bf16 %v1174, %v1170
        %v1291 = vpack.c.bf16 %v1175, %v1171
        %v1292 = vpack.c.bf16 %v1176, %v1172
        %v1293 = vpack.c.bf16 %v1181, %v1177
        %v1294 = vpack.c.bf16 %v1182, %v1178
        %v1295 = vpack.c.bf16 %v1183, %v1179
        %v1296 = vpack.c.bf16 %v1184, %v1180
        %v1297 = vpack.c.bf16 %v1189, %v1185
        %v1298 = vpack.c.bf16 %v1190, %v1186
        %v1299 = vpack.c.bf16 %v1191, %v1187
        %v1300 = vpack.c.bf16 %v1192, %v1188
        %v1301 = vpack.c.bf16 %v1197, %v1193
        %v1302 = vpack.c.bf16 %v1198, %v1194
        %v1303 = vpack.c.bf16 %v1199, %v1195
        %v1304 = vpack.c.bf16 %v1200, %v1196
        %v1305 = vpack.c.bf16 %v1205, %v1201
        %v1306 = vpack.c.bf16 %v1206, %v1202
        %v1307 = vpack.c.bf16 %v1207, %v1203
        %v1308 = vpack.c.bf16 %v1208, %v1204
        %v1309 = vpack.c.bf16 %v1213, %v1209
        %v1310 = vpack.c.bf16 %v1214, %v1210
        %v1311 = vpack.c.bf16 %v1215, %v1211
        %v1312 = vpack.c.bf16 %v1216, %v1212
        %v1313 = vpack.c.bf16 %v1221, %v1217
        %v1314 = vpack.c.bf16 %v1222, %v1218
        %v1315 = vpack.c.bf16 %v1223, %v1219
        %v1316 = vpack.c.bf16 %v1224, %v1220
        %v1317 = vpack.c.bf16 %v1229, %v1225
        %v1318 = vpack.c.bf16 %v1230, %v1226
        %v1319 = vpack.c.bf16 %v1231, %v1227
        %v1320 = vpack.c.bf16 %v1232, %v1228
        %v1321 = vpack.c.bf16 %v1237, %v1233
        %v1322 = vpack.c.bf16 %v1238, %v1234
        %v1323 = vpack.c.bf16 %v1239, %v1235
        %v1324 = vpack.c.bf16 %v1240, %v1236
        %v1325 = vpack.c.bf16 %v1245, %v1241
        %v1326 = vpack.c.bf16 %v1246, %v1242
        %v1327 = vpack.c.bf16 %v1247, %v1243
        %v1328 = vpack.c.bf16 %v1248, %v1244
        %v1329 = vpack.c.bf16 %v1253, %v1249
        %v1330 = vpack.c.bf16 %v1254, %v1250
        %v1331 = vpack.c.bf16 %v1255, %v1251
        %v1332 = vpack.c.bf16 %v1256, %v1252
        %v1333 = vpack.c.bf16 %v1261, %v1257
        %v1334 = vpack.c.bf16 %v1262, %v1258
        %v1335 = vpack.c.bf16 %v1263, %v1259
        %v1336 = vpack.c.bf16 %v1264, %v1260
        %v1337 = vpack.c.bf16 %v1269, %v1265
        %v1338 = vpack.c.bf16 %v1270, %v1266
        %v1339 = vpack.c.bf16 %v1271, %v1267
        %v1340 = vpack.c.bf16 %v1272, %v1268
        %v1341 = vpack.c.bf16 %v1277, %v1273
        %v1342 = vpack.c.bf16 %v1278, %v1274
        %v1343 = vpack.c.bf16 %v1279, %v1275
        %v1344 = vpack.c.bf16 %v1280, %v1276
        %v1345 = vld [vmem:[%s401] sm:$0xff]
        %v1346 = vld [vmem:[%s401 + $0x8] sm:$0xff]
        %v1347 = vld [vmem:[%s401 + $0x10] sm:$0xff]
        %v1348 = vld [vmem:[%s401 + $0x18] sm:$0xff]
        %v1349 = vld [vmem:[%s401 + $0x20] sm:$0xff]
        %v1350 = vld [vmem:[%s401 + $0x28] sm:$0xff]
        %v1351 = vld [vmem:[%s401 + $0x30] sm:$0xff]
        %v1352 = vld [vmem:[%s401 + $0x38] sm:$0xff]
        %v1353 = vld [vmem:[%s401 + $0x40] sm:$0xff]
        %v1354 = vld [vmem:[%s401 + $0x48] sm:$0xff]
        %v1355 = vld [vmem:[%s401 + $0x50] sm:$0xff]
        %v1356 = vld [vmem:[%s401 + $0x58] sm:$0xff]
        %v1357 = vld [vmem:[%s401 + $0x60] sm:$0xff]
        %v1358 = vld [vmem:[%s401 + $0x68] sm:$0xff]
        %v1359 = vld [vmem:[%s401 + $0x70] sm:$0xff]
        %v1360 = vld [vmem:[%s401 + $0x78] sm:$0xff]
        %v1361 = vld [vmem:[%s401 + $0x80] sm:$0xff]
        %v1362 = vld [vmem:[%s401 + $0x88] sm:$0xff]
        %v1363 = vld [vmem:[%s401 + $0x90] sm:$0xff]
        %v1364 = vld [vmem:[%s401 + $0x98] sm:$0xff]
        %v1365 = vld [vmem:[%s401 + $0xa0] sm:$0xff]
        %v1366 = vld [vmem:[%s401 + $0xa8] sm:$0xff]
        %v1367 = vld [vmem:[%s401 + $0xb0] sm:$0xff]
        %v1368 = vld [vmem:[%s401 + $0xb8] sm:$0xff]
        %v1369 = vld [vmem:[%s401 + $0xc0] sm:$0xff]
        %v1370 = vld [vmem:[%s401 + $0xc8] sm:$0xff]
        %v1371 = vld [vmem:[%s401 + $0xd0] sm:$0xff]
        %v1372 = vld [vmem:[%s401 + $0xd8] sm:$0xff]
        %v1373 = vld [vmem:[%s401 + $0xe0] sm:$0xff]
        %v1374 = vld [vmem:[%s401 + $0xe8] sm:$0xff]
        %v1375 = vld [vmem:[%s401 + $0xf0] sm:$0xff]
        %v1376 = vld [vmem:[%s401 + $0xf8] sm:$0xff]
        %v1377 = vld [vmem:[%s410] sm:$0xff]
        %v1378 = vld [vmem:[%s410 + $0x8] sm:$0xff]
        %v1379 = vld [vmem:[%s410 + $0x10] sm:$0xff]
        %v1380 = vld [vmem:[%s410 + $0x18] sm:$0xff]
        %v1381 = vld [vmem:[%s410 + $0x20] sm:$0xff]
        %v1382 = vld [vmem:[%s410 + $0x28] sm:$0xff]
        %v1383 = vld [vmem:[%s410 + $0x30] sm:$0xff]
        %v1384 = vld [vmem:[%s410 + $0x38] sm:$0xff]
        %v1385 = vld [vmem:[%s410 + $0x40] sm:$0xff]
        %v1386 = vld [vmem:[%s410 + $0x48] sm:$0xff]
        %v1387 = vld [vmem:[%s410 + $0x50] sm:$0xff]
        %v1388 = vld [vmem:[%s410 + $0x58] sm:$0xff]
        %v1389 = vld [vmem:[%s410 + $0x60] sm:$0xff]
        %v1390 = vld [vmem:[%s410 + $0x68] sm:$0xff]
        %v1391 = vld [vmem:[%s410 + $0x70] sm:$0xff]
        %v1392 = vld [vmem:[%s410 + $0x78] sm:$0xff]
        %v1393 = vld [vmem:[%s410 + $0x80] sm:$0xff]
        %v1394 = vld [vmem:[%s410 + $0x88] sm:$0xff]
        %v1395 = vld [vmem:[%s410 + $0x90] sm:$0xff]
        %v1396 = vld [vmem:[%s410 + $0x98] sm:$0xff]
        %v1397 = vld [vmem:[%s410 + $0xa0] sm:$0xff]
        %v1398 = vld [vmem:[%s410 + $0xa8] sm:$0xff]
        %v1399 = vld [vmem:[%s410 + $0xb0] sm:$0xff]
        %v1400 = vld [vmem:[%s410 + $0xb8] sm:$0xff]
        %v1401 = vld [vmem:[%s410 + $0xc0] sm:$0xff]
        %v1402 = vld [vmem:[%s410 + $0xc8] sm:$0xff]
        %v1403 = vld [vmem:[%s410 + $0xd0] sm:$0xff]
        %v1404 = vld [vmem:[%s410 + $0xd8] sm:$0xff]
        %v1405 = vld [vmem:[%s410 + $0xe0] sm:$0xff]
        %v1406 = vld [vmem:[%s410 + $0xe8] sm:$0xff]
        %v1407 = vld [vmem:[%s410 + $0xf0] sm:$0xff]
        %v1408 = vld [vmem:[%s410 + $0xf8] sm:$0xff]
        %v1409 = vld [vmem:[%s423] sm:$0xff]
        %v1410 = vld [vmem:[%s423 + $0x8] sm:$0xf]
        %v1411 = vld [vmem:[%s423 + $0xc] sm:$0xff]
        %v1412 = vld [vmem:[%s423 + $0x14] sm:$0xf]
        %v1413 = vld [vmem:[%s423 + $0x18] sm:$0xff]
        %v1414 = vld [vmem:[%s423 + $0x20] sm:$0xf]
        %v1415 = vld [vmem:[%s423 + $0x24] sm:$0xff]
        %v1416 = vld [vmem:[%s423 + $0x2c] sm:$0xf]
        %v1417 = vld [vmem:[%s423 + $0x30] sm:$0xff]
        %v1418 = vld [vmem:[%s423 + $0x38] sm:$0xf]
        %v1419 = vld [vmem:[%s423 + $0x3c] sm:$0xff]
        %v1420 = vld [vmem:[%s423 + $0x44] sm:$0xf]
        %v1421 = vld [vmem:[%s423 + $0x48] sm:$0xff]
        %v1422 = vld [vmem:[%s423 + $0x50] sm:$0xf]
        %v1423 = vld [vmem:[%s423 + $0x54] sm:$0xff]
        %v1424 = vld [vmem:[%s423 + $0x5c] sm:$0xf]
        %v1425 = vld [vmem:[%s423 + $0x60] sm:$0xff]
        %v1426 = vld [vmem:[%s423 + $0x68] sm:$0xf]
        %v1427 = vld [vmem:[%s423 + $0x6c] sm:$0xff]
        %v1428 = vld [vmem:[%s423 + $0x74] sm:$0xf]
        %v1429 = vld [vmem:[%s423 + $0x78] sm:$0xff]
        %v1430 = vld [vmem:[%s423 + $0x80] sm:$0xf]
        %v1431 = vld [vmem:[%s423 + $0x84] sm:$0xff]
        %v1432 = vld [vmem:[%s423 + $0x8c] sm:$0xf]
        %v1433 = vld [vmem:[%s423 + $0x90] sm:$0xff]
        %v1434 = vld [vmem:[%s423 + $0x98] sm:$0xf]
        %v1435 = vld [vmem:[%s423 + $0x9c] sm:$0xff]
        %v1436 = vld [vmem:[%s423 + $0xa4] sm:$0xf]
        %v1437 = vld [vmem:[%s423 + $0xa8] sm:$0xff]
        %v1438 = vld [vmem:[%s423 + $0xb0] sm:$0xf]
        %v1439 = vld [vmem:[%s423 + $0xb4] sm:$0xff]
        %v1440 = vld [vmem:[%s423 + $0xbc] sm:$0xf]
        %v1441 = vld [vmem:[%s423 + $0xc0] sm:$0xff]
        %v1442 = vld [vmem:[%s423 + $0xc8] sm:$0xf]
        %v1443 = vld [vmem:[%s423 + $0xcc] sm:$0xff]
        %v1444 = vld [vmem:[%s423 + $0xd4] sm:$0xf]
        %v1445 = vld [vmem:[%s423 + $0xd8] sm:$0xff]
        %v1446 = vld [vmem:[%s423 + $0xe0] sm:$0xf]
        %v1447 = vld [vmem:[%s423 + $0xe4] sm:$0xff]
        %v1448 = vld [vmem:[%s423 + $0xec] sm:$0xf]
        %v1449 = vld [vmem:[%s423 + $0xf0] sm:$0xff]
        %v1450 = vld [vmem:[%s423 + $0xf8] sm:$0xf]
        %v1451 = vld [vmem:[%s423 + $0xfc] sm:$0xff]
        %v1452 = vld [vmem:[%s423 + $0x104] sm:$0xf]
        %v1453 = vld [vmem:[%s423 + $0x108] sm:$0xff]
        %v1454 = vld [vmem:[%s423 + $0x110] sm:$0xf]
        %v1455 = vld [vmem:[%s423 + $0x114] sm:$0xff]
        %v1456 = vld [vmem:[%s423 + $0x11c] sm:$0xf]
        %v1457 = vld [vmem:[%s423 + $0x120] sm:$0xff]
        %v1458 = vld [vmem:[%s423 + $0x128] sm:$0xf]
        %v1459 = vld [vmem:[%s423 + $0x12c] sm:$0xff]
        %v1460 = vld [vmem:[%s423 + $0x134] sm:$0xf]
        %v1461 = vld [vmem:[%s423 + $0x138] sm:$0xff]
        %v1462 = vld [vmem:[%s423 + $0x140] sm:$0xf]
        %v1463 = vld [vmem:[%s423 + $0x144] sm:$0xff]
        %v1464 = vld [vmem:[%s423 + $0x14c] sm:$0xf]
        %v1465 = vld [vmem:[%s423 + $0x150] sm:$0xff]
        %v1466 = vld [vmem:[%s423 + $0x158] sm:$0xf]
        %v1467 = vld [vmem:[%s423 + $0x15c] sm:$0xff]
        %v1468 = vld [vmem:[%s423 + $0x164] sm:$0xf]
        %v1469 = vld [vmem:[%s423 + $0x168] sm:$0xff]
        %v1470 = vld [vmem:[%s423 + $0x170] sm:$0xf]
        %v1471 = vld [vmem:[%s423 + $0x174] sm:$0xff]
        %v1472 = vld [vmem:[%s423 + $0x17c] sm:$0xf]
        %v1473 = vld [vmem:[%s423 + $0x180] sm:$0xff]
        %v1474 = vld [vmem:[%s423 + $0x188] sm:$0xf]
        %v1475 = vld [vmem:[%s423 + $0x18c] sm:$0xff]
        %v1476 = vld [vmem:[%s423 + $0x194] sm:$0xf]
        %v1477 = vld [vmem:[%s423 + $0x198] sm:$0xff]
        %v1478 = vld [vmem:[%s423 + $0x1a0] sm:$0xf]
        %v1479 = vld [vmem:[%s423 + $0x1a4] sm:$0xff]
        %v1480 = vld [vmem:[%s423 + $0x1ac] sm:$0xf]
        %v1481 = vld [vmem:[%s423 + $0x1b0] sm:$0xff]
        %v1482 = vld [vmem:[%s423 + $0x1b8] sm:$0xf]
        %v1483 = vld [vmem:[%s423 + $0x1bc] sm:$0xff]
        %v1484 = vld [vmem:[%s423 + $0x1c4] sm:$0xf]
        %v1485 = vld [vmem:[%s423 + $0x1c8] sm:$0xff]
        %v1486 = vld [vmem:[%s423 + $0x1d0] sm:$0xf]
        %v1487 = vld [vmem:[%s423 + $0x1d4] sm:$0xff]
        %v1488 = vld [vmem:[%s423 + $0x1dc] sm:$0xf]
        %v1489 = vld [vmem:[%s423 + $0x1e0] sm:$0xff]
        %v1490 = vld [vmem:[%s423 + $0x1e8] sm:$0xf]
        %v1491 = vld [vmem:[%s423 + $0x1ec] sm:$0xff]
        %v1492 = vld [vmem:[%s423 + $0x1f4] sm:$0xf]
        %v1493 = vld [vmem:[%s423 + $0x1f8] sm:$0xff]
        %v1494 = vld [vmem:[%s423 + $0x200] sm:$0xf]
        %v1495 = vld [vmem:[%s423 + $0x204] sm:$0xff]
        %v1496 = vld [vmem:[%s423 + $0x20c] sm:$0xf]
        %v1497 = vld [vmem:[%s423 + $0x210] sm:$0xff]
        %v1498 = vld [vmem:[%s423 + $0x218] sm:$0xf]
        %v1499 = vld [vmem:[%s423 + $0x21c] sm:$0xff]
        %v1500 = vld [vmem:[%s423 + $0x224] sm:$0xf]
        %v1501 = vld [vmem:[%s423 + $0x228] sm:$0xff]
        %v1502 = vld [vmem:[%s423 + $0x230] sm:$0xf]
        %v1503 = vld [vmem:[%s423 + $0x234] sm:$0xff]
        %v1504 = vld [vmem:[%s423 + $0x23c] sm:$0xf]
        %v1505 = vld [vmem:[%s423 + $0x240] sm:$0xff]
        %v1506 = vld [vmem:[%s423 + $0x248] sm:$0xf]
        %v1507 = vld [vmem:[%s423 + $0x24c] sm:$0xff]
        %v1508 = vld [vmem:[%s423 + $0x254] sm:$0xf]
        %v1509 = vld [vmem:[%s423 + $0x258] sm:$0xff]
        %v1510 = vld [vmem:[%s423 + $0x260] sm:$0xf]
        %v1511 = vld [vmem:[%s423 + $0x264] sm:$0xff]
        %v1512 = vld [vmem:[%s423 + $0x26c] sm:$0xf]
        %v1513 = vld [vmem:[%s423 + $0x270] sm:$0xff]
        %v1514 = vld [vmem:[%s423 + $0x278] sm:$0xf]
        %v1515 = vld [vmem:[%s423 + $0x27c] sm:$0xff]
        %v1516 = vld [vmem:[%s423 + $0x284] sm:$0xf]
        %v1517 = vld [vmem:[%s423 + $0x288] sm:$0xff]
        %v1518 = vld [vmem:[%s423 + $0x290] sm:$0xf]
        %v1519 = vld [vmem:[%s423 + $0x294] sm:$0xff]
        %v1520 = vld [vmem:[%s423 + $0x29c] sm:$0xf]
        %v1521 = vld [vmem:[%s423 + $0x2a0] sm:$0xff]
        %v1522 = vld [vmem:[%s423 + $0x2a8] sm:$0xf]
        %v1523 = vld [vmem:[%s423 + $0x2ac] sm:$0xff]
        %v1524 = vld [vmem:[%s423 + $0x2b4] sm:$0xf]
        %v1525 = vld [vmem:[%s423 + $0x2b8] sm:$0xff]
        %v1526 = vld [vmem:[%s423 + $0x2c0] sm:$0xf]
        %v1527 = vld [vmem:[%s423 + $0x2c4] sm:$0xff]
        %v1528 = vld [vmem:[%s423 + $0x2cc] sm:$0xf]
        %v1529 = vld [vmem:[%s423 + $0x2d0] sm:$0xff]
        %v1530 = vld [vmem:[%s423 + $0x2d8] sm:$0xf]
        %v1531 = vld [vmem:[%s423 + $0x2dc] sm:$0xff]
        %v1532 = vld [vmem:[%s423 + $0x2e4] sm:$0xf]
        %v1533 = vld [vmem:[%s423 + $0x2e8] sm:$0xff]
        %v1534 = vld [vmem:[%s423 + $0x2f0] sm:$0xf]
        %v1535 = vld [vmem:[%s423 + $0x2f4] sm:$0xff]
        %v1536 = vld [vmem:[%s423 + $0x2fc] sm:$0xf]
        %v1665 = vunpack.c.l.b16 %v1409
        %v1666 = vunpack.c.h.b16 %v1409
        %v1667 = vunpack.c.l.b16 %v1410
        %v1668 = vunpack.c.l.b16 %v1411
        %v1669 = vunpack.c.h.b16 %v1411
        %v1670 = vunpack.c.l.b16 %v1412
        %v1671 = vunpack.c.l.b16 %v1413
        %v1672 = vunpack.c.h.b16 %v1413
        %v1673 = vunpack.c.l.b16 %v1414
        %v1674 = vunpack.c.l.b16 %v1415
        %v1675 = vunpack.c.h.b16 %v1415
        %v1676 = vunpack.c.l.b16 %v1416
        %v1677 = vunpack.c.l.b16 %v1417
        %v1678 = vunpack.c.h.b16 %v1417
        %v1679 = vunpack.c.l.b16 %v1418
        %v1680 = vunpack.c.l.b16 %v1419
        %v1681 = vunpack.c.h.b16 %v1419
        %v1682 = vunpack.c.l.b16 %v1420
        %v1683 = vunpack.c.l.b16 %v1421
        %v1684 = vunpack.c.h.b16 %v1421
        %v1685 = vunpack.c.l.b16 %v1422
        %v1686 = vunpack.c.l.b16 %v1423
        %v1687 = vunpack.c.h.b16 %v1423
        %v1688 = vunpack.c.l.b16 %v1424
        %v1689 = vunpack.c.l.b16 %v1425
        %v1690 = vunpack.c.h.b16 %v1425
        %v1691 = vunpack.c.l.b16 %v1426
        %v1692 = vunpack.c.l.b16 %v1427
        %v1693 = vunpack.c.h.b16 %v1427
        %v1694 = vunpack.c.l.b16 %v1428
        %v1695 = vunpack.c.l.b16 %v1429
        %v1696 = vunpack.c.h.b16 %v1429
        %v1697 = vunpack.c.l.b16 %v1430
        %v1698 = vunpack.c.l.b16 %v1431
        %v1699 = vunpack.c.h.b16 %v1431
        %v1700 = vunpack.c.l.b16 %v1432
        %v1701 = vunpack.c.l.b16 %v1433
        %v1702 = vunpack.c.h.b16 %v1433
        %v1703 = vunpack.c.l.b16 %v1434
        %v1704 = vunpack.c.l.b16 %v1435
        %v1705 = vunpack.c.h.b16 %v1435
        %v1706 = vunpack.c.l.b16 %v1436
        %v1707 = vunpack.c.l.b16 %v1437
        %v1708 = vunpack.c.h.b16 %v1437
        %v1709 = vunpack.c.l.b16 %v1438
        %v1710 = vunpack.c.l.b16 %v1439
        %v1711 = vunpack.c.h.b16 %v1439
        %v1712 = vunpack.c.l.b16 %v1440
        %v1713 = vunpack.c.l.b16 %v1441
        %v1714 = vunpack.c.h.b16 %v1441
        %v1715 = vunpack.c.l.b16 %v1442
        %v1716 = vunpack.c.l.b16 %v1443
        %v1717 = vunpack.c.h.b16 %v1443
        %v1718 = vunpack.c.l.b16 %v1444
        %v1719 = vunpack.c.l.b16 %v1445
        %v1720 = vunpack.c.h.b16 %v1445
        %v1721 = vunpack.c.l.b16 %v1446
        %v1722 = vunpack.c.l.b16 %v1447
        %v1723 = vunpack.c.h.b16 %v1447
        %v1724 = vunpack.c.l.b16 %v1448
        %v1725 = vunpack.c.l.b16 %v1449
        %v1726 = vunpack.c.h.b16 %v1449
        %v1727 = vunpack.c.l.b16 %v1450
        %v1728 = vunpack.c.l.b16 %v1451
        %v1729 = vunpack.c.h.b16 %v1451
        %v1730 = vunpack.c.l.b16 %v1452
        %v1731 = vunpack.c.l.b16 %v1453
        %v1732 = vunpack.c.h.b16 %v1453
        %v1733 = vunpack.c.l.b16 %v1454
        %v1734 = vunpack.c.l.b16 %v1455
        %v1735 = vunpack.c.h.b16 %v1455
        %v1736 = vunpack.c.l.b16 %v1456
        %v1737 = vunpack.c.l.b16 %v1457
        %v1738 = vunpack.c.h.b16 %v1457
        %v1739 = vunpack.c.l.b16 %v1458
        %v1740 = vunpack.c.l.b16 %v1459
        %v1741 = vunpack.c.h.b16 %v1459
        %v1742 = vunpack.c.l.b16 %v1460
        %v1743 = vunpack.c.l.b16 %v1461
        %v1744 = vunpack.c.h.b16 %v1461
        %v1745 = vunpack.c.l.b16 %v1462
        %v1746 = vunpack.c.l.b16 %v1463
        %v1747 = vunpack.c.h.b16 %v1463
        %v1748 = vunpack.c.l.b16 %v1464
        %v1749 = vunpack.c.l.b16 %v1465
        %v1750 = vunpack.c.h.b16 %v1465
        %v1751 = vunpack.c.l.b16 %v1466
        %v1752 = vunpack.c.l.b16 %v1467
        %v1753 = vunpack.c.h.b16 %v1467
        %v1754 = vunpack.c.l.b16 %v1468
        %v1755 = vunpack.c.l.b16 %v1469
        %v1756 = vunpack.c.h.b16 %v1469
        %v1757 = vunpack.c.l.b16 %v1470
        %v1758 = vunpack.c.l.b16 %v1471
        %v1759 = vunpack.c.h.b16 %v1471
        %v1760 = vunpack.c.l.b16 %v1472
        %v1761 = vunpack.c.l.b16 %v1473
        %v1762 = vunpack.c.h.b16 %v1473
        %v1763 = vunpack.c.l.b16 %v1474
        %v1764 = vunpack.c.l.b16 %v1475
        %v1765 = vunpack.c.h.b16 %v1475
        %v1766 = vunpack.c.l.b16 %v1476
        %v1767 = vunpack.c.l.b16 %v1477
        %v1768 = vunpack.c.h.b16 %v1477
        %v1769 = vunpack.c.l.b16 %v1478
        %v1770 = vunpack.c.l.b16 %v1479
        %v1771 = vunpack.c.h.b16 %v1479
        %v1772 = vunpack.c.l.b16 %v1480
        %v1773 = vunpack.c.l.b16 %v1481
        %v1774 = vunpack.c.h.b16 %v1481
        %v1775 = vunpack.c.l.b16 %v1482
        %v1776 = vunpack.c.l.b16 %v1483
        %v1777 = vunpack.c.h.b16 %v1483
        %v1778 = vunpack.c.l.b16 %v1484
        %v1779 = vunpack.c.l.b16 %v1485
        %v1780 = vunpack.c.h.b16 %v1485
        %v1781 = vunpack.c.l.b16 %v1486
        %v1782 = vunpack.c.l.b16 %v1487
        %v1783 = vunpack.c.h.b16 %v1487
        %v1784 = vunpack.c.l.b16 %v1488
        %v1785 = vunpack.c.l.b16 %v1489
        %v1786 = vunpack.c.h.b16 %v1489
        %v1787 = vunpack.c.l.b16 %v1490
        %v1788 = vunpack.c.l.b16 %v1491
        %v1789 = vunpack.c.h.b16 %v1491
        %v1790 = vunpack.c.l.b16 %v1492
        %v1791 = vunpack.c.l.b16 %v1493
        %v1792 = vunpack.c.h.b16 %v1493
        %v1793 = vunpack.c.l.b16 %v1494
        %v1794 = vunpack.c.l.b16 %v1495
        %v1795 = vunpack.c.h.b16 %v1495
        %v1796 = vunpack.c.l.b16 %v1496
        %v1797 = vunpack.c.l.b16 %v1497
        %v1798 = vunpack.c.h.b16 %v1497
        %v1799 = vunpack.c.l.b16 %v1498
        %v1800 = vunpack.c.l.b16 %v1499
        %v1801 = vunpack.c.h.b16 %v1499
        %v1802 = vunpack.c.l.b16 %v1500
        %v1803 = vunpack.c.l.b16 %v1501
        %v1804 = vunpack.c.h.b16 %v1501
        %v1805 = vunpack.c.l.b16 %v1502
        %v1806 = vunpack.c.l.b16 %v1503
        %v1807 = vunpack.c.h.b16 %v1503
        %v1808 = vunpack.c.l.b16 %v1504
        %v1809 = vunpack.c.l.b16 %v1505
        %v1810 = vunpack.c.h.b16 %v1505
        %v1811 = vunpack.c.l.b16 %v1506
        %v1812 = vunpack.c.l.b16 %v1507
        %v1813 = vunpack.c.h.b16 %v1507
        %v1814 = vunpack.c.l.b16 %v1508
        %v1815 = vunpack.c.l.b16 %v1509
        %v1816 = vunpack.c.h.b16 %v1509
        %v1817 = vunpack.c.l.b16 %v1510
        %v1818 = vunpack.c.l.b16 %v1511
        %v1819 = vunpack.c.h.b16 %v1511
        %v1820 = vunpack.c.l.b16 %v1512
        %v1821 = vunpack.c.l.b16 %v1513
        %v1822 = vunpack.c.h.b16 %v1513
        %v1823 = vunpack.c.l.b16 %v1514
        %v1824 = vunpack.c.l.b16 %v1515
        %v1825 = vunpack.c.h.b16 %v1515
        %v1826 = vunpack.c.l.b16 %v1516
        %v1827 = vunpack.c.l.b16 %v1517
        %v1828 = vunpack.c.h.b16 %v1517
        %v1829 = vunpack.c.l.b16 %v1518
        %v1830 = vunpack.c.l.b16 %v1519
        %v1831 = vunpack.c.h.b16 %v1519
        %v1832 = vunpack.c.l.b16 %v1520
        %v1833 = vunpack.c.l.b16 %v1521
        %v1834 = vunpack.c.h.b16 %v1521
        %v1835 = vunpack.c.l.b16 %v1522
        %v1836 = vunpack.c.l.b16 %v1523
        %v1837 = vunpack.c.h.b16 %v1523
        %v1838 = vunpack.c.l.b16 %v1524
        %v1839 = vunpack.c.l.b16 %v1525
        %v1840 = vunpack.c.h.b16 %v1525
        %v1841 = vunpack.c.l.b16 %v1526
        %v1842 = vunpack.c.l.b16 %v1527
        %v1843 = vunpack.c.h.b16 %v1527
        %v1844 = vunpack.c.l.b16 %v1528
        %v1845 = vunpack.c.l.b16 %v1529
        %v1846 = vunpack.c.h.b16 %v1529
        %v1847 = vunpack.c.l.b16 %v1530
        %v1848 = vunpack.c.l.b16 %v1531
        %v1849 = vunpack.c.h.b16 %v1531
        %v1850 = vunpack.c.l.b16 %v1532
        %v1851 = vunpack.c.l.b16 %v1533
        %v1852 = vunpack.c.h.b16 %v1533
        %v1853 = vunpack.c.l.b16 %v1534
        %v1854 = vunpack.c.l.b16 %v1535
        %v1855 = vunpack.c.h.b16 %v1535
        %v1856 = vunpack.c.l.b16 %v1536
        %v1857 = vpack.c.b16 %v1668, %v1665
        %v1858 = vpack.c.b16 %v1669, %v1666
        %v1859 = vpack.c.b16 %v1670, %v1667
        %v1860 = vpack.c.b16 %v1674, %v1671
        %v1861 = vpack.c.b16 %v1675, %v1672
        %v1862 = vpack.c.b16 %v1676, %v1673
        %v1863 = vpack.c.b16 %v1680, %v1677
        %v1864 = vpack.c.b16 %v1681, %v1678
        %v1865 = vpack.c.b16 %v1682, %v1679
        %v1866 = vpack.c.b16 %v1686, %v1683
        %v1867 = vpack.c.b16 %v1687, %v1684
        %v1868 = vpack.c.b16 %v1688, %v1685
        %v1869 = vpack.c.b16 %v1692, %v1689
        %v1870 = vpack.c.b16 %v1693, %v1690
        %v1871 = vpack.c.b16 %v1694, %v1691
        %v1872 = vpack.c.b16 %v1698, %v1695
        %v1873 = vpack.c.b16 %v1699, %v1696
        %v1874 = vpack.c.b16 %v1700, %v1697
        %v1875 = vpack.c.b16 %v1704, %v1701
        %v1876 = vpack.c.b16 %v1705, %v1702
        %v1877 = vpack.c.b16 %v1706, %v1703
        %v1878 = vpack.c.b16 %v1710, %v1707
        %v1879 = vpack.c.b16 %v1711, %v1708
        %v1880 = vpack.c.b16 %v1712, %v1709
        %v1881 = vpack.c.b16 %v1716, %v1713
        %v1882 = vpack.c.b16 %v1717, %v1714
        %v1883 = vpack.c.b16 %v1718, %v1715
        %v1884 = vpack.c.b16 %v1722, %v1719
        %v1885 = vpack.c.b16 %v1723, %v1720
        %v1886 = vpack.c.b16 %v1724, %v1721
        %v1887 = vpack.c.b16 %v1728, %v1725
        %v1888 = vpack.c.b16 %v1729, %v1726
        %v1889 = vpack.c.b16 %v1730, %v1727
        %v1890 = vpack.c.b16 %v1734, %v1731
        %v1891 = vpack.c.b16 %v1735, %v1732
        %v1892 = vpack.c.b16 %v1736, %v1733
        %v1893 = vpack.c.b16 %v1740, %v1737
        %v1894 = vpack.c.b16 %v1741, %v1738
        %v1895 = vpack.c.b16 %v1742, %v1739
        %v1896 = vpack.c.b16 %v1746, %v1743
        %v1897 = vpack.c.b16 %v1747, %v1744
        %v1898 = vpack.c.b16 %v1748, %v1745
        %v1899 = vpack.c.b16 %v1752, %v1749
        %v1900 = vpack.c.b16 %v1753, %v1750
        %v1901 = vpack.c.b16 %v1754, %v1751
        %v1902 = vpack.c.b16 %v1758, %v1755
        %v1903 = vpack.c.b16 %v1759, %v1756
        %v1904 = vpack.c.b16 %v1760, %v1757
        %v1905 = vpack.c.b16 %v1764, %v1761
        %v1906 = vpack.c.b16 %v1765, %v1762
        %v1907 = vpack.c.b16 %v1766, %v1763
        %v1908 = vpack.c.b16 %v1770, %v1767
        %v1909 = vpack.c.b16 %v1771, %v1768
        %v1910 = vpack.c.b16 %v1772, %v1769
        %v1911 = vpack.c.b16 %v1776, %v1773
        %v1912 = vpack.c.b16 %v1777, %v1774
        %v1913 = vpack.c.b16 %v1778, %v1775
        %v1914 = vpack.c.b16 %v1782, %v1779
        %v1915 = vpack.c.b16 %v1783, %v1780
        %v1916 = vpack.c.b16 %v1784, %v1781
        %v1917 = vpack.c.b16 %v1788, %v1785
        %v1918 = vpack.c.b16 %v1789, %v1786
        %v1919 = vpack.c.b16 %v1790, %v1787
        %v1920 = vpack.c.b16 %v1794, %v1791
        %v1921 = vpack.c.b16 %v1795, %v1792
        %v1922 = vpack.c.b16 %v1796, %v1793
        %v1923 = vpack.c.b16 %v1800, %v1797
        %v1924 = vpack.c.b16 %v1801, %v1798
        %v1925 = vpack.c.b16 %v1802, %v1799
        %v1926 = vpack.c.b16 %v1806, %v1803
        %v1927 = vpack.c.b16 %v1807, %v1804
        %v1928 = vpack.c.b16 %v1808, %v1805
        %v1929 = vpack.c.b16 %v1812, %v1809
        %v1930 = vpack.c.b16 %v1813, %v1810
        %v1931 = vpack.c.b16 %v1814, %v1811
        %v1932 = vpack.c.b16 %v1818, %v1815
        %v1933 = vpack.c.b16 %v1819, %v1816
        %v1934 = vpack.c.b16 %v1820, %v1817
        %v1935 = vpack.c.b16 %v1824, %v1821
        %v1936 = vpack.c.b16 %v1825, %v1822
        %v1937 = vpack.c.b16 %v1826, %v1823
        %v1938 = vpack.c.b16 %v1830, %v1827
        %v1939 = vpack.c.b16 %v1831, %v1828
        %v1940 = vpack.c.b16 %v1832, %v1829
        %v1941 = vpack.c.b16 %v1836, %v1833
        %v1942 = vpack.c.b16 %v1837, %v1834
        %v1943 = vpack.c.b16 %v1838, %v1835
        %v1944 = vpack.c.b16 %v1842, %v1839
        %v1945 = vpack.c.b16 %v1843, %v1840
        %v1946 = vpack.c.b16 %v1844, %v1841
        %v1947 = vpack.c.b16 %v1848, %v1845
        %v1948 = vpack.c.b16 %v1849, %v1846
        %v1949 = vpack.c.b16 %v1850, %v1847
        %v1950 = vpack.c.b16 %v1854, %v1851
        %v1951 = vpack.c.b16 %v1855, %v1852
        %v1952 = vpack.c.b16 %v1856, %v1853
        %2049 = vmatprep.subr.bf16.mxu0 %v1879
        %2050 = vmatpush1.bf16.msra.mxu0 %v1878
        %2051 = vmatprep.subr.bf16.mxu0 %v1876
        %2052 = vmatpush1.bf16.msra.mxu0 %v1875
        %2053 = vmatprep.subr.bf16.mxu0 %v1873
        %2054 = vmatpush1.bf16.msra.mxu0 %v1872
        %2055 = vmatprep.subr.bf16.mxu0 %v1870
        %2056 = vmatpush1.bf16.msra.mxu0 %v1869
        %2057 = vmatprep.subr.bf16.mxu0 %v1867
        %2058 = vmatpush1.bf16.msra.mxu0 %v1866
        %2059 = vmatprep.subr.bf16.mxu0 %v1864
        %2060 = vmatpush1.bf16.msra.mxu0 %v1863
        %2061 = vmatprep.subr.bf16.mxu0 %v1861
        %2062 = vmatpush1.bf16.msra.mxu0 %v1860
        %2063 = vmatprep.subr.bf16.mxu0 %v1858
        %2064 = vmatpush1.bf16.msra.mxu0 %v1857
        %2065 = vmatprep.subr.bf16.mxu0 %v1903
        %2066 = vmatpush2.bf16.msra.mxu0 %v1902
        %2067 = vmatprep.subr.bf16.mxu0 %v1900
        %2068 = vmatpush2.bf16.msra.mxu0 %v1899
        %2069 = vmatprep.subr.bf16.mxu0 %v1897
        %2070 = vmatpush2.bf16.msra.mxu0 %v1896
        %2071 = vmatprep.subr.bf16.mxu0 %v1894
        %2072 = vmatpush2.bf16.msra.mxu0 %v1893
        %2073 = vmatprep.subr.bf16.mxu0 %v1891
        %2074 = vmatpush2.bf16.msra.mxu0 %v1890
        %2075 = vmatprep.subr.bf16.mxu0 %v1888
        %2076 = vmatpush2.bf16.msra.mxu0 %v1887
        %2077 = vmatprep.subr.bf16.mxu0 %v1885
        %2078 = vmatpush2.bf16.msra.mxu0 %v1884
        %2079 = vmatprep.subr.bf16.mxu0 %v1882
        %2080 = vmatpush2.bf16.msra.mxu0 %v1881
        %2081 = vmatprep.mubr.bf16.mxu0 %v1282
        %2082 = vmatmul.mubr.bf16.gmra.mxu0 %v1281
        %v2083 = vpop.f32.mrf.mxu0
        %v2084 = vadd.f32 0.0, %v2083
        %v2085 = vpop.f32.mrf.mxu0
        %v2086 = vadd.f32 0.0, %v2085
        %v2087 = vpop.f32.mrf.mxu0
        %v2088 = vadd.f32 0.0, %v2087
        %v2089 = vpop.f32.mrf.mxu0
        %v2090 = vadd.f32 0.0, %v2089
        %2091 = vmatprep.mubr.bf16.mxu0 %v1286
        %2092 = vmatmul.mubr.bf16.gmra.mxu0 %v1285
        %v2093 = vpop.f32.mrf.mxu0
        %v2094 = vadd.f32 0.0, %v2093
        %v2095 = vpop.f32.mrf.mxu0
        %v2096 = vadd.f32 0.0, %v2095
        %v2097 = vpop.f32.mrf.mxu0
        %v2098 = vadd.f32 0.0, %v2097
        %v2099 = vpop.f32.mrf.mxu0
        %v2100 = vadd.f32 0.0, %v2099
        %2101 = vmatprep.mubr.bf16.mxu0 %v1290
        %2102 = vmatmul.mubr.bf16.gmra.mxu0 %v1289
        %v2103 = vpop.f32.mrf.mxu0
        %v2104 = vadd.f32 0.0, %v2103
        %v2105 = vpop.f32.mrf.mxu0
        %v2106 = vadd.f32 0.0, %v2105
        %v2107 = vpop.f32.mrf.mxu0
        %v2108 = vadd.f32 0.0, %v2107
        %v2109 = vpop.f32.mrf.mxu0
        %v2110 = vadd.f32 0.0, %v2109
        %2111 = vmatprep.mubr.bf16.mxu0 %v1294
        %2112 = vmatmul.mubr.bf16.gmra.mxu0 %v1293
        %v2113 = vpop.f32.mrf.mxu0
        %v2114 = vadd.f32 0.0, %v2113
        %v2115 = vpop.f32.mrf.mxu0
        %v2116 = vadd.f32 0.0, %v2115
        %v2117 = vpop.f32.mrf.mxu0
        %v2118 = vadd.f32 0.0, %v2117
        %v2119 = vpop.f32.mrf.mxu0
        %v2120 = vadd.f32 0.0, %v2119
        %2121 = vmatprep.mubr.bf16.mxu0 %v1298
        %2122 = vmatmul.mubr.bf16.gmra.mxu0 %v1297
        %v2123 = vpop.f32.mrf.mxu0
        %v2124 = vadd.f32 0.0, %v2123
        %v2125 = vpop.f32.mrf.mxu0
        %v2126 = vadd.f32 0.0, %v2125
        %v2127 = vpop.f32.mrf.mxu0
        %v2128 = vadd.f32 0.0, %v2127
        %v2129 = vpop.f32.mrf.mxu0
        %v2130 = vadd.f32 0.0, %v2129
        %2131 = vmatprep.mubr.bf16.mxu0 %v1302
        %2132 = vmatmul.mubr.bf16.gmra.mxu0 %v1301
        %v2133 = vpop.f32.mrf.mxu0
        %v2134 = vadd.f32 0.0, %v2133
        %v2135 = vpop.f32.mrf.mxu0
        %v2136 = vadd.f32 0.0, %v2135
        %v2137 = vpop.f32.mrf.mxu0
        %v2138 = vadd.f32 0.0, %v2137
        %v2139 = vpop.f32.mrf.mxu0
        %v2140 = vadd.f32 0.0, %v2139
        %2141 = vmatprep.mubr.bf16.mxu0 %v1306
        %2142 = vmatmul.mubr.bf16.gmra.mxu0 %v1305
        %v2143 = vpop.f32.mrf.mxu0
        %v2144 = vadd.f32 0.0, %v2143
        %v2145 = vpop.f32.mrf.mxu0
        %v2146 = vadd.f32 0.0, %v2145
        %v2147 = vpop.f32.mrf.mxu0
        %v2148 = vadd.f32 0.0, %v2147
        %v2149 = vpop.f32.mrf.mxu0
        %v2150 = vadd.f32 0.0, %v2149
        %2151 = vmatprep.mubr.bf16.mxu0 %v1310
        %2152 = vmatmul.mubr.bf16.gmra.mxu0 %v1309
        %v2153 = vpop.f32.mrf.mxu0
        %v2154 = vadd.f32 0.0, %v2153
        %v2155 = vpop.f32.mrf.mxu0
        %v2156 = vadd.f32 0.0, %v2155
        %v2157 = vpop.f32.mrf.mxu0
        %v2158 = vadd.f32 0.0, %v2157
        %v2159 = vpop.f32.mrf.mxu0
        %v2160 = vadd.f32 0.0, %v2159
        %2161 = vmatprep.mubr.bf16.mxu0 %v1314
        %2162 = vmatmul.mubr.bf16.gmra.mxu0 %v1313
        %v2163 = vpop.f32.mrf.mxu0
        %v2164 = vadd.f32 0.0, %v2163
        %v2165 = vpop.f32.mrf.mxu0
        %v2166 = vadd.f32 0.0, %v2165
        %v2167 = vpop.f32.mrf.mxu0
        %v2168 = vadd.f32 0.0, %v2167
        %v2169 = vpop.f32.mrf.mxu0
        %v2170 = vadd.f32 0.0, %v2169
        %2171 = vmatprep.mubr.bf16.mxu0 %v1318
        %2172 = vmatmul.mubr.bf16.gmra.mxu0 %v1317
        %v2173 = vpop.f32.mrf.mxu0
        %v2174 = vadd.f32 0.0, %v2173
        %v2175 = vpop.f32.mrf.mxu0
        %v2176 = vadd.f32 0.0, %v2175
        %v2177 = vpop.f32.mrf.mxu0
        %v2178 = vadd.f32 0.0, %v2177
        %v2179 = vpop.f32.mrf.mxu0
        %v2180 = vadd.f32 0.0, %v2179
        %2181 = vmatprep.mubr.bf16.mxu0 %v1322
        %2182 = vmatmul.mubr.bf16.gmra.mxu0 %v1321
        %v2183 = vpop.f32.mrf.mxu0
        %v2184 = vadd.f32 0.0, %v2183
        %v2185 = vpop.f32.mrf.mxu0
        %v2186 = vadd.f32 0.0, %v2185
        %v2187 = vpop.f32.mrf.mxu0
        %v2188 = vadd.f32 0.0, %v2187
        %v2189 = vpop.f32.mrf.mxu0
        %v2190 = vadd.f32 0.0, %v2189
        %2191 = vmatprep.mubr.bf16.mxu0 %v1326
        %2192 = vmatmul.mubr.bf16.gmra.mxu0 %v1325
        %v2193 = vpop.f32.mrf.mxu0
        %v2194 = vadd.f32 0.0, %v2193
        %v2195 = vpop.f32.mrf.mxu0
        %v2196 = vadd.f32 0.0, %v2195
        %v2197 = vpop.f32.mrf.mxu0
        %v2198 = vadd.f32 0.0, %v2197
        %v2199 = vpop.f32.mrf.mxu0
        %v2200 = vadd.f32 0.0, %v2199
        %2201 = vmatprep.mubr.bf16.mxu0 %v1330
        %2202 = vmatmul.mubr.bf16.gmra.mxu0 %v1329
        %v2203 = vpop.f32.mrf.mxu0
        %v2204 = vadd.f32 0.0, %v2203
        %v2205 = vpop.f32.mrf.mxu0
        %v2206 = vadd.f32 0.0, %v2205
        %v2207 = vpop.f32.mrf.mxu0
        %v2208 = vadd.f32 0.0, %v2207
        %v2209 = vpop.f32.mrf.mxu0
        %v2210 = vadd.f32 0.0, %v2209
        %2211 = vmatprep.mubr.bf16.mxu0 %v1334
        %2212 = vmatmul.mubr.bf16.gmra.mxu0 %v1333
        %v2213 = vpop.f32.mrf.mxu0
        %v2214 = vadd.f32 0.0, %v2213
        %v2215 = vpop.f32.mrf.mxu0
        %v2216 = vadd.f32 0.0, %v2215
        %v2217 = vpop.f32.mrf.mxu0
        %v2218 = vadd.f32 0.0, %v2217
        %v2219 = vpop.f32.mrf.mxu0
        %v2220 = vadd.f32 0.0, %v2219
        %2221 = vmatprep.mubr.bf16.mxu0 %v1338
        %2222 = vmatmul.mubr.bf16.gmra.mxu0 %v1337
        %v2223 = vpop.f32.mrf.mxu0
        %v2224 = vadd.f32 0.0, %v2223
        %v2225 = vpop.f32.mrf.mxu0
        %v2226 = vadd.f32 0.0, %v2225
        %v2227 = vpop.f32.mrf.mxu0
        %v2228 = vadd.f32 0.0, %v2227
        %v2229 = vpop.f32.mrf.mxu0
        %v2230 = vadd.f32 0.0, %v2229
        %2231 = vmatprep.mubr.bf16.mxu0 %v1342
        %2232 = vmatmul.mubr.bf16.gmra.mxu0 %v1341
        %v2233 = vpop.f32.mrf.mxu0
        %v2234 = vadd.f32 0.0, %v2233
        %v2235 = vpop.f32.mrf.mxu0
        %v2236 = vadd.f32 0.0, %v2235
        %v2237 = vpop.f32.mrf.mxu0
        %v2238 = vadd.f32 0.0, %v2237
        %v2239 = vpop.f32.mrf.mxu0
        %v2240 = vadd.f32 0.0, %v2239
        %2241 = vdwg.mxu0
        %2242 = vmatprep.subr.bf16.mxu0 %v1927
        %2243 = vmatpush1.bf16.msra.mxu0 %v1926
        %2244 = vmatprep.subr.bf16.mxu0 %v1924
        %2245 = vmatpush1.bf16.msra.mxu0 %v1923
        %2246 = vmatprep.subr.bf16.mxu0 %v1921
        %2247 = vmatpush1.bf16.msra.mxu0 %v1920
        %2248 = vmatprep.subr.bf16.mxu0 %v1918
        %2249 = vmatpush1.bf16.msra.mxu0 %v1917
        %2250 = vmatprep.subr.bf16.mxu0 %v1915
        %2251 = vmatpush1.bf16.msra.mxu0 %v1914
        %2252 = vmatprep.subr.bf16.mxu0 %v1912
        %2253 = vmatpush1.bf16.msra.mxu0 %v1911
        %2254 = vmatprep.subr.bf16.mxu0 %v1909
        %2255 = vmatpush1.bf16.msra.mxu0 %v1908
        %2256 = vmatprep.subr.bf16.mxu0 %v1906
        %2257 = vmatpush1.bf16.msra.mxu0 %v1905
        %2258 = vmatprep.subr.bf16.mxu0 %v1951
        %2259 = vmatpush2.bf16.msra.mxu0 %v1950
        %2260 = vmatprep.subr.bf16.mxu0 %v1948
        %2261 = vmatpush2.bf16.msra.mxu0 %v1947
        %2262 = vmatprep.subr.bf16.mxu0 %v1945
        %2263 = vmatpush2.bf16.msra.mxu0 %v1944
        %2264 = vmatprep.subr.bf16.mxu0 %v1942
        %2265 = vmatpush2.bf16.msra.mxu0 %v1941
        %2266 = vmatprep.subr.bf16.mxu0 %v1939
        %2267 = vmatpush2.bf16.msra.mxu0 %v1938
        %2268 = vmatprep.subr.bf16.mxu0 %v1936
        %2269 = vmatpush2.bf16.msra.mxu0 %v1935
        %2270 = vmatprep.subr.bf16.mxu0 %v1933
        %2271 = vmatpush2.bf16.msra.mxu0 %v1932
        %2272 = vmatprep.subr.bf16.mxu0 %v1930
        %2273 = vmatpush2.bf16.msra.mxu0 %v1929
        %2274 = vmatprep.mubr.bf16.mxu0 %v1284
        %2275 = vmatmul.mubr.bf16.gmra.mxu0 %v1283
        %v2276 = vpop.f32.mrf.mxu0
        %v2277 = vadd.f32 %v2084, %v2276
        %v2278 = vpop.f32.mrf.mxu0
        %v2279 = vadd.f32 %v2086, %v2278
        %v2280 = vpop.f32.mrf.mxu0
        %v2281 = vadd.f32 %v2088, %v2280
        %v2282 = vpop.f32.mrf.mxu0
        %v2283 = vadd.f32 %v2090, %v2282
        %2284 = vmatprep.mubr.bf16.mxu0 %v1288
        %2285 = vmatmul.mubr.bf16.gmra.mxu0 %v1287
        %v2286 = vpop.f32.mrf.mxu0
        %v2287 = vadd.f32 %v2094, %v2286
        %v2288 = vpop.f32.mrf.mxu0
        %v2289 = vadd.f32 %v2096, %v2288
        %v2290 = vpop.f32.mrf.mxu0
        %v2291 = vadd.f32 %v2098, %v2290
        %v2292 = vpop.f32.mrf.mxu0
        %v2293 = vadd.f32 %v2100, %v2292
        %2294 = vmatprep.mubr.bf16.mxu0 %v1292
        %2295 = vmatmul.mubr.bf16.gmra.mxu0 %v1291
        %v2296 = vpop.f32.mrf.mxu0
        %v2297 = vadd.f32 %v2104, %v2296
        %v2298 = vpop.f32.mrf.mxu0
        %v2299 = vadd.f32 %v2106, %v2298
        %v2300 = vpop.f32.mrf.mxu0
        %v2301 = vadd.f32 %v2108, %v2300
        %v2302 = vpop.f32.mrf.mxu0
        %v2303 = vadd.f32 %v2110, %v2302
        %2304 = vmatprep.mubr.bf16.mxu0 %v1296
        %2305 = vmatmul.mubr.bf16.gmra.mxu0 %v1295
        %v2306 = vpop.f32.mrf.mxu0
        %v2307 = vadd.f32 %v2114, %v2306
        %v2308 = vpop.f32.mrf.mxu0
        %v2309 = vadd.f32 %v2116, %v2308
        %v2310 = vpop.f32.mrf.mxu0
        %v2311 = vadd.f32 %v2118, %v2310
        %v2312 = vpop.f32.mrf.mxu0
        %v2313 = vadd.f32 %v2120, %v2312
        %2314 = vmatprep.mubr.bf16.mxu0 %v1300
        %2315 = vmatmul.mubr.bf16.gmra.mxu0 %v1299
        %v2316 = vpop.f32.mrf.mxu0
        %v2317 = vadd.f32 %v2124, %v2316
        %v2318 = vpop.f32.mrf.mxu0
        %v2319 = vadd.f32 %v2126, %v2318
        %v2320 = vpop.f32.mrf.mxu0
        %v2321 = vadd.f32 %v2128, %v2320
        %v2322 = vpop.f32.mrf.mxu0
        %v2323 = vadd.f32 %v2130, %v2322
        %2324 = vmatprep.mubr.bf16.mxu0 %v1304
        %2325 = vmatmul.mubr.bf16.gmra.mxu0 %v1303
        %v2326 = vpop.f32.mrf.mxu0
        %v2327 = vadd.f32 %v2134, %v2326
        %v2328 = vpop.f32.mrf.mxu0
        %v2329 = vadd.f32 %v2136, %v2328
        %v2330 = vpop.f32.mrf.mxu0
        %v2331 = vadd.f32 %v2138, %v2330
        %v2332 = vpop.f32.mrf.mxu0
        %v2333 = vadd.f32 %v2140, %v2332
        %2334 = vmatprep.mubr.bf16.mxu0 %v1308
        %2335 = vmatmul.mubr.bf16.gmra.mxu0 %v1307
        %v2336 = vpop.f32.mrf.mxu0
        %v2337 = vadd.f32 %v2144, %v2336
        %v2338 = vpop.f32.mrf.mxu0
        %v2339 = vadd.f32 %v2146, %v2338
        %v2340 = vpop.f32.mrf.mxu0
        %v2341 = vadd.f32 %v2148, %v2340
        %v2342 = vpop.f32.mrf.mxu0
        %v2343 = vadd.f32 %v2150, %v2342
        %2344 = vmatprep.mubr.bf16.mxu0 %v1312
        %2345 = vmatmul.mubr.bf16.gmra.mxu0 %v1311
        %v2346 = vpop.f32.mrf.mxu0
        %v2347 = vadd.f32 %v2154, %v2346
        %v2348 = vpop.f32.mrf.mxu0
        %v2349 = vadd.f32 %v2156, %v2348
        %v2350 = vpop.f32.mrf.mxu0
        %v2351 = vadd.f32 %v2158, %v2350
        %v2352 = vpop.f32.mrf.mxu0
        %v2353 = vadd.f32 %v2160, %v2352
        %2354 = vmatprep.mubr.bf16.mxu0 %v1316
        %2355 = vmatmul.mubr.bf16.gmra.mxu0 %v1315
        %v2356 = vpop.f32.mrf.mxu0
        %v2357 = vadd.f32 %v2164, %v2356
        %v2358 = vpop.f32.mrf.mxu0
        %v2359 = vadd.f32 %v2166, %v2358
        %v2360 = vpop.f32.mrf.mxu0
        %v2361 = vadd.f32 %v2168, %v2360
        %v2362 = vpop.f32.mrf.mxu0
        %v2363 = vadd.f32 %v2170, %v2362
        %2364 = vmatprep.mubr.bf16.mxu0 %v1320
        %2365 = vmatmul.mubr.bf16.gmra.mxu0 %v1319
        %v2366 = vpop.f32.mrf.mxu0
        %v2367 = vadd.f32 %v2174, %v2366
        %v2368 = vpop.f32.mrf.mxu0
        %v2369 = vadd.f32 %v2176, %v2368
        %v2370 = vpop.f32.mrf.mxu0
        %v2371 = vadd.f32 %v2178, %v2370
        %v2372 = vpop.f32.mrf.mxu0
        %v2373 = vadd.f32 %v2180, %v2372
        %2374 = vmatprep.mubr.bf16.mxu0 %v1324
        %2375 = vmatmul.mubr.bf16.gmra.mxu0 %v1323
        %v2376 = vpop.f32.mrf.mxu0
        %v2377 = vadd.f32 %v2184, %v2376
        %v2378 = vpop.f32.mrf.mxu0
        %v2379 = vadd.f32 %v2186, %v2378
        %v2380 = vpop.f32.mrf.mxu0
        %v2381 = vadd.f32 %v2188, %v2380
        %v2382 = vpop.f32.mrf.mxu0
        %v2383 = vadd.f32 %v2190, %v2382
        %2384 = vmatprep.mubr.bf16.mxu0 %v1328
        %2385 = vmatmul.mubr.bf16.gmra.mxu0 %v1327
        %v2386 = vpop.f32.mrf.mxu0
        %v2387 = vadd.f32 %v2194, %v2386
        %v2388 = vpop.f32.mrf.mxu0
        %v2389 = vadd.f32 %v2196, %v2388
        %v2390 = vpop.f32.mrf.mxu0
        %v2391 = vadd.f32 %v2198, %v2390
        %v2392 = vpop.f32.mrf.mxu0
        %v2393 = vadd.f32 %v2200, %v2392
        %2394 = vmatprep.mubr.bf16.mxu0 %v1332
        %2395 = vmatmul.mubr.bf16.gmra.mxu0 %v1331
        %v2396 = vpop.f32.mrf.mxu0
        %v2397 = vadd.f32 %v2204, %v2396
        %v2398 = vpop.f32.mrf.mxu0
        %v2399 = vadd.f32 %v2206, %v2398
        %v2400 = vpop.f32.mrf.mxu0
        %v2401 = vadd.f32 %v2208, %v2400
        %v2402 = vpop.f32.mrf.mxu0
        %v2403 = vadd.f32 %v2210, %v2402
        %2404 = vmatprep.mubr.bf16.mxu0 %v1336
        %2405 = vmatmul.mubr.bf16.gmra.mxu0 %v1335
        %v2406 = vpop.f32.mrf.mxu0
        %v2407 = vadd.f32 %v2214, %v2406
        %v2408 = vpop.f32.mrf.mxu0
        %v2409 = vadd.f32 %v2216, %v2408
        %v2410 = vpop.f32.mrf.mxu0
        %v2411 = vadd.f32 %v2218, %v2410
        %v2412 = vpop.f32.mrf.mxu0
        %v2413 = vadd.f32 %v2220, %v2412
        %2414 = vmatprep.mubr.bf16.mxu0 %v1340
        %2415 = vmatmul.mubr.bf16.gmra.mxu0 %v1339
        %v2416 = vpop.f32.mrf.mxu0
        %v2417 = vadd.f32 %v2224, %v2416
        %v2418 = vpop.f32.mrf.mxu0
        %v2419 = vadd.f32 %v2226, %v2418
        %v2420 = vpop.f32.mrf.mxu0
        %v2421 = vadd.f32 %v2228, %v2420
        %v2422 = vpop.f32.mrf.mxu0
        %v2423 = vadd.f32 %v2230, %v2422
        %2424 = vmatprep.mubr.bf16.mxu0 %v1344
        %2425 = vmatmul.mubr.bf16.gmra.mxu0 %v1343
        %v2426 = vpop.f32.mrf.mxu0
        %v2427 = vadd.f32 %v2234, %v2426
        %v2428 = vpop.f32.mrf.mxu0
        %v2429 = vadd.f32 %v2236, %v2428
        %v2430 = vpop.f32.mrf.mxu0
        %v2431 = vadd.f32 %v2238, %v2430
        %v2432 = vpop.f32.mrf.mxu0
        %v2433 = vadd.f32 %v2240, %v2432
        %2434 = vdwg.mxu0
        %2435 = vmatprep.subr.bf16.mxu0 0
        %2436 = vmatpush1.bf16.msra.mxu0 %v1880
        %2437 = vmatprep.subr.bf16.mxu0 0
        %2438 = vmatpush1.bf16.msra.mxu0 %v1877
        %2439 = vmatprep.subr.bf16.mxu0 0
        %2440 = vmatpush1.bf16.msra.mxu0 %v1874
        %2441 = vmatprep.subr.bf16.mxu0 0
        %2442 = vmatpush1.bf16.msra.mxu0 %v1871
        %2443 = vmatprep.subr.bf16.mxu0 0
        %2444 = vmatpush1.bf16.msra.mxu0 %v1868
        %2445 = vmatprep.subr.bf16.mxu0 0
        %2446 = vmatpush1.bf16.msra.mxu0 %v1865
        %2447 = vmatprep.subr.bf16.mxu0 0
        %2448 = vmatpush1.bf16.msra.mxu0 %v1862
        %2449 = vmatprep.subr.bf16.mxu0 0
        %2450 = vmatpush1.bf16.msra.mxu0 %v1859
        %2451 = vmatprep.subr.bf16.mxu0 0
        %2452 = vmatpush2.bf16.msra.mxu0 %v1904
        %2453 = vmatprep.subr.bf16.mxu0 0
        %2454 = vmatpush2.bf16.msra.mxu0 %v1901
        %2455 = vmatprep.subr.bf16.mxu0 0
        %2456 = vmatpush2.bf16.msra.mxu0 %v1898
        %2457 = vmatprep.subr.bf16.mxu0 0
        %2458 = vmatpush2.bf16.msra.mxu0 %v1895
        %2459 = vmatprep.subr.bf16.mxu0 0
        %2460 = vmatpush2.bf16.msra.mxu0 %v1892
        %2461 = vmatprep.subr.bf16.mxu0 0
        %2462 = vmatpush2.bf16.msra.mxu0 %v1889
        %2463 = vmatprep.subr.bf16.mxu0 0
        %2464 = vmatpush2.bf16.msra.mxu0 %v1886
        %2465 = vmatprep.subr.bf16.mxu0 0
        %2466 = vmatpush2.bf16.msra.mxu0 %v1883
        %2467 = vmatprep.mubr.bf16.mxu0 %v1282
        %2468 = vmatmul.mubr.bf16.gmra.mxu0 %v1281
        %v2469 = vpop.f32.mrf.mxu0
        %v2470 = vadd.f32 0.0, %v2469
        %v2471 = vpop.f32.mrf.mxu0
        %v2472 = vpop.f32.mrf.mxu0
        %v2473 = vadd.f32 0.0, %v2472
        %v2474 = vpop.f32.mrf.mxu0
        %2475 = vmatprep.mubr.bf16.mxu0 %v1286
        %2476 = vmatmul.mubr.bf16.gmra.mxu0 %v1285
        %v2477 = vpop.f32.mrf.mxu0
        %v2478 = vadd.f32 0.0, %v2477
        %v2479 = vpop.f32.mrf.mxu0
        %v2480 = vpop.f32.mrf.mxu0
        %v2481 = vadd.f32 0.0, %v2480
        %v2482 = vpop.f32.mrf.mxu0
        %2483 = vmatprep.mubr.bf16.mxu0 %v1290
        %2484 = vmatmul.mubr.bf16.gmra.mxu0 %v1289
        %v2485 = vpop.f32.mrf.mxu0
        %v2486 = vadd.f32 0.0, %v2485
        %v2487 = vpop.f32.mrf.mxu0
        %v2488 = vpop.f32.mrf.mxu0
        %v2489 = vadd.f32 0.0, %v2488
        %v2490 = vpop.f32.mrf.mxu0
        %2491 = vmatprep.mubr.bf16.mxu0 %v1294
        %2492 = vmatmul.mubr.bf16.gmra.mxu0 %v1293
        %v2493 = vpop.f32.mrf.mxu0
        %v2494 = vadd.f32 0.0, %v2493
        %v2495 = vpop.f32.mrf.mxu0
        %v2496 = vpop.f32.mrf.mxu0
        %v2497 = vadd.f32 0.0, %v2496
        %v2498 = vpop.f32.mrf.mxu0
        %2499 = vmatprep.mubr.bf16.mxu0 %v1298
        %2500 = vmatmul.mubr.bf16.gmra.mxu0 %v1297
        %v2501 = vpop.f32.mrf.mxu0
        %v2502 = vadd.f32 0.0, %v2501
        %v2503 = vpop.f32.mrf.mxu0
        %v2504 = vpop.f32.mrf.mxu0
        %v2505 = vadd.f32 0.0, %v2504
        %v2506 = vpop.f32.mrf.mxu0
        %2507 = vmatprep.mubr.bf16.mxu0 %v1302
        %2508 = vmatmul.mubr.bf16.gmra.mxu0 %v1301
        %v2509 = vpop.f32.mrf.mxu0
        %v2510 = vadd.f32 0.0, %v2509
        %v2511 = vpop.f32.mrf.mxu0
        %v2512 = vpop.f32.mrf.mxu0
        %v2513 = vadd.f32 0.0, %v2512
        %v2514 = vpop.f32.mrf.mxu0
        %2515 = vmatprep.mubr.bf16.mxu0 %v1306
        %2516 = vmatmul.mubr.bf16.gmra.mxu0 %v1305
        %v2517 = vpop.f32.mrf.mxu0
        %v2518 = vadd.f32 0.0, %v2517
        %v2519 = vpop.f32.mrf.mxu0
        %v2520 = vpop.f32.mrf.mxu0
        %v2521 = vadd.f32 0.0, %v2520
        %v2522 = vpop.f32.mrf.mxu0
        %2523 = vmatprep.mubr.bf16.mxu0 %v1310
        %2524 = vmatmul.mubr.bf16.gmra.mxu0 %v1309
        %v2525 = vpop.f32.mrf.mxu0
        %v2526 = vadd.f32 0.0, %v2525
        %v2527 = vpop.f32.mrf.mxu0
        %v2528 = vpop.f32.mrf.mxu0
        %v2529 = vadd.f32 0.0, %v2528
        %v2530 = vpop.f32.mrf.mxu0
        %2531 = vmatprep.mubr.bf16.mxu0 %v1314
        %2532 = vmatmul.mubr.bf16.gmra.mxu0 %v1313
        %v2533 = vpop.f32.mrf.mxu0
        %v2534 = vadd.f32 0.0, %v2533
        %v2535 = vpop.f32.mrf.mxu0
        %v2536 = vpop.f32.mrf.mxu0
        %v2537 = vadd.f32 0.0, %v2536
        %v2538 = vpop.f32.mrf.mxu0
        %2539 = vmatprep.mubr.bf16.mxu0 %v1318
        %2540 = vmatmul.mubr.bf16.gmra.mxu0 %v1317
        %v2541 = vpop.f32.mrf.mxu0
        %v2542 = vadd.f32 0.0, %v2541
        %v2543 = vpop.f32.mrf.mxu0
        %v2544 = vpop.f32.mrf.mxu0
        %v2545 = vadd.f32 0.0, %v2544
        %v2546 = vpop.f32.mrf.mxu0
        %2547 = vmatprep.mubr.bf16.mxu0 %v1322
        %2548 = vmatmul.mubr.bf16.gmra.mxu0 %v1321
        %v2549 = vpop.f32.mrf.mxu0
        %v2550 = vadd.f32 0.0, %v2549
        %v2551 = vpop.f32.mrf.mxu0
        %v2552 = vpop.f32.mrf.mxu0
        %v2553 = vadd.f32 0.0, %v2552
        %v2554 = vpop.f32.mrf.mxu0
        %2555 = vmatprep.mubr.bf16.mxu0 %v1326
        %2556 = vmatmul.mubr.bf16.gmra.mxu0 %v1325
        %v2557 = vpop.f32.mrf.mxu0
        %v2558 = vadd.f32 0.0, %v2557
        %v2559 = vpop.f32.mrf.mxu0
        %v2560 = vpop.f32.mrf.mxu0
        %v2561 = vadd.f32 0.0, %v2560
        %v2562 = vpop.f32.mrf.mxu0
        %2563 = vmatprep.mubr.bf16.mxu0 %v1330
        %2564 = vmatmul.mubr.bf16.gmra.mxu0 %v1329
        %v2565 = vpop.f32.mrf.mxu0
        %v2566 = vadd.f32 0.0, %v2565
        %v2567 = vpop.f32.mrf.mxu0
        %v2568 = vpop.f32.mrf.mxu0
        %v2569 = vadd.f32 0.0, %v2568
        %v2570 = vpop.f32.mrf.mxu0
        %2571 = vmatprep.mubr.bf16.mxu0 %v1334
        %2572 = vmatmul.mubr.bf16.gmra.mxu0 %v1333
        %v2573 = vpop.f32.mrf.mxu0
        %v2574 = vadd.f32 0.0, %v2573
        %v2575 = vpop.f32.mrf.mxu0
        %v2576 = vpop.f32.mrf.mxu0
        %v2577 = vadd.f32 0.0, %v2576
        %v2578 = vpop.f32.mrf.mxu0
        %2579 = vmatprep.mubr.bf16.mxu0 %v1338
        %2580 = vmatmul.mubr.bf16.gmra.mxu0 %v1337
        %v2581 = vpop.f32.mrf.mxu0
        %v2582 = vadd.f32 0.0, %v2581
        %v2583 = vpop.f32.mrf.mxu0
        %v2584 = vpop.f32.mrf.mxu0
        %v2585 = vadd.f32 0.0, %v2584
        %v2586 = vpop.f32.mrf.mxu0
        %2587 = vmatprep.mubr.bf16.mxu0 %v1342
        %2588 = vmatmul.mubr.bf16.gmra.mxu0 %v1341
        %v2589 = vpop.f32.mrf.mxu0
        %v2590 = vadd.f32 0.0, %v2589
        %v2591 = vpop.f32.mrf.mxu0
        %v2592 = vpop.f32.mrf.mxu0
        %v2593 = vadd.f32 0.0, %v2592
        %v2594 = vpop.f32.mrf.mxu0
        %2595 = vdwg.mxu0
        %2596 = vmatprep.subr.bf16.mxu0 0
        %2597 = vmatpush1.bf16.msra.mxu0 %v1928
        %2598 = vmatprep.subr.bf16.mxu0 0
        %2599 = vmatpush1.bf16.msra.mxu0 %v1925
        %2600 = vmatprep.subr.bf16.mxu0 0
        %2601 = vmatpush1.bf16.msra.mxu0 %v1922
        %2602 = vmatprep.subr.bf16.mxu0 0
        %2603 = vmatpush1.bf16.msra.mxu0 %v1919
        %2604 = vmatprep.subr.bf16.mxu0 0
        %2605 = vmatpush1.bf16.msra.mxu0 %v1916
        %2606 = vmatprep.subr.bf16.mxu0 0
        %2607 = vmatpush1.bf16.msra.mxu0 %v1913
        %2608 = vmatprep.subr.bf16.mxu0 0
        %2609 = vmatpush1.bf16.msra.mxu0 %v1910
        %2610 = vmatprep.subr.bf16.mxu0 0
        %2611 = vmatpush1.bf16.msra.mxu0 %v1907
        %2612 = vmatprep.subr.bf16.mxu0 0
        %2613 = vmatpush2.bf16.msra.mxu0 %v1952
        %2614 = vmatprep.subr.bf16.mxu0 0
        %2615 = vmatpush2.bf16.msra.mxu0 %v1949
        %2616 = vmatprep.subr.bf16.mxu0 0
        %2617 = vmatpush2.bf16.msra.mxu0 %v1946
        %2618 = vmatprep.subr.bf16.mxu0 0
        %2619 = vmatpush2.bf16.msra.mxu0 %v1943
        %2620 = vmatprep.subr.bf16.mxu0 0
        %2621 = vmatpush2.bf16.msra.mxu0 %v1940
        %2622 = vmatprep.subr.bf16.mxu0 0
        %2623 = vmatpush2.bf16.msra.mxu0 %v1937
        %2624 = vmatprep.subr.bf16.mxu0 0
        %2625 = vmatpush2.bf16.msra.mxu0 %v1934
        %2626 = vmatprep.subr.bf16.mxu0 0
        %2627 = vmatpush2.bf16.msra.mxu0 %v1931
        %2628 = vmatprep.mubr.bf16.mxu0 %v1284
        %2629 = vmatmul.mubr.bf16.gmra.mxu0 %v1283
        %v2630 = vpop.f32.mrf.mxu0
        %v2631 = vadd.f32 %v2470, %v2630
        %v2632 = vpop.f32.mrf.mxu0
        %v2633 = vpop.f32.mrf.mxu0
        %v2634 = vadd.f32 %v2473, %v2633
        %v2635 = vpop.f32.mrf.mxu0
        %2636 = vmatprep.mubr.bf16.mxu0 %v1288
        %2637 = vmatmul.mubr.bf16.gmra.mxu0 %v1287
        %v2638 = vpop.f32.mrf.mxu0
        %v2639 = vadd.f32 %v2478, %v2638
        %v2640 = vpop.f32.mrf.mxu0
        %v2641 = vpop.f32.mrf.mxu0
        %v2642 = vadd.f32 %v2481, %v2641
        %v2643 = vpop.f32.mrf.mxu0
        %2644 = vmatprep.mubr.bf16.mxu0 %v1292
        %2645 = vmatmul.mubr.bf16.gmra.mxu0 %v1291
        %v2646 = vpop.f32.mrf.mxu0
        %v2647 = vadd.f32 %v2486, %v2646
        %v2648 = vpop.f32.mrf.mxu0
        %v2649 = vpop.f32.mrf.mxu0
        %v2650 = vadd.f32 %v2489, %v2649
        %v2651 = vpop.f32.mrf.mxu0
        %2652 = vmatprep.mubr.bf16.mxu0 %v1296
        %2653 = vmatmul.mubr.bf16.gmra.mxu0 %v1295
        %v2654 = vpop.f32.mrf.mxu0
        %v2655 = vadd.f32 %v2494, %v2654
        %v2656 = vpop.f32.mrf.mxu0
        %v2657 = vpop.f32.mrf.mxu0
        %v2658 = vadd.f32 %v2497, %v2657
        %v2659 = vpop.f32.mrf.mxu0
        %2660 = vmatprep.mubr.bf16.mxu0 %v1300
        %2661 = vmatmul.mubr.bf16.gmra.mxu0 %v1299
        %v2662 = vpop.f32.mrf.mxu0
        %v2663 = vadd.f32 %v2502, %v2662
        %v2664 = vpop.f32.mrf.mxu0
        %v2665 = vpop.f32.mrf.mxu0
        %v2666 = vadd.f32 %v2505, %v2665
        %v2667 = vpop.f32.mrf.mxu0
        %2668 = vmatprep.mubr.bf16.mxu0 %v1304
        %2669 = vmatmul.mubr.bf16.gmra.mxu0 %v1303
        %v2670 = vpop.f32.mrf.mxu0
        %v2671 = vadd.f32 %v2510, %v2670
        %v2672 = vpop.f32.mrf.mxu0
        %v2673 = vpop.f32.mrf.mxu0
        %v2674 = vadd.f32 %v2513, %v2673
        %v2675 = vpop.f32.mrf.mxu0
        %2676 = vmatprep.mubr.bf16.mxu0 %v1308
        %2677 = vmatmul.mubr.bf16.gmra.mxu0 %v1307
        %v2678 = vpop.f32.mrf.mxu0
        %v2679 = vadd.f32 %v2518, %v2678
        %v2680 = vpop.f32.mrf.mxu0
        %v2681 = vpop.f32.mrf.mxu0
        %v2682 = vadd.f32 %v2521, %v2681
        %v2683 = vpop.f32.mrf.mxu0
        %2684 = vmatprep.mubr.bf16.mxu0 %v1312
        %2685 = vmatmul.mubr.bf16.gmra.mxu0 %v1311
        %v2686 = vpop.f32.mrf.mxu0
        %v2687 = vadd.f32 %v2526, %v2686
        %v2688 = vpop.f32.mrf.mxu0
        %v2689 = vpop.f32.mrf.mxu0
        %v2690 = vadd.f32 %v2529, %v2689
        %v2691 = vpop.f32.mrf.mxu0
        %2692 = vmatprep.mubr.bf16.mxu0 %v1316
        %2693 = vmatmul.mubr.bf16.gmra.mxu0 %v1315
        %v2694 = vpop.f32.mrf.mxu0
        %v2695 = vadd.f32 %v2534, %v2694
        %v2696 = vpop.f32.mrf.mxu0
        %v2697 = vpop.f32.mrf.mxu0
        %v2698 = vadd.f32 %v2537, %v2697
        %v2699 = vpop.f32.mrf.mxu0
        %2700 = vmatprep.mubr.bf16.mxu0 %v1320
        %2701 = vmatmul.mubr.bf16.gmra.mxu0 %v1319
        %v2702 = vpop.f32.mrf.mxu0
        %v2703 = vadd.f32 %v2542, %v2702
        %v2704 = vpop.f32.mrf.mxu0
        %v2705 = vpop.f32.mrf.mxu0
        %v2706 = vadd.f32 %v2545, %v2705
        %v2707 = vpop.f32.mrf.mxu0
        %2708 = vmatprep.mubr.bf16.mxu0 %v1324
        %2709 = vmatmul.mubr.bf16.gmra.mxu0 %v1323
        %v2710 = vpop.f32.mrf.mxu0
        %v2711 = vadd.f32 %v2550, %v2710
        %v2712 = vpop.f32.mrf.mxu0
        %v2713 = vpop.f32.mrf.mxu0
        %v2714 = vadd.f32 %v2553, %v2713
        %v2715 = vpop.f32.mrf.mxu0
        %2716 = vmatprep.mubr.bf16.mxu0 %v1328
        %2717 = vmatmul.mubr.bf16.gmra.mxu0 %v1327
        %v2718 = vpop.f32.mrf.mxu0
        %v2719 = vadd.f32 %v2558, %v2718
        %v2720 = vpop.f32.mrf.mxu0
        %v2721 = vpop.f32.mrf.mxu0
        %v2722 = vadd.f32 %v2561, %v2721
        %v2723 = vpop.f32.mrf.mxu0
        %2724 = vmatprep.mubr.bf16.mxu0 %v1332
        %2725 = vmatmul.mubr.bf16.gmra.mxu0 %v1331
        %v2726 = vpop.f32.mrf.mxu0
        %v2727 = vadd.f32 %v2566, %v2726
        %v2728 = vpop.f32.mrf.mxu0
        %v2729 = vpop.f32.mrf.mxu0
        %v2730 = vadd.f32 %v2569, %v2729
        %v2731 = vpop.f32.mrf.mxu0
        %2732 = vmatprep.mubr.bf16.mxu0 %v1336
        %2733 = vmatmul.mubr.bf16.gmra.mxu0 %v1335
        %v2734 = vpop.f32.mrf.mxu0
        %v2735 = vadd.f32 %v2574, %v2734
        %v2736 = vpop.f32.mrf.mxu0
        %v2737 = vpop.f32.mrf.mxu0
        %v2738 = vadd.f32 %v2577, %v2737
        %v2739 = vpop.f32.mrf.mxu0
        %2740 = vmatprep.mubr.bf16.mxu0 %v1340
        %2741 = vmatmul.mubr.bf16.gmra.mxu0 %v1339
        %v2742 = vpop.f32.mrf.mxu0
        %v2743 = vadd.f32 %v2582, %v2742
        %v2744 = vpop.f32.mrf.mxu0
        %v2745 = vpop.f32.mrf.mxu0
        %v2746 = vadd.f32 %v2585, %v2745
        %v2747 = vpop.f32.mrf.mxu0
        %2748 = vmatprep.mubr.bf16.mxu0 %v1344
        %2749 = vmatmul.mubr.bf16.gmra.mxu0 %v1343
        %v2750 = vpop.f32.mrf.mxu0
        %v2751 = vadd.f32 %v2590, %v2750
        %v2752 = vpop.f32.mrf.mxu0
        %v2753 = vpop.f32.mrf.mxu0
        %v2754 = vadd.f32 %v2593, %v2753
        %v2755 = vpop.f32.mrf.mxu0
        %2756 = vdwg.mxu0
        %v2757 = vmul.f32 %v2277, %v1345
        %v2758 = vmul.f32 %v2281, %v1346
        %v2759 = vmul.f32 %v2287, %v1347
        %v2760 = vmul.f32 %v2291, %v1348
        %v2761 = vmul.f32 %v2297, %v1349
        %v2762 = vmul.f32 %v2301, %v1350
        %v2763 = vmul.f32 %v2307, %v1351
        %v2764 = vmul.f32 %v2311, %v1352
        %v2765 = vmul.f32 %v2317, %v1353
        %v2766 = vmul.f32 %v2321, %v1354
        %v2767 = vmul.f32 %v2327, %v1355
        %v2768 = vmul.f32 %v2331, %v1356
        %v2769 = vmul.f32 %v2337, %v1357
        %v2770 = vmul.f32 %v2341, %v1358
        %v2771 = vmul.f32 %v2347, %v1359
        %v2772 = vmul.f32 %v2351, %v1360
        %v2773 = vmul.f32 %v2357, %v1361
        %v2774 = vmul.f32 %v2361, %v1362
        %v2775 = vmul.f32 %v2367, %v1363
        %v2776 = vmul.f32 %v2371, %v1364
        %v2777 = vmul.f32 %v2377, %v1365
        %v2778 = vmul.f32 %v2381, %v1366
        %v2779 = vmul.f32 %v2387, %v1367
        %v2780 = vmul.f32 %v2391, %v1368
        %v2781 = vmul.f32 %v2397, %v1369
        %v2782 = vmul.f32 %v2401, %v1370
        %v2783 = vmul.f32 %v2407, %v1371
        %v2784 = vmul.f32 %v2411, %v1372
        %v2785 = vmul.f32 %v2417, %v1373
        %v2786 = vmul.f32 %v2421, %v1374
        %v2787 = vmul.f32 %v2427, %v1375
        %v2788 = vmul.f32 %v2431, %v1376
        %2789 = vrot.lane.b32.xlu0 %v2277, 64
        %v2790 = vpop.permute.xlu0 %2789
        %2791 = vrot.lane.b32.xlu0 %v2281, 64
        %v2792 = vpop.permute.xlu0 %2791
        %2793 = vrot.lane.b32.xlu0 %v2287, 64
        %v2794 = vpop.permute.xlu0 %2793
        %2795 = vrot.lane.b32.xlu0 %v2291, 64
        %v2796 = vpop.permute.xlu0 %2795
        %2797 = vrot.lane.b32.xlu0 %v2297, 64
        %v2798 = vpop.permute.xlu0 %2797
        %2799 = vrot.lane.b32.xlu0 %v2301, 64
        %v2800 = vpop.permute.xlu0 %2799
        %2801 = vrot.lane.b32.xlu0 %v2307, 64
        %v2802 = vpop.permute.xlu0 %2801
        %2803 = vrot.lane.b32.xlu0 %v2311, 64
        %v2804 = vpop.permute.xlu0 %2803
        %2805 = vrot.lane.b32.xlu0 %v2317, 64
        %v2806 = vpop.permute.xlu0 %2805
        %2807 = vrot.lane.b32.xlu0 %v2321, 64
        %v2808 = vpop.permute.xlu0 %2807
        %2809 = vrot.lane.b32.xlu0 %v2327, 64
        %v2810 = vpop.permute.xlu0 %2809
        %2811 = vrot.lane.b32.xlu0 %v2331, 64
        %v2812 = vpop.permute.xlu0 %2811
        %2813 = vrot.lane.b32.xlu0 %v2337, 64
        %v2814 = vpop.permute.xlu0 %2813
        %2815 = vrot.lane.b32.xlu0 %v2341, 64
        %v2816 = vpop.permute.xlu0 %2815
        %2817 = vrot.lane.b32.xlu0 %v2347, 64
        %v2818 = vpop.permute.xlu0 %2817
        %2819 = vrot.lane.b32.xlu0 %v2351, 64
        %v2820 = vpop.permute.xlu0 %2819
        %2821 = vrot.lane.b32.xlu0 %v2357, 64
        %v2822 = vpop.permute.xlu0 %2821
        %2823 = vrot.lane.b32.xlu0 %v2361, 64
        %v2824 = vpop.permute.xlu0 %2823
        %2825 = vrot.lane.b32.xlu0 %v2367, 64
        %v2826 = vpop.permute.xlu0 %2825
        %2827 = vrot.lane.b32.xlu0 %v2371, 64
        %v2828 = vpop.permute.xlu0 %2827
        %2829 = vrot.lane.b32.xlu0 %v2377, 64
        %v2830 = vpop.permute.xlu0 %2829
        %2831 = vrot.lane.b32.xlu0 %v2381, 64
        %v2832 = vpop.permute.xlu0 %2831
        %2833 = vrot.lane.b32.xlu0 %v2387, 64
        %v2834 = vpop.permute.xlu0 %2833
        %2835 = vrot.lane.b32.xlu0 %v2391, 64
        %v2836 = vpop.permute.xlu0 %2835
        %2837 = vrot.lane.b32.xlu0 %v2397, 64
        %v2838 = vpop.permute.xlu0 %2837
        %2839 = vrot.lane.b32.xlu0 %v2401, 64
        %v2840 = vpop.permute.xlu0 %2839
        %2841 = vrot.lane.b32.xlu0 %v2407, 64
        %v2842 = vpop.permute.xlu0 %2841
        %2843 = vrot.lane.b32.xlu0 %v2411, 64
        %v2844 = vpop.permute.xlu0 %2843
        %2845 = vrot.lane.b32.xlu0 %v2417, 64
        %v2846 = vpop.permute.xlu0 %2845
        %2847 = vrot.lane.b32.xlu0 %v2421, 64
        %v2848 = vpop.permute.xlu0 %2847
        %2849 = vrot.lane.b32.xlu0 %v2427, 64
        %v2850 = vpop.permute.xlu0 %2849
        %2851 = vrot.lane.b32.xlu0 %v2431, 64
        %v2852 = vpop.permute.xlu0 %2851
        %v2853 = vmul.f32 %v2790, %v1377
        %v2854 = vmul.f32 %v2792, %v1378
        %v2855 = vmul.f32 %v2794, %v1379
        %v2856 = vmul.f32 %v2796, %v1380
        %v2857 = vmul.f32 %v2798, %v1381
        %v2858 = vmul.f32 %v2800, %v1382
        %v2859 = vmul.f32 %v2802, %v1383
        %v2860 = vmul.f32 %v2804, %v1384
        %v2861 = vmul.f32 %v2806, %v1385
        %v2862 = vmul.f32 %v2808, %v1386
        %v2863 = vmul.f32 %v2810, %v1387
        %v2864 = vmul.f32 %v2812, %v1388
        %v2865 = vmul.f32 %v2814, %v1389
        %v2866 = vmul.f32 %v2816, %v1390
        %v2867 = vmul.f32 %v2818, %v1391
        %v2868 = vmul.f32 %v2820, %v1392
        %v2869 = vmul.f32 %v2822, %v1393
        %v2870 = vmul.f32 %v2824, %v1394
        %v2871 = vmul.f32 %v2826, %v1395
        %v2872 = vmul.f32 %v2828, %v1396
        %v2873 = vmul.f32 %v2830, %v1397
        %v2874 = vmul.f32 %v2832, %v1398
        %v2875 = vmul.f32 %v2834, %v1399
        %v2876 = vmul.f32 %v2836, %v1400
        %v2877 = vmul.f32 %v2838, %v1401
        %v2878 = vmul.f32 %v2840, %v1402
        %v2879 = vmul.f32 %v2842, %v1403
        %v2880 = vmul.f32 %v2844, %v1404
        %v2881 = vmul.f32 %v2846, %v1405
        %v2882 = vmul.f32 %v2848, %v1406
        %v2883 = vmul.f32 %v2850, %v1407
        %v2884 = vmul.f32 %v2852, %v1408
        %v2885 = vadd.f32 %v2757, %v2853
        %v2886 = vadd.f32 %v2758, %v2854
        %v2887 = vadd.f32 %v2759, %v2855
        %v2888 = vadd.f32 %v2760, %v2856
        %v2889 = vadd.f32 %v2761, %v2857
        %v2890 = vadd.f32 %v2762, %v2858
        %v2891 = vadd.f32 %v2763, %v2859
        %v2892 = vadd.f32 %v2764, %v2860
        %v2893 = vadd.f32 %v2765, %v2861
        %v2894 = vadd.f32 %v2766, %v2862
        %v2895 = vadd.f32 %v2767, %v2863
        %v2896 = vadd.f32 %v2768, %v2864
        %v2897 = vadd.f32 %v2769, %v2865
        %v2898 = vadd.f32 %v2770, %v2866
        %v2899 = vadd.f32 %v2771, %v2867
        %v2900 = vadd.f32 %v2772, %v2868
        %v2901 = vadd.f32 %v2773, %v2869
        %v2902 = vadd.f32 %v2774, %v2870
        %v2903 = vadd.f32 %v2775, %v2871
        %v2904 = vadd.f32 %v2776, %v2872
        %v2905 = vadd.f32 %v2777, %v2873
        %v2906 = vadd.f32 %v2778, %v2874
        %v2907 = vadd.f32 %v2779, %v2875
        %v2908 = vadd.f32 %v2780, %v2876
        %v2909 = vadd.f32 %v2781, %v2877
        %v2910 = vadd.f32 %v2782, %v2878
        %v2911 = vadd.f32 %v2783, %v2879
        %v2912 = vadd.f32 %v2784, %v2880
        %v2913 = vadd.f32 %v2785, %v2881
        %v2914 = vadd.f32 %v2786, %v2882
        %v2915 = vadd.f32 %v2787, %v2883
        %v2916 = vadd.f32 %v2788, %v2884
        %v2917 = vpack.c.bf16 %v2886, %v2885
        %v2918 = vpack.c.bf16 %v2888, %v2887
        %v2919 = vpack.c.bf16 %v2890, %v2889
        %v2920 = vpack.c.bf16 %v2892, %v2891
        %v2921 = vpack.c.bf16 %v2894, %v2893
        %v2922 = vpack.c.bf16 %v2896, %v2895
        %v2923 = vpack.c.bf16 %v2898, %v2897
        %v2924 = vpack.c.bf16 %v2900, %v2899
        %v2925 = vpack.c.bf16 %v2902, %v2901
        %v2926 = vpack.c.bf16 %v2904, %v2903
        %v2927 = vpack.c.bf16 %v2906, %v2905
        %v2928 = vpack.c.bf16 %v2908, %v2907
        %v2929 = vpack.c.bf16 %v2910, %v2909
        %v2930 = vpack.c.bf16 %v2912, %v2911
        %v2931 = vpack.c.bf16 %v2914, %v2913
        %v2932 = vpack.c.bf16 %v2916, %v2915
        %v2949 = vunpack.c.l.b16 %v2917
        %v2950 = vunpack.c.h.b16 %v2917
        %v2951 = vunpack.c.l.b16 %v2918
        %v2952 = vunpack.c.h.b16 %v2918
        %v2953 = vunpack.c.l.b16 %v2919
        %v2954 = vunpack.c.h.b16 %v2919
        %v2955 = vunpack.c.l.b16 %v2920
        %v2956 = vunpack.c.h.b16 %v2920
        %v2957 = vunpack.c.l.b16 %v2921
        %v2958 = vunpack.c.h.b16 %v2921
        %v2959 = vunpack.c.l.b16 %v2922
        %v2960 = vunpack.c.h.b16 %v2922
        %v2961 = vunpack.c.l.b16 %v2923
        %v2962 = vunpack.c.h.b16 %v2923
        %v2963 = vunpack.c.l.b16 %v2924
        %v2964 = vunpack.c.h.b16 %v2924
        %v2965 = vunpack.c.l.b16 %v2925
        %v2966 = vunpack.c.h.b16 %v2925
        %v2967 = vunpack.c.l.b16 %v2926
        %v2968 = vunpack.c.h.b16 %v2926
        %v2969 = vunpack.c.l.b16 %v2927
        %v2970 = vunpack.c.h.b16 %v2927
        %v2971 = vunpack.c.l.b16 %v2928
        %v2972 = vunpack.c.h.b16 %v2928
        %v2973 = vunpack.c.l.b16 %v2929
        %v2974 = vunpack.c.h.b16 %v2929
        %v2975 = vunpack.c.l.b16 %v2930
        %v2976 = vunpack.c.h.b16 %v2930
        %v2977 = vunpack.c.l.b16 %v2931
        %v2978 = vunpack.c.h.b16 %v2931
        %v2979 = vunpack.c.l.b16 %v2932
        %v2980 = vunpack.c.h.b16 %v2932
        %v2981 = vpack.c.b16 %v2949, %v2949
        %v2982 = vpack.c.b16 %v2950, %v2950
        %v2983 = vpack.c.b16 %v2951, %v2951
        %v2984 = vpack.c.b16 %v2952, %v2952
        %v2985 = vpack.c.b16 %v2953, %v2953
        %v2986 = vpack.c.b16 %v2954, %v2954
        %v2987 = vpack.c.b16 %v2955, %v2955
        %v2988 = vpack.c.b16 %v2956, %v2956
        %v2989 = vpack.c.b16 %v2957, %v2957
        %v2990 = vpack.c.b16 %v2958, %v2958
        %v2991 = vpack.c.b16 %v2959, %v2959
        %v2992 = vpack.c.b16 %v2960, %v2960
        %v2993 = vpack.c.b16 %v2961, %v2961
        %v2994 = vpack.c.b16 %v2962, %v2962
        %v2995 = vpack.c.b16 %v2963, %v2963
        %v2996 = vpack.c.b16 %v2964, %v2964
        %v2997 = vpack.c.b16 %v2965, %v2965
        %v2998 = vpack.c.b16 %v2966, %v2966
        %v2999 = vpack.c.b16 %v2967, %v2967
        %v3000 = vpack.c.b16 %v2968, %v2968
        %v3001 = vpack.c.b16 %v2969, %v2969
        %v3002 = vpack.c.b16 %v2970, %v2970
        %v3003 = vpack.c.b16 %v2971, %v2971
        %v3004 = vpack.c.b16 %v2972, %v2972
        %v3005 = vpack.c.b16 %v2973, %v2973
        %v3006 = vpack.c.b16 %v2974, %v2974
        %v3007 = vpack.c.b16 %v2975, %v2975
        %v3008 = vpack.c.b16 %v2976, %v2976
        %v3009 = vpack.c.b16 %v2977, %v2977
        %v3010 = vpack.c.b16 %v2978, %v2978
        %v3011 = vpack.c.b16 %v2979, %v2979
        %v3012 = vpack.c.b16 %v2980, %v2980
        %3045 = vst [vmem:[%s464] sm:$0xf] %v2981
        %3046 = vst [vmem:[%s464 + $0x4] sm:$0xf] %v2982
        %3047 = vst [vmem:[%s464 + $0x8] sm:$0xf] %v2983
        %3048 = vst [vmem:[%s464 + $0xc] sm:$0xf] %v2984
        %3049 = vst [vmem:[%s464 + $0x10] sm:$0xf] %v2985
        %3050 = vst [vmem:[%s464 + $0x14] sm:$0xf] %v2986
        %3051 = vst [vmem:[%s464 + $0x18] sm:$0xf] %v2987
        %3052 = vst [vmem:[%s464 + $0x1c] sm:$0xf] %v2988
        %3053 = vst [vmem:[%s464 + $0x20] sm:$0xf] %v2989
        %3054 = vst [vmem:[%s464 + $0x24] sm:$0xf] %v2990
        %3055 = vst [vmem:[%s464 + $0x28] sm:$0xf] %v2991
        %3056 = vst [vmem:[%s464 + $0x2c] sm:$0xf] %v2992
        %3057 = vst [vmem:[%s464 + $0x30] sm:$0xf] %v2993
        %3058 = vst [vmem:[%s464 + $0x34] sm:$0xf] %v2994
        %3059 = vst [vmem:[%s464 + $0x38] sm:$0xf] %v2995
        %3060 = vst [vmem:[%s464 + $0x3c] sm:$0xf] %v2996
        %3061 = vst [vmem:[%s464 + $0x40] sm:$0xf] %v2997
        %3062 = vst [vmem:[%s464 + $0x44] sm:$0xf] %v2998
        %3063 = vst [vmem:[%s464 + $0x48] sm:$0xf] %v2999
        %3064 = vst [vmem:[%s464 + $0x4c] sm:$0xf] %v3000
        %3065 = vst [vmem:[%s464 + $0x50] sm:$0xf] %v3001
        %3066 = vst [vmem:[%s464 + $0x54] sm:$0xf] %v3002
        %3067 = vst [vmem:[%s464 + $0x58] sm:$0xf] %v3003
        %3068 = vst [vmem:[%s464 + $0x5c] sm:$0xf] %v3004
        %3069 = vst [vmem:[%s464 + $0x60] sm:$0xf] %v3005
        %3070 = vst [vmem:[%s464 + $0x64] sm:$0xf] %v3006
        %3071 = vst [vmem:[%s464 + $0x68] sm:$0xf] %v3007
        %3072 = vst [vmem:[%s464 + $0x6c] sm:$0xf] %v3008
        %3073 = vst [vmem:[%s464 + $0x70] sm:$0xf] %v3009
        %3074 = vst [vmem:[%s464 + $0x74] sm:$0xf] %v3010
        %3075 = vst [vmem:[%s464 + $0x78] sm:$0xf] %v3011
        %3076 = vst [vmem:[%s464 + $0x7c] sm:$0xf] %v3012
        %v3077 = vmul.f32 %v2279, %v1345
        %v3078 = vmul.f32 %v2283, %v1346
        %v3079 = vmul.f32 %v2289, %v1347
        %v3080 = vmul.f32 %v2293, %v1348
        %v3081 = vmul.f32 %v2299, %v1349
        %v3082 = vmul.f32 %v2303, %v1350
        %v3083 = vmul.f32 %v2309, %v1351
        %v3084 = vmul.f32 %v2313, %v1352
        %v3085 = vmul.f32 %v2319, %v1353
        %v3086 = vmul.f32 %v2323, %v1354
        %v3087 = vmul.f32 %v2329, %v1355
        %v3088 = vmul.f32 %v2333, %v1356
        %v3089 = vmul.f32 %v2339, %v1357
        %v3090 = vmul.f32 %v2343, %v1358
        %v3091 = vmul.f32 %v2349, %v1359
        %v3092 = vmul.f32 %v2353, %v1360
        %v3093 = vmul.f32 %v2359, %v1361
        %v3094 = vmul.f32 %v2363, %v1362
        %v3095 = vmul.f32 %v2369, %v1363
        %v3096 = vmul.f32 %v2373, %v1364
        %v3097 = vmul.f32 %v2379, %v1365
        %v3098 = vmul.f32 %v2383, %v1366
        %v3099 = vmul.f32 %v2389, %v1367
        %v3100 = vmul.f32 %v2393, %v1368
        %v3101 = vmul.f32 %v2399, %v1369
        %v3102 = vmul.f32 %v2403, %v1370
        %v3103 = vmul.f32 %v2409, %v1371
        %v3104 = vmul.f32 %v2413, %v1372
        %v3105 = vmul.f32 %v2419, %v1373
        %v3106 = vmul.f32 %v2423, %v1374
        %v3107 = vmul.f32 %v2429, %v1375
        %v3108 = vmul.f32 %v2433, %v1376
        %3109 = vrot.lane.b32.xlu0 %v2279, 64
        %v3110 = vpop.permute.xlu0 %3109
        %3111 = vrot.lane.b32.xlu0 %v2283, 64
        %v3112 = vpop.permute.xlu0 %3111
        %3113 = vrot.lane.b32.xlu0 %v2289, 64
        %v3114 = vpop.permute.xlu0 %3113
        %3115 = vrot.lane.b32.xlu0 %v2293, 64
        %v3116 = vpop.permute.xlu0 %3115
        %3117 = vrot.lane.b32.xlu0 %v2299, 64
        %v3118 = vpop.permute.xlu0 %3117
        %3119 = vrot.lane.b32.xlu0 %v2303, 64
        %v3120 = vpop.permute.xlu0 %3119
        %3121 = vrot.lane.b32.xlu0 %v2309, 64
        %v3122 = vpop.permute.xlu0 %3121
        %3123 = vrot.lane.b32.xlu0 %v2313, 64
        %v3124 = vpop.permute.xlu0 %3123
        %3125 = vrot.lane.b32.xlu0 %v2319, 64
        %v3126 = vpop.permute.xlu0 %3125
        %3127 = vrot.lane.b32.xlu0 %v2323, 64
        %v3128 = vpop.permute.xlu0 %3127
        %3129 = vrot.lane.b32.xlu0 %v2329, 64
        %v3130 = vpop.permute.xlu0 %3129
        %3131 = vrot.lane.b32.xlu0 %v2333, 64
        %v3132 = vpop.permute.xlu0 %3131
        %3133 = vrot.lane.b32.xlu0 %v2339, 64
        %v3134 = vpop.permute.xlu0 %3133
        %3135 = vrot.lane.b32.xlu0 %v2343, 64
        %v3136 = vpop.permute.xlu0 %3135
        %3137 = vrot.lane.b32.xlu0 %v2349, 64
        %v3138 = vpop.permute.xlu0 %3137
        %3139 = vrot.lane.b32.xlu0 %v2353, 64
        %v3140 = vpop.permute.xlu0 %3139
        %3141 = vrot.lane.b32.xlu0 %v2359, 64
        %v3142 = vpop.permute.xlu0 %3141
        %3143 = vrot.lane.b32.xlu0 %v2363, 64
        %v3144 = vpop.permute.xlu0 %3143
        %3145 = vrot.lane.b32.xlu0 %v2369, 64
        %v3146 = vpop.permute.xlu0 %3145
        %3147 = vrot.lane.b32.xlu0 %v2373, 64
        %v3148 = vpop.permute.xlu0 %3147
        %3149 = vrot.lane.b32.xlu0 %v2379, 64
        %v3150 = vpop.permute.xlu0 %3149
        %3151 = vrot.lane.b32.xlu0 %v2383, 64
        %v3152 = vpop.permute.xlu0 %3151
        %3153 = vrot.lane.b32.xlu0 %v2389, 64
        %v3154 = vpop.permute.xlu0 %3153
        %3155 = vrot.lane.b32.xlu0 %v2393, 64
        %v3156 = vpop.permute.xlu0 %3155
        %3157 = vrot.lane.b32.xlu0 %v2399, 64
        %v3158 = vpop.permute.xlu0 %3157
        %3159 = vrot.lane.b32.xlu0 %v2403, 64
        %v3160 = vpop.permute.xlu0 %3159
        %3161 = vrot.lane.b32.xlu0 %v2409, 64
        %v3162 = vpop.permute.xlu0 %3161
        %3163 = vrot.lane.b32.xlu0 %v2413, 64
        %v3164 = vpop.permute.xlu0 %3163
        %3165 = vrot.lane.b32.xlu0 %v2419, 64
        %v3166 = vpop.permute.xlu0 %3165
        %3167 = vrot.lane.b32.xlu0 %v2423, 64
        %v3168 = vpop.permute.xlu0 %3167
        %3169 = vrot.lane.b32.xlu0 %v2429, 64
        %v3170 = vpop.permute.xlu0 %3169
        %3171 = vrot.lane.b32.xlu0 %v2433, 64
        %v3172 = vpop.permute.xlu0 %3171
        %v3173 = vmul.f32 %v3110, %v1377
        %v3174 = vmul.f32 %v3112, %v1378
        %v3175 = vmul.f32 %v3114, %v1379
        %v3176 = vmul.f32 %v3116, %v1380
        %v3177 = vmul.f32 %v3118, %v1381
        %v3178 = vmul.f32 %v3120, %v1382
        %v3179 = vmul.f32 %v3122, %v1383
        %v3180 = vmul.f32 %v3124, %v1384
        %v3181 = vmul.f32 %v3126, %v1385
        %v3182 = vmul.f32 %v3128, %v1386
        %v3183 = vmul.f32 %v3130, %v1387
        %v3184 = vmul.f32 %v3132, %v1388
        %v3185 = vmul.f32 %v3134, %v1389
        %v3186 = vmul.f32 %v3136, %v1390
        %v3187 = vmul.f32 %v3138, %v1391
        %v3188 = vmul.f32 %v3140, %v1392
        %v3189 = vmul.f32 %v3142, %v1393
        %v3190 = vmul.f32 %v3144, %v1394
        %v3191 = vmul.f32 %v3146, %v1395
        %v3192 = vmul.f32 %v3148, %v1396
        %v3193 = vmul.f32 %v3150, %v1397
        %v3194 = vmul.f32 %v3152, %v1398
        %v3195 = vmul.f32 %v3154, %v1399
        %v3196 = vmul.f32 %v3156, %v1400
        %v3197 = vmul.f32 %v3158, %v1401
        %v3198 = vmul.f32 %v3160, %v1402
        %v3199 = vmul.f32 %v3162, %v1403
        %v3200 = vmul.f32 %v3164, %v1404
        %v3201 = vmul.f32 %v3166, %v1405
        %v3202 = vmul.f32 %v3168, %v1406
        %v3203 = vmul.f32 %v3170, %v1407
        %v3204 = vmul.f32 %v3172, %v1408
        %v3205 = vadd.f32 %v3077, %v3173
        %v3206 = vadd.f32 %v3078, %v3174
        %v3207 = vadd.f32 %v3079, %v3175
        %v3208 = vadd.f32 %v3080, %v3176
        %v3209 = vadd.f32 %v3081, %v3177
        %v3210 = vadd.f32 %v3082, %v3178
        %v3211 = vadd.f32 %v3083, %v3179
        %v3212 = vadd.f32 %v3084, %v3180
        %v3213 = vadd.f32 %v3085, %v3181
        %v3214 = vadd.f32 %v3086, %v3182
        %v3215 = vadd.f32 %v3087, %v3183
        %v3216 = vadd.f32 %v3088, %v3184
        %v3217 = vadd.f32 %v3089, %v3185
        %v3218 = vadd.f32 %v3090, %v3186
        %v3219 = vadd.f32 %v3091, %v3187
        %v3220 = vadd.f32 %v3092, %v3188
        %v3221 = vadd.f32 %v3093, %v3189
        %v3222 = vadd.f32 %v3094, %v3190
        %v3223 = vadd.f32 %v3095, %v3191
        %v3224 = vadd.f32 %v3096, %v3192
        %v3225 = vadd.f32 %v3097, %v3193
        %v3226 = vadd.f32 %v3098, %v3194
        %v3227 = vadd.f32 %v3099, %v3195
        %v3228 = vadd.f32 %v3100, %v3196
        %v3229 = vadd.f32 %v3101, %v3197
        %v3230 = vadd.f32 %v3102, %v3198
        %v3231 = vadd.f32 %v3103, %v3199
        %v3232 = vadd.f32 %v3104, %v3200
        %v3233 = vadd.f32 %v3105, %v3201
        %v3234 = vadd.f32 %v3106, %v3202
        %v3235 = vadd.f32 %v3107, %v3203
        %v3236 = vadd.f32 %v3108, %v3204
        %v3237 = vpack.c.bf16 %v3206, %v3205
        %v3238 = vpack.c.bf16 %v3208, %v3207
        %v3239 = vpack.c.bf16 %v3210, %v3209
        %v3240 = vpack.c.bf16 %v3212, %v3211
        %v3241 = vpack.c.bf16 %v3214, %v3213
        %v3242 = vpack.c.bf16 %v3216, %v3215
        %v3243 = vpack.c.bf16 %v3218, %v3217
        %v3244 = vpack.c.bf16 %v3220, %v3219
        %v3245 = vpack.c.bf16 %v3222, %v3221
        %v3246 = vpack.c.bf16 %v3224, %v3223
        %v3247 = vpack.c.bf16 %v3226, %v3225
        %v3248 = vpack.c.bf16 %v3228, %v3227
        %v3249 = vpack.c.bf16 %v3230, %v3229
        %v3250 = vpack.c.bf16 %v3232, %v3231
        %v3251 = vpack.c.bf16 %v3234, %v3233
        %v3252 = vpack.c.bf16 %v3236, %v3235
        %v3269 = vunpack.c.l.b16 %v3237
        %v3270 = vunpack.c.h.b16 %v3237
        %v3271 = vunpack.c.l.b16 %v3238
        %v3272 = vunpack.c.h.b16 %v3238
        %v3273 = vunpack.c.l.b16 %v3239
        %v3274 = vunpack.c.h.b16 %v3239
        %v3275 = vunpack.c.l.b16 %v3240
        %v3276 = vunpack.c.h.b16 %v3240
        %v3277 = vunpack.c.l.b16 %v3241
        %v3278 = vunpack.c.h.b16 %v3241
        %v3279 = vunpack.c.l.b16 %v3242
        %v3280 = vunpack.c.h.b16 %v3242
        %v3281 = vunpack.c.l.b16 %v3243
        %v3282 = vunpack.c.h.b16 %v3243
        %v3283 = vunpack.c.l.b16 %v3244
        %v3284 = vunpack.c.h.b16 %v3244
        %v3285 = vunpack.c.l.b16 %v3245
        %v3286 = vunpack.c.h.b16 %v3245
        %v3287 = vunpack.c.l.b16 %v3246
        %v3288 = vunpack.c.h.b16 %v3246
        %v3289 = vunpack.c.l.b16 %v3247
        %v3290 = vunpack.c.h.b16 %v3247
        %v3291 = vunpack.c.l.b16 %v3248
        %v3292 = vunpack.c.h.b16 %v3248
        %v3293 = vunpack.c.l.b16 %v3249
        %v3294 = vunpack.c.h.b16 %v3249
        %v3295 = vunpack.c.l.b16 %v3250
        %v3296 = vunpack.c.h.b16 %v3250
        %v3297 = vunpack.c.l.b16 %v3251
        %v3298 = vunpack.c.h.b16 %v3251
        %v3299 = vunpack.c.l.b16 %v3252
        %v3300 = vunpack.c.h.b16 %v3252
        %v3301 = vpack.c.b16 %v3269, %v3269
        %v3302 = vpack.c.b16 %v3270, %v3270
        %v3303 = vpack.c.b16 %v3271, %v3271
        %v3304 = vpack.c.b16 %v3272, %v3272
        %v3305 = vpack.c.b16 %v3273, %v3273
        %v3306 = vpack.c.b16 %v3274, %v3274
        %v3307 = vpack.c.b16 %v3275, %v3275
        %v3308 = vpack.c.b16 %v3276, %v3276
        %v3309 = vpack.c.b16 %v3277, %v3277
        %v3310 = vpack.c.b16 %v3278, %v3278
        %v3311 = vpack.c.b16 %v3279, %v3279
        %v3312 = vpack.c.b16 %v3280, %v3280
        %v3313 = vpack.c.b16 %v3281, %v3281
        %v3314 = vpack.c.b16 %v3282, %v3282
        %v3315 = vpack.c.b16 %v3283, %v3283
        %v3316 = vpack.c.b16 %v3284, %v3284
        %v3317 = vpack.c.b16 %v3285, %v3285
        %v3318 = vpack.c.b16 %v3286, %v3286
        %v3319 = vpack.c.b16 %v3287, %v3287
        %v3320 = vpack.c.b16 %v3288, %v3288
        %v3321 = vpack.c.b16 %v3289, %v3289
        %v3322 = vpack.c.b16 %v3290, %v3290
        %v3323 = vpack.c.b16 %v3291, %v3291
        %v3324 = vpack.c.b16 %v3292, %v3292
        %v3325 = vpack.c.b16 %v3293, %v3293
        %v3326 = vpack.c.b16 %v3294, %v3294
        %v3327 = vpack.c.b16 %v3295, %v3295
        %v3328 = vpack.c.b16 %v3296, %v3296
        %v3329 = vpack.c.b16 %v3297, %v3297
        %v3330 = vpack.c.b16 %v3298, %v3298
        %v3331 = vpack.c.b16 %v3299, %v3299
        %v3332 = vpack.c.b16 %v3300, %v3300
        %3365 = vst [vmem:[%s471] sm:$0xf] %v3301
        %3366 = vst [vmem:[%s471 + $0x4] sm:$0xf] %v3302
        %3367 = vst [vmem:[%s471 + $0x8] sm:$0xf] %v3303
        %3368 = vst [vmem:[%s471 + $0xc] sm:$0xf] %v3304
        %3369 = vst [vmem:[%s471 + $0x10] sm:$0xf] %v3305
        %3370 = vst [vmem:[%s471 + $0x14] sm:$0xf] %v3306
        %3371 = vst [vmem:[%s471 + $0x18] sm:$0xf] %v3307
        %3372 = vst [vmem:[%s471 + $0x1c] sm:$0xf] %v3308
        %3373 = vst [vmem:[%s471 + $0x20] sm:$0xf] %v3309
        %3374 = vst [vmem:[%s471 + $0x24] sm:$0xf] %v3310
        %3375 = vst [vmem:[%s471 + $0x28] sm:$0xf] %v3311
        %3376 = vst [vmem:[%s471 + $0x2c] sm:$0xf] %v3312
        %3377 = vst [vmem:[%s471 + $0x30] sm:$0xf] %v3313
        %3378 = vst [vmem:[%s471 + $0x34] sm:$0xf] %v3314
        %3379 = vst [vmem:[%s471 + $0x38] sm:$0xf] %v3315
        %3380 = vst [vmem:[%s471 + $0x3c] sm:$0xf] %v3316
        %3381 = vst [vmem:[%s471 + $0x40] sm:$0xf] %v3317
        %3382 = vst [vmem:[%s471 + $0x44] sm:$0xf] %v3318
        %3383 = vst [vmem:[%s471 + $0x48] sm:$0xf] %v3319
        %3384 = vst [vmem:[%s471 + $0x4c] sm:$0xf] %v3320
        %3385 = vst [vmem:[%s471 + $0x50] sm:$0xf] %v3321
        %3386 = vst [vmem:[%s471 + $0x54] sm:$0xf] %v3322
        %3387 = vst [vmem:[%s471 + $0x58] sm:$0xf] %v3323
        %3388 = vst [vmem:[%s471 + $0x5c] sm:$0xf] %v3324
        %3389 = vst [vmem:[%s471 + $0x60] sm:$0xf] %v3325
        %3390 = vst [vmem:[%s471 + $0x64] sm:$0xf] %v3326
        %3391 = vst [vmem:[%s471 + $0x68] sm:$0xf] %v3327
        %3392 = vst [vmem:[%s471 + $0x6c] sm:$0xf] %v3328
        %3393 = vst [vmem:[%s471 + $0x70] sm:$0xf] %v3329
        %3394 = vst [vmem:[%s471 + $0x74] sm:$0xf] %v3330
        %3395 = vst [vmem:[%s471 + $0x78] sm:$0xf] %v3331
        %3396 = vst [vmem:[%s471 + $0x7c] sm:$0xf] %v3332
        %v3397 = vpack.c.bf16 %v2634, %v2631
        %v3398 = vpack.c.bf16 %v2642, %v2639
        %v3399 = vpack.c.bf16 %v2650, %v2647
        %v3400 = vpack.c.bf16 %v2658, %v2655
        %v3401 = vpack.c.bf16 %v2666, %v2663
        %v3402 = vpack.c.bf16 %v2674, %v2671
        %v3403 = vpack.c.bf16 %v2682, %v2679
        %v3404 = vpack.c.bf16 %v2690, %v2687
        %v3405 = vpack.c.bf16 %v2698, %v2695
        %v3406 = vpack.c.bf16 %v2706, %v2703
        %v3407 = vpack.c.bf16 %v2714, %v2711
        %v3408 = vpack.c.bf16 %v2722, %v2719
        %v3409 = vpack.c.bf16 %v2730, %v2727
        %v3410 = vpack.c.bf16 %v2738, %v2735
        %v3411 = vpack.c.bf16 %v2746, %v2743
        %v3412 = vpack.c.bf16 %v2754, %v2751
        %v3429 = vunpack.c.l.b16 %v3397
        %v3430 = vunpack.c.h.b16 %v3397
        %v3431 = vunpack.c.l.b16 %v3398
        %v3432 = vunpack.c.h.b16 %v3398
        %v3433 = vunpack.c.l.b16 %v3399
        %v3434 = vunpack.c.h.b16 %v3399
        %v3435 = vunpack.c.l.b16 %v3400
        %v3436 = vunpack.c.h.b16 %v3400
        %v3437 = vunpack.c.l.b16 %v3401
        %v3438 = vunpack.c.h.b16 %v3401
        %v3439 = vunpack.c.l.b16 %v3402
        %v3440 = vunpack.c.h.b16 %v3402
        %v3441 = vunpack.c.l.b16 %v3403
        %v3442 = vunpack.c.h.b16 %v3403
        %v3443 = vunpack.c.l.b16 %v3404
        %v3444 = vunpack.c.h.b16 %v3404
        %v3445 = vunpack.c.l.b16 %v3405
        %v3446 = vunpack.c.h.b16 %v3405
        %v3447 = vunpack.c.l.b16 %v3406
        %v3448 = vunpack.c.h.b16 %v3406
        %v3449 = vunpack.c.l.b16 %v3407
        %v3450 = vunpack.c.h.b16 %v3407
        %v3451 = vunpack.c.l.b16 %v3408
        %v3452 = vunpack.c.h.b16 %v3408
        %v3453 = vunpack.c.l.b16 %v3409
        %v3454 = vunpack.c.h.b16 %v3409
        %v3455 = vunpack.c.l.b16 %v3410
        %v3456 = vunpack.c.h.b16 %v3410
        %v3457 = vunpack.c.l.b16 %v3411
        %v3458 = vunpack.c.h.b16 %v3411
        %v3459 = vunpack.c.l.b16 %v3412
        %v3460 = vunpack.c.h.b16 %v3412
        %v3461 = vpack.c.b16 %v3429, %v3429
        %v3462 = vpack.c.b16 %v3430, %v3430
        %v3463 = vpack.c.b16 %v3431, %v3431
        %v3464 = vpack.c.b16 %v3432, %v3432
        %v3465 = vpack.c.b16 %v3433, %v3433
        %v3466 = vpack.c.b16 %v3434, %v3434
        %v3467 = vpack.c.b16 %v3435, %v3435
        %v3468 = vpack.c.b16 %v3436, %v3436
        %v3469 = vpack.c.b16 %v3437, %v3437
        %v3470 = vpack.c.b16 %v3438, %v3438
        %v3471 = vpack.c.b16 %v3439, %v3439
        %v3472 = vpack.c.b16 %v3440, %v3440
        %v3473 = vpack.c.b16 %v3441, %v3441
        %v3474 = vpack.c.b16 %v3442, %v3442
        %v3475 = vpack.c.b16 %v3443, %v3443
        %v3476 = vpack.c.b16 %v3444, %v3444
        %v3477 = vpack.c.b16 %v3445, %v3445
        %v3478 = vpack.c.b16 %v3446, %v3446
        %v3479 = vpack.c.b16 %v3447, %v3447
        %v3480 = vpack.c.b16 %v3448, %v3448
        %v3481 = vpack.c.b16 %v3449, %v3449
        %v3482 = vpack.c.b16 %v3450, %v3450
        %v3483 = vpack.c.b16 %v3451, %v3451
        %v3484 = vpack.c.b16 %v3452, %v3452
        %v3485 = vpack.c.b16 %v3453, %v3453
        %v3486 = vpack.c.b16 %v3454, %v3454
        %v3487 = vpack.c.b16 %v3455, %v3455
        %v3488 = vpack.c.b16 %v3456, %v3456
        %v3489 = vpack.c.b16 %v3457, %v3457
        %v3490 = vpack.c.b16 %v3458, %v3458
        %v3491 = vpack.c.b16 %v3459, %v3459
        %v3492 = vpack.c.b16 %v3460, %v3460
        %3525 = vst [vmem:[%s478] sm:$0xf] %v3461
        %3526 = vst [vmem:[%s478 + $0x4] sm:$0xf] %v3462
        %3527 = vst [vmem:[%s478 + $0x8] sm:$0xf] %v3463
        %3528 = vst [vmem:[%s478 + $0xc] sm:$0xf] %v3464
        %3529 = vst [vmem:[%s478 + $0x10] sm:$0xf] %v3465
        %3530 = vst [vmem:[%s478 + $0x14] sm:$0xf] %v3466
        %3531 = vst [vmem:[%s478 + $0x18] sm:$0xf] %v3467
        %3532 = vst [vmem:[%s478 + $0x1c] sm:$0xf] %v3468
        %3533 = vst [vmem:[%s478 + $0x20] sm:$0xf] %v3469
        %3534 = vst [vmem:[%s478 + $0x24] sm:$0xf] %v3470
        %3535 = vst [vmem:[%s478 + $0x28] sm:$0xf] %v3471
        %3536 = vst [vmem:[%s478 + $0x2c] sm:$0xf] %v3472
        %3537 = vst [vmem:[%s478 + $0x30] sm:$0xf] %v3473
        %3538 = vst [vmem:[%s478 + $0x34] sm:$0xf] %v3474
        %3539 = vst [vmem:[%s478 + $0x38] sm:$0xf] %v3475
        %3540 = vst [vmem:[%s478 + $0x3c] sm:$0xf] %v3476
        %3541 = vst [vmem:[%s478 + $0x40] sm:$0xf] %v3477
        %3542 = vst [vmem:[%s478 + $0x44] sm:$0xf] %v3478
        %3543 = vst [vmem:[%s478 + $0x48] sm:$0xf] %v3479
        %3544 = vst [vmem:[%s478 + $0x4c] sm:$0xf] %v3480
        %3545 = vst [vmem:[%s478 + $0x50] sm:$0xf] %v3481
        %3546 = vst [vmem:[%s478 + $0x54] sm:$0xf] %v3482
        %3547 = vst [vmem:[%s478 + $0x58] sm:$0xf] %v3483
        %3548 = vst [vmem:[%s478 + $0x5c] sm:$0xf] %v3484
        %3549 = vst [vmem:[%s478 + $0x60] sm:$0xf] %v3485
        %3550 = vst [vmem:[%s478 + $0x64] sm:$0xf] %v3486
        %3551 = vst [vmem:[%s478 + $0x68] sm:$0xf] %v3487
        %3552 = vst [vmem:[%s478 + $0x6c] sm:$0xf] %v3488
        %3553 = vst [vmem:[%s478 + $0x70] sm:$0xf] %v3489
        %3554 = vst [vmem:[%s478 + $0x74] sm:$0xf] %v3490
        %3555 = vst [vmem:[%s478 + $0x78] sm:$0xf] %v3491
        %3556 = vst [vmem:[%s478 + $0x7c] sm:$0xf] %v3492
        %s3557 = scalar_lea.vmem %s423, 768 [#allocation10]
        %v3558 = vld [vmem:[%s3557] sm:$0xff]
        %v3559 = vld [vmem:[%s3557 + $0x8] sm:$0xf]
        %v3560 = vld [vmem:[%s3557 + $0xc] sm:$0xff]
        %v3561 = vld [vmem:[%s3557 + $0x14] sm:$0xf]
        %v3562 = vld [vmem:[%s3557 + $0x18] sm:$0xff]
        %v3563 = vld [vmem:[%s3557 + $0x20] sm:$0xf]
        %v3564 = vld [vmem:[%s3557 + $0x24] sm:$0xff]
        %v3565 = vld [vmem:[%s3557 + $0x2c] sm:$0xf]
        %v3566 = vld [vmem:[%s3557 + $0x30] sm:$0xff]
        %v3567 = vld [vmem:[%s3557 + $0x38] sm:$0xf]
        %v3568 = vld [vmem:[%s3557 + $0x3c] sm:$0xff]
        %v3569 = vld [vmem:[%s3557 + $0x44] sm:$0xf]
        %v3570 = vld [vmem:[%s3557 + $0x48] sm:$0xff]
        %v3571 = vld [vmem:[%s3557 + $0x50] sm:$0xf]
        %v3572 = vld [vmem:[%s3557 + $0x54] sm:$0xff]
        %v3573 = vld [vmem:[%s3557 + $0x5c] sm:$0xf]
        %v3574 = vld [vmem:[%s3557 + $0x60] sm:$0xff]
        %v3575 = vld [vmem:[%s3557 + $0x68] sm:$0xf]
        %v3576 = vld [vmem:[%s3557 + $0x6c] sm:$0xff]
        %v3577 = vld [vmem:[%s3557 + $0x74] sm:$0xf]
        %v3578 = vld [vmem:[%s3557 + $0x78] sm:$0xff]
        %v3579 = vld [vmem:[%s3557 + $0x80] sm:$0xf]
        %v3580 = vld [vmem:[%s3557 + $0x84] sm:$0xff]
        %v3581 = vld [vmem:[%s3557 + $0x8c] sm:$0xf]
        %v3582 = vld [vmem:[%s3557 + $0x90] sm:$0xff]
        %v3583 = vld [vmem:[%s3557 + $0x98] sm:$0xf]
        %v3584 = vld [vmem:[%s3557 + $0x9c] sm:$0xff]
        %v3585 = vld [vmem:[%s3557 + $0xa4] sm:$0xf]
        %v3586 = vld [vmem:[%s3557 + $0xa8] sm:$0xff]
        %v3587 = vld [vmem:[%s3557 + $0xb0] sm:$0xf]
        %v3588 = vld [vmem:[%s3557 + $0xb4] sm:$0xff]
        %v3589 = vld [vmem:[%s3557 + $0xbc] sm:$0xf]
        %v3590 = vld [vmem:[%s3557 + $0xc0] sm:$0xff]
        %v3591 = vld [vmem:[%s3557 + $0xc8] sm:$0xf]
        %v3592 = vld [vmem:[%s3557 + $0xcc] sm:$0xff]
        %v3593 = vld [vmem:[%s3557 + $0xd4] sm:$0xf]
        %v3594 = vld [vmem:[%s3557 + $0xd8] sm:$0xff]
        %v3595 = vld [vmem:[%s3557 + $0xe0] sm:$0xf]
        %v3596 = vld [vmem:[%s3557 + $0xe4] sm:$0xff]
        %v3597 = vld [vmem:[%s3557 + $0xec] sm:$0xf]
        %v3598 = vld [vmem:[%s3557 + $0xf0] sm:$0xff]
        %v3599 = vld [vmem:[%s3557 + $0xf8] sm:$0xf]
        %v3600 = vld [vmem:[%s3557 + $0xfc] sm:$0xff]
        %v3601 = vld [vmem:[%s3557 + $0x104] sm:$0xf]
        %v3602 = vld [vmem:[%s3557 + $0x108] sm:$0xff]
        %v3603 = vld [vmem:[%s3557 + $0x110] sm:$0xf]
        %v3604 = vld [vmem:[%s3557 + $0x114] sm:$0xff]
        %v3605 = vld [vmem:[%s3557 + $0x11c] sm:$0xf]
        %v3606 = vld [vmem:[%s3557 + $0x120] sm:$0xff]
        %v3607 = vld [vmem:[%s3557 + $0x128] sm:$0xf]
        %v3608 = vld [vmem:[%s3557 + $0x12c] sm:$0xff]
        %v3609 = vld [vmem:[%s3557 + $0x134] sm:$0xf]
        %v3610 = vld [vmem:[%s3557 + $0x138] sm:$0xff]
        %v3611 = vld [vmem:[%s3557 + $0x140] sm:$0xf]
        %v3612 = vld [vmem:[%s3557 + $0x144] sm:$0xff]
        %v3613 = vld [vmem:[%s3557 + $0x14c] sm:$0xf]
        %v3614 = vld [vmem:[%s3557 + $0x150] sm:$0xff]
        %v3615 = vld [vmem:[%s3557 + $0x158] sm:$0xf]
        %v3616 = vld [vmem:[%s3557 + $0x15c] sm:$0xff]
        %v3617 = vld [vmem:[%s3557 + $0x164] sm:$0xf]
        %v3618 = vld [vmem:[%s3557 + $0x168] sm:$0xff]
        %v3619 = vld [vmem:[%s3557 + $0x170] sm:$0xf]
        %v3620 = vld [vmem:[%s3557 + $0x174] sm:$0xff]
        %v3621 = vld [vmem:[%s3557 + $0x17c] sm:$0xf]
        %v3622 = vld [vmem:[%s3557 + $0x180] sm:$0xff]
        %v3623 = vld [vmem:[%s3557 + $0x188] sm:$0xf]
        %v3624 = vld [vmem:[%s3557 + $0x18c] sm:$0xff]
        %v3625 = vld [vmem:[%s3557 + $0x194] sm:$0xf]
        %v3626 = vld [vmem:[%s3557 + $0x198] sm:$0xff]
        %v3627 = vld [vmem:[%s3557 + $0x1a0] sm:$0xf]
        %v3628 = vld [vmem:[%s3557 + $0x1a4] sm:$0xff]
        %v3629 = vld [vmem:[%s3557 + $0x1ac] sm:$0xf]
        %v3630 = vld [vmem:[%s3557 + $0x1b0] sm:$0xff]
        %v3631 = vld [vmem:[%s3557 + $0x1b8] sm:$0xf]
        %v3632 = vld [vmem:[%s3557 + $0x1bc] sm:$0xff]
        %v3633 = vld [vmem:[%s3557 + $0x1c4] sm:$0xf]
        %v3634 = vld [vmem:[%s3557 + $0x1c8] sm:$0xff]
        %v3635 = vld [vmem:[%s3557 + $0x1d0] sm:$0xf]
        %v3636 = vld [vmem:[%s3557 + $0x1d4] sm:$0xff]
        %v3637 = vld [vmem:[%s3557 + $0x1dc] sm:$0xf]
        %v3638 = vld [vmem:[%s3557 + $0x1e0] sm:$0xff]
        %v3639 = vld [vmem:[%s3557 + $0x1e8] sm:$0xf]
        %v3640 = vld [vmem:[%s3557 + $0x1ec] sm:$0xff]
        %v3641 = vld [vmem:[%s3557 + $0x1f4] sm:$0xf]
        %v3642 = vld [vmem:[%s3557 + $0x1f8] sm:$0xff]
        %v3643 = vld [vmem:[%s3557 + $0x200] sm:$0xf]
        %v3644 = vld [vmem:[%s3557 + $0x204] sm:$0xff]
        %v3645 = vld [vmem:[%s3557 + $0x20c] sm:$0xf]
        %v3646 = vld [vmem:[%s3557 + $0x210] sm:$0xff]
        %v3647 = vld [vmem:[%s3557 + $0x218] sm:$0xf]
        %v3648 = vld [vmem:[%s3557 + $0x21c] sm:$0xff]
        %v3649 = vld [vmem:[%s3557 + $0x224] sm:$0xf]
        %v3650 = vld [vmem:[%s3557 + $0x228] sm:$0xff]
        %v3651 = vld [vmem:[%s3557 + $0x230] sm:$0xf]
        %v3652 = vld [vmem:[%s3557 + $0x234] sm:$0xff]
        %v3653 = vld [vmem:[%s3557 + $0x23c] sm:$0xf]
        %v3654 = vld [vmem:[%s3557 + $0x240] sm:$0xff]
        %v3655 = vld [vmem:[%s3557 + $0x248] sm:$0xf]
        %v3656 = vld [vmem:[%s3557 + $0x24c] sm:$0xff]
        %v3657 = vld [vmem:[%s3557 + $0x254] sm:$0xf]
        %v3658 = vld [vmem:[%s3557 + $0x258] sm:$0xff]
        %v3659 = vld [vmem:[%s3557 + $0x260] sm:$0xf]
        %v3660 = vld [vmem:[%s3557 + $0x264] sm:$0xff]
        %v3661 = vld [vmem:[%s3557 + $0x26c] sm:$0xf]
        %v3662 = vld [vmem:[%s3557 + $0x270] sm:$0xff]
        %v3663 = vld [vmem:[%s3557 + $0x278] sm:$0xf]
        %v3664 = vld [vmem:[%s3557 + $0x27c] sm:$0xff]
        %v3665 = vld [vmem:[%s3557 + $0x284] sm:$0xf]
        %v3666 = vld [vmem:[%s3557 + $0x288] sm:$0xff]
        %v3667 = vld [vmem:[%s3557 + $0x290] sm:$0xf]
        %v3668 = vld [vmem:[%s3557 + $0x294] sm:$0xff]
        %v3669 = vld [vmem:[%s3557 + $0x29c] sm:$0xf]
        %v3670 = vld [vmem:[%s3557 + $0x2a0] sm:$0xff]
        %v3671 = vld [vmem:[%s3557 + $0x2a8] sm:$0xf]
        %v3672 = vld [vmem:[%s3557 + $0x2ac] sm:$0xff]
        %v3673 = vld [vmem:[%s3557 + $0x2b4] sm:$0xf]
        %v3674 = vld [vmem:[%s3557 + $0x2b8] sm:$0xff]
        %v3675 = vld [vmem:[%s3557 + $0x2c0] sm:$0xf]
        %v3676 = vld [vmem:[%s3557 + $0x2c4] sm:$0xff]
        %v3677 = vld [vmem:[%s3557 + $0x2cc] sm:$0xf]
        %v3678 = vld [vmem:[%s3557 + $0x2d0] sm:$0xff]
        %v3679 = vld [vmem:[%s3557 + $0x2d8] sm:$0xf]
        %v3680 = vld [vmem:[%s3557 + $0x2dc] sm:$0xff]
        %v3681 = vld [vmem:[%s3557 + $0x2e4] sm:$0xf]
        %v3682 = vld [vmem:[%s3557 + $0x2e8] sm:$0xff]
        %v3683 = vld [vmem:[%s3557 + $0x2f0] sm:$0xf]
        %v3684 = vld [vmem:[%s3557 + $0x2f4] sm:$0xff]
        %v3685 = vld [vmem:[%s3557 + $0x2fc] sm:$0xf]
        %v3814 = vunpack.c.l.b16 %v3558
        %v3815 = vunpack.c.h.b16 %v3558
        %v3816 = vunpack.c.l.b16 %v3559
        %v3817 = vunpack.c.l.b16 %v3560
        %v3818 = vunpack.c.h.b16 %v3560
        %v3819 = vunpack.c.l.b16 %v3561
        %v3820 = vunpack.c.l.b16 %v3562
        %v3821 = vunpack.c.h.b16 %v3562
        %v3822 = vunpack.c.l.b16 %v3563
        %v3823 = vunpack.c.l.b16 %v3564
        %v3824 = vunpack.c.h.b16 %v3564
        %v3825 = vunpack.c.l.b16 %v3565
        %v3826 = vunpack.c.l.b16 %v3566
        %v3827 = vunpack.c.h.b16 %v3566
        %v3828 = vunpack.c.l.b16 %v3567
        %v3829 = vunpack.c.l.b16 %v3568
        %v3830 = vunpack.c.h.b16 %v3568
        %v3831 = vunpack.c.l.b16 %v3569
        %v3832 = vunpack.c.l.b16 %v3570
        %v3833 = vunpack.c.h.b16 %v3570
        %v3834 = vunpack.c.l.b16 %v3571
        %v3835 = vunpack.c.l.b16 %v3572
        %v3836 = vunpack.c.h.b16 %v3572
        %v3837 = vunpack.c.l.b16 %v3573
        %v3838 = vunpack.c.l.b16 %v3574
        %v3839 = vunpack.c.h.b16 %v3574
        %v3840 = vunpack.c.l.b16 %v3575
        %v3841 = vunpack.c.l.b16 %v3576
        %v3842 = vunpack.c.h.b16 %v3576
        %v3843 = vunpack.c.l.b16 %v3577
        %v3844 = vunpack.c.l.b16 %v3578
        %v3845 = vunpack.c.h.b16 %v3578
        %v3846 = vunpack.c.l.b16 %v3579
        %v3847 = vunpack.c.l.b16 %v3580
        %v3848 = vunpack.c.h.b16 %v3580
        %v3849 = vunpack.c.l.b16 %v3581
        %v3850 = vunpack.c.l.b16 %v3582
        %v3851 = vunpack.c.h.b16 %v3582
        %v3852 = vunpack.c.l.b16 %v3583
        %v3853 = vunpack.c.l.b16 %v3584
        %v3854 = vunpack.c.h.b16 %v3584
        %v3855 = vunpack.c.l.b16 %v3585
        %v3856 = vunpack.c.l.b16 %v3586
        %v3857 = vunpack.c.h.b16 %v3586
        %v3858 = vunpack.c.l.b16 %v3587
        %v3859 = vunpack.c.l.b16 %v3588
        %v3860 = vunpack.c.h.b16 %v3588
        %v3861 = vunpack.c.l.b16 %v3589
        %v3862 = vunpack.c.l.b16 %v3590
        %v3863 = vunpack.c.h.b16 %v3590
        %v3864 = vunpack.c.l.b16 %v3591
        %v3865 = vunpack.c.l.b16 %v3592
        %v3866 = vunpack.c.h.b16 %v3592
        %v3867 = vunpack.c.l.b16 %v3593
        %v3868 = vunpack.c.l.b16 %v3594
        %v3869 = vunpack.c.h.b16 %v3594
        %v3870 = vunpack.c.l.b16 %v3595
        %v3871 = vunpack.c.l.b16 %v3596
        %v3872 = vunpack.c.h.b16 %v3596
        %v3873 = vunpack.c.l.b16 %v3597
        %v3874 = vunpack.c.l.b16 %v3598
        %v3875 = vunpack.c.h.b16 %v3598
        %v3876 = vunpack.c.l.b16 %v3599
        %v3877 = vunpack.c.l.b16 %v3600
        %v3878 = vunpack.c.h.b16 %v3600
        %v3879 = vunpack.c.l.b16 %v3601
        %v3880 = vunpack.c.l.b16 %v3602
        %v3881 = vunpack.c.h.b16 %v3602
        %v3882 = vunpack.c.l.b16 %v3603
        %v3883 = vunpack.c.l.b16 %v3604
        %v3884 = vunpack.c.h.b16 %v3604
        %v3885 = vunpack.c.l.b16 %v3605
        %v3886 = vunpack.c.l.b16 %v3606
        %v3887 = vunpack.c.h.b16 %v3606
        %v3888 = vunpack.c.l.b16 %v3607
        %v3889 = vunpack.c.l.b16 %v3608
        %v3890 = vunpack.c.h.b16 %v3608
        %v3891 = vunpack.c.l.b16 %v3609
        %v3892 = vunpack.c.l.b16 %v3610
        %v3893 = vunpack.c.h.b16 %v3610
        %v3894 = vunpack.c.l.b16 %v3611
        %v3895 = vunpack.c.l.b16 %v3612
        %v3896 = vunpack.c.h.b16 %v3612
        %v3897 = vunpack.c.l.b16 %v3613
        %v3898 = vunpack.c.l.b16 %v3614
        %v3899 = vunpack.c.h.b16 %v3614
        %v3900 = vunpack.c.l.b16 %v3615
        %v3901 = vunpack.c.l.b16 %v3616
        %v3902 = vunpack.c.h.b16 %v3616
        %v3903 = vunpack.c.l.b16 %v3617
        %v3904 = vunpack.c.l.b16 %v3618
        %v3905 = vunpack.c.h.b16 %v3618
        %v3906 = vunpack.c.l.b16 %v3619
        %v3907 = vunpack.c.l.b16 %v3620
        %v3908 = vunpack.c.h.b16 %v3620
        %v3909 = vunpack.c.l.b16 %v3621
        %v3910 = vunpack.c.l.b16 %v3622
        %v3911 = vunpack.c.h.b16 %v3622
        %v3912 = vunpack.c.l.b16 %v3623
        %v3913 = vunpack.c.l.b16 %v3624
        %v3914 = vunpack.c.h.b16 %v3624
        %v3915 = vunpack.c.l.b16 %v3625
        %v3916 = vunpack.c.l.b16 %v3626
        %v3917 = vunpack.c.h.b16 %v3626
        %v3918 = vunpack.c.l.b16 %v3627
        %v3919 = vunpack.c.l.b16 %v3628
        %v3920 = vunpack.c.h.b16 %v3628
        %v3921 = vunpack.c.l.b16 %v3629
        %v3922 = vunpack.c.l.b16 %v3630
        %v3923 = vunpack.c.h.b16 %v3630
        %v3924 = vunpack.c.l.b16 %v3631
        %v3925 = vunpack.c.l.b16 %v3632
        %v3926 = vunpack.c.h.b16 %v3632
        %v3927 = vunpack.c.l.b16 %v3633
        %v3928 = vunpack.c.l.b16 %v3634
        %v3929 = vunpack.c.h.b16 %v3634
        %v3930 = vunpack.c.l.b16 %v3635
        %v3931 = vunpack.c.l.b16 %v3636
        %v3932 = vunpack.c.h.b16 %v3636
        %v3933 = vunpack.c.l.b16 %v3637
        %v3934 = vunpack.c.l.b16 %v3638
        %v3935 = vunpack.c.h.b16 %v3638
        %v3936 = vunpack.c.l.b16 %v3639
        %v3937 = vunpack.c.l.b16 %v3640
        %v3938 = vunpack.c.h.b16 %v3640
        %v3939 = vunpack.c.l.b16 %v3641
        %v3940 = vunpack.c.l.b16 %v3642
        %v3941 = vunpack.c.h.b16 %v3642
        %v3942 = vunpack.c.l.b16 %v3643
        %v3943 = vunpack.c.l.b16 %v3644
        %v3944 = vunpack.c.h.b16 %v3644
        %v3945 = vunpack.c.l.b16 %v3645
        %v3946 = vunpack.c.l.b16 %v3646
        %v3947 = vunpack.c.h.b16 %v3646
        %v3948 = vunpack.c.l.b16 %v3647
        %v3949 = vunpack.c.l.b16 %v3648
        %v3950 = vunpack.c.h.b16 %v3648
        %v3951 = vunpack.c.l.b16 %v3649
        %v3952 = vunpack.c.l.b16 %v3650
        %v3953 = vunpack.c.h.b16 %v3650
        %v3954 = vunpack.c.l.b16 %v3651
        %v3955 = vunpack.c.l.b16 %v3652
        %v3956 = vunpack.c.h.b16 %v3652
        %v3957 = vunpack.c.l.b16 %v3653
        %v3958 = vunpack.c.l.b16 %v3654
        %v3959 = vunpack.c.h.b16 %v3654
        %v3960 = vunpack.c.l.b16 %v3655
        %v3961 = vunpack.c.l.b16 %v3656
        %v3962 = vunpack.c.h.b16 %v3656
        %v3963 = vunpack.c.l.b16 %v3657
        %v3964 = vunpack.c.l.b16 %v3658
        %v3965 = vunpack.c.h.b16 %v3658
        %v3966 = vunpack.c.l.b16 %v3659
        %v3967 = vunpack.c.l.b16 %v3660
        %v3968 = vunpack.c.h.b16 %v3660
        %v3969 = vunpack.c.l.b16 %v3661
        %v3970 = vunpack.c.l.b16 %v3662
        %v3971 = vunpack.c.h.b16 %v3662
        %v3972 = vunpack.c.l.b16 %v3663
        %v3973 = vunpack.c.l.b16 %v3664
        %v3974 = vunpack.c.h.b16 %v3664
        %v3975 = vunpack.c.l.b16 %v3665
        %v3976 = vunpack.c.l.b16 %v3666
        %v3977 = vunpack.c.h.b16 %v3666
        %v3978 = vunpack.c.l.b16 %v3667
        %v3979 = vunpack.c.l.b16 %v3668
        %v3980 = vunpack.c.h.b16 %v3668
        %v3981 = vunpack.c.l.b16 %v3669
        %v3982 = vunpack.c.l.b16 %v3670
        %v3983 = vunpack.c.h.b16 %v3670
        %v3984 = vunpack.c.l.b16 %v3671
        %v3985 = vunpack.c.l.b16 %v3672
        %v3986 = vunpack.c.h.b16 %v3672
        %v3987 = vunpack.c.l.b16 %v3673
        %v3988 = vunpack.c.l.b16 %v3674
        %v3989 = vunpack.c.h.b16 %v3674
        %v3990 = vunpack.c.l.b16 %v3675
        %v3991 = vunpack.c.l.b16 %v3676
        %v3992 = vunpack.c.h.b16 %v3676
        %v3993 = vunpack.c.l.b16 %v3677
        %v3994 = vunpack.c.l.b16 %v3678
        %v3995 = vunpack.c.h.b16 %v3678
        %v3996 = vunpack.c.l.b16 %v3679
        %v3997 = vunpack.c.l.b16 %v3680
        %v3998 = vunpack.c.h.b16 %v3680
        %v3999 = vunpack.c.l.b16 %v3681
        %v4000 = vunpack.c.l.b16 %v3682
        %v4001 = vunpack.c.h.b16 %v3682
        %v4002 = vunpack.c.l.b16 %v3683
        %v4003 = vunpack.c.l.b16 %v3684
        %v4004 = vunpack.c.h.b16 %v3684
        %v4005 = vunpack.c.l.b16 %v3685
        %v4006 = vpack.c.b16 %v3817, %v3814
        %v4007 = vpack.c.b16 %v3818, %v3815
        %v4008 = vpack.c.b16 %v3819, %v3816
        %v4009 = vpack.c.b16 %v3823, %v3820
        %v4010 = vpack.c.b16 %v3824, %v3821
        %v4011 = vpack.c.b16 %v3825, %v3822
        %v4012 = vpack.c.b16 %v3829, %v3826
        %v4013 = vpack.c.b16 %v3830, %v3827
        %v4014 = vpack.c.b16 %v3831, %v3828
        %v4015 = vpack.c.b16 %v3835, %v3832
        %v4016 = vpack.c.b16 %v3836, %v3833
        %v4017 = vpack.c.b16 %v3837, %v3834
        %v4018 = vpack.c.b16 %v3841, %v3838
        %v4019 = vpack.c.b16 %v3842, %v3839
        %v4020 = vpack.c.b16 %v3843, %v3840
        %v4021 = vpack.c.b16 %v3847, %v3844
        %v4022 = vpack.c.b16 %v3848, %v3845
        %v4023 = vpack.c.b16 %v3849, %v3846
        %v4024 = vpack.c.b16 %v3853, %v3850
        %v4025 = vpack.c.b16 %v3854, %v3851
        %v4026 = vpack.c.b16 %v3855, %v3852
        %v4027 = vpack.c.b16 %v3859, %v3856
        %v4028 = vpack.c.b16 %v3860, %v3857
        %v4029 = vpack.c.b16 %v3861, %v3858
        %v4030 = vpack.c.b16 %v3865, %v3862
        %v4031 = vpack.c.b16 %v3866, %v3863
        %v4032 = vpack.c.b16 %v3867, %v3864
        %v4033 = vpack.c.b16 %v3871, %v3868
        %v4034 = vpack.c.b16 %v3872, %v3869
        %v4035 = vpack.c.b16 %v3873, %v3870
        %v4036 = vpack.c.b16 %v3877, %v3874
        %v4037 = vpack.c.b16 %v3878, %v3875
        %v4038 = vpack.c.b16 %v3879, %v3876
        %v4039 = vpack.c.b16 %v3883, %v3880
        %v4040 = vpack.c.b16 %v3884, %v3881
        %v4041 = vpack.c.b16 %v3885, %v3882
        %v4042 = vpack.c.b16 %v3889, %v3886
        %v4043 = vpack.c.b16 %v3890, %v3887
        %v4044 = vpack.c.b16 %v3891, %v3888
        %v4045 = vpack.c.b16 %v3895, %v3892
        %v4046 = vpack.c.b16 %v3896, %v3893
        %v4047 = vpack.c.b16 %v3897, %v3894
        %v4048 = vpack.c.b16 %v3901, %v3898
        %v4049 = vpack.c.b16 %v3902, %v3899
        %v4050 = vpack.c.b16 %v3903, %v3900
        %v4051 = vpack.c.b16 %v3907, %v3904
        %v4052 = vpack.c.b16 %v3908, %v3905
        %v4053 = vpack.c.b16 %v3909, %v3906
        %v4054 = vpack.c.b16 %v3913, %v3910
        %v4055 = vpack.c.b16 %v3914, %v3911
        %v4056 = vpack.c.b16 %v3915, %v3912
        %v4057 = vpack.c.b16 %v3919, %v3916
        %v4058 = vpack.c.b16 %v3920, %v3917
        %v4059 = vpack.c.b16 %v3921, %v3918
        %v4060 = vpack.c.b16 %v3925, %v3922
        %v4061 = vpack.c.b16 %v3926, %v3923
        %v4062 = vpack.c.b16 %v3927, %v3924
        %v4063 = vpack.c.b16 %v3931, %v3928
        %v4064 = vpack.c.b16 %v3932, %v3929
        %v4065 = vpack.c.b16 %v3933, %v3930
        %v4066 = vpack.c.b16 %v3937, %v3934
        %v4067 = vpack.c.b16 %v3938, %v3935
        %v4068 = vpack.c.b16 %v3939, %v3936
        %v4069 = vpack.c.b16 %v3943, %v3940
        %v4070 = vpack.c.b16 %v3944, %v3941
        %v4071 = vpack.c.b16 %v3945, %v3942
        %v4072 = vpack.c.b16 %v3949, %v3946
        %v4073 = vpack.c.b16 %v3950, %v3947
        %v4074 = vpack.c.b16 %v3951, %v3948
        %v4075 = vpack.c.b16 %v3955, %v3952
        %v4076 = vpack.c.b16 %v3956, %v3953
        %v4077 = vpack.c.b16 %v3957, %v3954
        %v4078 = vpack.c.b16 %v3961, %v3958
        %v4079 = vpack.c.b16 %v3962, %v3959
        %v4080 = vpack.c.b16 %v3963, %v3960
        %v4081 = vpack.c.b16 %v3967, %v3964
        %v4082 = vpack.c.b16 %v3968, %v3965
        %v4083 = vpack.c.b16 %v3969, %v3966
        %v4084 = vpack.c.b16 %v3973, %v3970
        %v4085 = vpack.c.b16 %v3974, %v3971
        %v4086 = vpack.c.b16 %v3975, %v3972
        %v4087 = vpack.c.b16 %v3979, %v3976
        %v4088 = vpack.c.b16 %v3980, %v3977
        %v4089 = vpack.c.b16 %v3981, %v3978
        %v4090 = vpack.c.b16 %v3985, %v3982
        %v4091 = vpack.c.b16 %v3986, %v3983
        %v4092 = vpack.c.b16 %v3987, %v3984
        %v4093 = vpack.c.b16 %v3991, %v3988
        %v4094 = vpack.c.b16 %v3992, %v3989
        %v4095 = vpack.c.b16 %v3993, %v3990
        %v4096 = vpack.c.b16 %v3997, %v3994
        %v4097 = vpack.c.b16 %v3998, %v3995
        %v4098 = vpack.c.b16 %v3999, %v3996
        %v4099 = vpack.c.b16 %v4003, %v4000
        %v4100 = vpack.c.b16 %v4004, %v4001
        %v4101 = vpack.c.b16 %v4005, %v4002
        %4198 = vmatprep.subr.bf16.mxu0 %v4028
        %4199 = vmatpush1.bf16.msra.mxu0 %v4027
        %4200 = vmatprep.subr.bf16.mxu0 %v4025
        %4201 = vmatpush1.bf16.msra.mxu0 %v4024
        %4202 = vmatprep.subr.bf16.mxu0 %v4022
        %4203 = vmatpush1.bf16.msra.mxu0 %v4021
        %4204 = vmatprep.subr.bf16.mxu0 %v4019
        %4205 = vmatpush1.bf16.msra.mxu0 %v4018
        %4206 = vmatprep.subr.bf16.mxu0 %v4016
        %4207 = vmatpush1.bf16.msra.mxu0 %v4015
        %4208 = vmatprep.subr.bf16.mxu0 %v4013
        %4209 = vmatpush1.bf16.msra.mxu0 %v4012
        %4210 = vmatprep.subr.bf16.mxu0 %v4010
        %4211 = vmatpush1.bf16.msra.mxu0 %v4009
        %4212 = vmatprep.subr.bf16.mxu0 %v4007
        %4213 = vmatpush1.bf16.msra.mxu0 %v4006
        %4214 = vmatprep.subr.bf16.mxu0 %v4052
        %4215 = vmatpush2.bf16.msra.mxu0 %v4051
        %4216 = vmatprep.subr.bf16.mxu0 %v4049
        %4217 = vmatpush2.bf16.msra.mxu0 %v4048
        %4218 = vmatprep.subr.bf16.mxu0 %v4046
        %4219 = vmatpush2.bf16.msra.mxu0 %v4045
        %4220 = vmatprep.subr.bf16.mxu0 %v4043
        %4221 = vmatpush2.bf16.msra.mxu0 %v4042
        %4222 = vmatprep.subr.bf16.mxu0 %v4040
        %4223 = vmatpush2.bf16.msra.mxu0 %v4039
        %4224 = vmatprep.subr.bf16.mxu0 %v4037
        %4225 = vmatpush2.bf16.msra.mxu0 %v4036
        %4226 = vmatprep.subr.bf16.mxu0 %v4034
        %4227 = vmatpush2.bf16.msra.mxu0 %v4033
        %4228 = vmatprep.subr.bf16.mxu0 %v4031
        %4229 = vmatpush2.bf16.msra.mxu0 %v4030
        %4230 = vmatprep.mubr.bf16.mxu0 %v1282
        %4231 = vmatmul.mubr.bf16.gmra.mxu0 %v1281
        %v4232 = vpop.f32.mrf.mxu0
        %v4233 = vadd.f32 0.0, %v4232
        %v4234 = vpop.f32.mrf.mxu0
        %v4235 = vadd.f32 0.0, %v4234
        %v4236 = vpop.f32.mrf.mxu0
        %v4237 = vadd.f32 0.0, %v4236
        %v4238 = vpop.f32.mrf.mxu0
        %v4239 = vadd.f32 0.0, %v4238
        %4240 = vmatprep.mubr.bf16.mxu0 %v1286
        %4241 = vmatmul.mubr.bf16.gmra.mxu0 %v1285
        %v4242 = vpop.f32.mrf.mxu0
        %v4243 = vadd.f32 0.0, %v4242
        %v4244 = vpop.f32.mrf.mxu0
        %v4245 = vadd.f32 0.0, %v4244
        %v4246 = vpop.f32.mrf.mxu0
        %v4247 = vadd.f32 0.0, %v4246
        %v4248 = vpop.f32.mrf.mxu0
        %v4249 = vadd.f32 0.0, %v4248
        %4250 = vmatprep.mubr.bf16.mxu0 %v1290
        %4251 = vmatmul.mubr.bf16.gmra.mxu0 %v1289
        %v4252 = vpop.f32.mrf.mxu0
        %v4253 = vadd.f32 0.0, %v4252
        %v4254 = vpop.f32.mrf.mxu0
        %v4255 = vadd.f32 0.0, %v4254
        %v4256 = vpop.f32.mrf.mxu0
        %v4257 = vadd.f32 0.0, %v4256
        %v4258 = vpop.f32.mrf.mxu0
        %v4259 = vadd.f32 0.0, %v4258
        %4260 = vmatprep.mubr.bf16.mxu0 %v1294
        %4261 = vmatmul.mubr.bf16.gmra.mxu0 %v1293
        %v4262 = vpop.f32.mrf.mxu0
        %v4263 = vadd.f32 0.0, %v4262
        %v4264 = vpop.f32.mrf.mxu0
        %v4265 = vadd.f32 0.0, %v4264
        %v4266 = vpop.f32.mrf.mxu0
        %v4267 = vadd.f32 0.0, %v4266
        %v4268 = vpop.f32.mrf.mxu0
        %v4269 = vadd.f32 0.0, %v4268
        %4270 = vmatprep.mubr.bf16.mxu0 %v1298
        %4271 = vmatmul.mubr.bf16.gmra.mxu0 %v1297
        %v4272 = vpop.f32.mrf.mxu0
        %v4273 = vadd.f32 0.0, %v4272
        %v4274 = vpop.f32.mrf.mxu0
        %v4275 = vadd.f32 0.0, %v4274
        %v4276 = vpop.f32.mrf.mxu0
        %v4277 = vadd.f32 0.0, %v4276
        %v4278 = vpop.f32.mrf.mxu0
        %v4279 = vadd.f32 0.0, %v4278
        %4280 = vmatprep.mubr.bf16.mxu0 %v1302
        %4281 = vmatmul.mubr.bf16.gmra.mxu0 %v1301
        %v4282 = vpop.f32.mrf.mxu0
        %v4283 = vadd.f32 0.0, %v4282
        %v4284 = vpop.f32.mrf.mxu0
        %v4285 = vadd.f32 0.0, %v4284
        %v4286 = vpop.f32.mrf.mxu0
        %v4287 = vadd.f32 0.0, %v4286
        %v4288 = vpop.f32.mrf.mxu0
        %v4289 = vadd.f32 0.0, %v4288
        %4290 = vmatprep.mubr.bf16.mxu0 %v1306
        %4291 = vmatmul.mubr.bf16.gmra.mxu0 %v1305
        %v4292 = vpop.f32.mrf.mxu0
        %v4293 = vadd.f32 0.0, %v4292
        %v4294 = vpop.f32.mrf.mxu0
        %v4295 = vadd.f32 0.0, %v4294
        %v4296 = vpop.f32.mrf.mxu0
        %v4297 = vadd.f32 0.0, %v4296
        %v4298 = vpop.f32.mrf.mxu0
        %v4299 = vadd.f32 0.0, %v4298
        %4300 = vmatprep.mubr.bf16.mxu0 %v1310
        %4301 = vmatmul.mubr.bf16.gmra.mxu0 %v1309
        %v4302 = vpop.f32.mrf.mxu0
        %v4303 = vadd.f32 0.0, %v4302
        %v4304 = vpop.f32.mrf.mxu0
        %v4305 = vadd.f32 0.0, %v4304
        %v4306 = vpop.f32.mrf.mxu0
        %v4307 = vadd.f32 0.0, %v4306
        %v4308 = vpop.f32.mrf.mxu0
        %v4309 = vadd.f32 0.0, %v4308
        %4310 = vmatprep.mubr.bf16.mxu0 %v1314
        %4311 = vmatmul.mubr.bf16.gmra.mxu0 %v1313
        %v4312 = vpop.f32.mrf.mxu0
        %v4313 = vadd.f32 0.0, %v4312
        %v4314 = vpop.f32.mrf.mxu0
        %v4315 = vadd.f32 0.0, %v4314
        %v4316 = vpop.f32.mrf.mxu0
        %v4317 = vadd.f32 0.0, %v4316
        %v4318 = vpop.f32.mrf.mxu0
        %v4319 = vadd.f32 0.0, %v4318
        %4320 = vmatprep.mubr.bf16.mxu0 %v1318
        %4321 = vmatmul.mubr.bf16.gmra.mxu0 %v1317
        %v4322 = vpop.f32.mrf.mxu0
        %v4323 = vadd.f32 0.0, %v4322
        %v4324 = vpop.f32.mrf.mxu0
        %v4325 = vadd.f32 0.0, %v4324
        %v4326 = vpop.f32.mrf.mxu0
        %v4327 = vadd.f32 0.0, %v4326
        %v4328 = vpop.f32.mrf.mxu0
        %v4329 = vadd.f32 0.0, %v4328
        %4330 = vmatprep.mubr.bf16.mxu0 %v1322
        %4331 = vmatmul.mubr.bf16.gmra.mxu0 %v1321
        %v4332 = vpop.f32.mrf.mxu0
        %v4333 = vadd.f32 0.0, %v4332
        %v4334 = vpop.f32.mrf.mxu0
        %v4335 = vadd.f32 0.0, %v4334
        %v4336 = vpop.f32.mrf.mxu0
        %v4337 = vadd.f32 0.0, %v4336
        %v4338 = vpop.f32.mrf.mxu0
        %v4339 = vadd.f32 0.0, %v4338
        %4340 = vmatprep.mubr.bf16.mxu0 %v1326
        %4341 = vmatmul.mubr.bf16.gmra.mxu0 %v1325
        %v4342 = vpop.f32.mrf.mxu0
        %v4343 = vadd.f32 0.0, %v4342
        %v4344 = vpop.f32.mrf.mxu0
        %v4345 = vadd.f32 0.0, %v4344
        %v4346 = vpop.f32.mrf.mxu0
        %v4347 = vadd.f32 0.0, %v4346
        %v4348 = vpop.f32.mrf.mxu0
        %v4349 = vadd.f32 0.0, %v4348
        %4350 = vmatprep.mubr.bf16.mxu0 %v1330
        %4351 = vmatmul.mubr.bf16.gmra.mxu0 %v1329
        %v4352 = vpop.f32.mrf.mxu0
        %v4353 = vadd.f32 0.0, %v4352
        %v4354 = vpop.f32.mrf.mxu0
        %v4355 = vadd.f32 0.0, %v4354
        %v4356 = vpop.f32.mrf.mxu0
        %v4357 = vadd.f32 0.0, %v4356
        %v4358 = vpop.f32.mrf.mxu0
        %v4359 = vadd.f32 0.0, %v4358
        %4360 = vmatprep.mubr.bf16.mxu0 %v1334
        %4361 = vmatmul.mubr.bf16.gmra.mxu0 %v1333
        %v4362 = vpop.f32.mrf.mxu0
        %v4363 = vadd.f32 0.0, %v4362
        %v4364 = vpop.f32.mrf.mxu0
        %v4365 = vadd.f32 0.0, %v4364
        %v4366 = vpop.f32.mrf.mxu0
        %v4367 = vadd.f32 0.0, %v4366
        %v4368 = vpop.f32.mrf.mxu0
        %v4369 = vadd.f32 0.0, %v4368
        %4370 = vmatprep.mubr.bf16.mxu0 %v1338
        %4371 = vmatmul.mubr.bf16.gmra.mxu0 %v1337
        %v4372 = vpop.f32.mrf.mxu0
        %v4373 = vadd.f32 0.0, %v4372
        %v4374 = vpop.f32.mrf.mxu0
        %v4375 = vadd.f32 0.0, %v4374
        %v4376 = vpop.f32.mrf.mxu0
        %v4377 = vadd.f32 0.0, %v4376
        %v4378 = vpop.f32.mrf.mxu0
        %v4379 = vadd.f32 0.0, %v4378
        %4380 = vmatprep.mubr.bf16.mxu0 %v1342
        %4381 = vmatmul.mubr.bf16.gmra.mxu0 %v1341
        %v4382 = vpop.f32.mrf.mxu0
        %v4383 = vadd.f32 0.0, %v4382
        %v4384 = vpop.f32.mrf.mxu0
        %v4385 = vadd.f32 0.0, %v4384
        %v4386 = vpop.f32.mrf.mxu0
        %v4387 = vadd.f32 0.0, %v4386
        %v4388 = vpop.f32.mrf.mxu0
        %v4389 = vadd.f32 0.0, %v4388
        %4390 = vdwg.mxu0
        %4391 = vmatprep.subr.bf16.mxu0 %v4076
        %4392 = vmatpush1.bf16.msra.mxu0 %v4075
        %4393 = vmatprep.subr.bf16.mxu0 %v4073
        %4394 = vmatpush1.bf16.msra.mxu0 %v4072
        %4395 = vmatprep.subr.bf16.mxu0 %v4070
        %4396 = vmatpush1.bf16.msra.mxu0 %v4069
        %4397 = vmatprep.subr.bf16.mxu0 %v4067
        %4398 = vmatpush1.bf16.msra.mxu0 %v4066
        %4399 = vmatprep.subr.bf16.mxu0 %v4064
        %4400 = vmatpush1.bf16.msra.mxu0 %v4063
        %4401 = vmatprep.subr.bf16.mxu0 %v4061
        %4402 = vmatpush1.bf16.msra.mxu0 %v4060
        %4403 = vmatprep.subr.bf16.mxu0 %v4058
        %4404 = vmatpush1.bf16.msra.mxu0 %v4057
        %4405 = vmatprep.subr.bf16.mxu0 %v4055
        %4406 = vmatpush1.bf16.msra.mxu0 %v4054
        %4407 = vmatprep.subr.bf16.mxu0 %v4100
        %4408 = vmatpush2.bf16.msra.mxu0 %v4099
        %4409 = vmatprep.subr.bf16.mxu0 %v4097
        %4410 = vmatpush2.bf16.msra.mxu0 %v4096
        %4411 = vmatprep.subr.bf16.mxu0 %v4094
        %4412 = vmatpush2.bf16.msra.mxu0 %v4093
        %4413 = vmatprep.subr.bf16.mxu0 %v4091
        %4414 = vmatpush2.bf16.msra.mxu0 %v4090
        %4415 = vmatprep.subr.bf16.mxu0 %v4088
        %4416 = vmatpush2.bf16.msra.mxu0 %v4087
        %4417 = vmatprep.subr.bf16.mxu0 %v4085
        %4418 = vmatpush2.bf16.msra.mxu0 %v4084
        %4419 = vmatprep.subr.bf16.mxu0 %v4082
        %4420 = vmatpush2.bf16.msra.mxu0 %v4081
        %4421 = vmatprep.subr.bf16.mxu0 %v4079
        %4422 = vmatpush2.bf16.msra.mxu0 %v4078
        %4423 = vmatprep.mubr.bf16.mxu0 %v1284
        %4424 = vmatmul.mubr.bf16.gmra.mxu0 %v1283
        %v4425 = vpop.f32.mrf.mxu0
        %v4426 = vadd.f32 %v4233, %v4425
        %v4427 = vpop.f32.mrf.mxu0
        %v4428 = vadd.f32 %v4235, %v4427
        %v4429 = vpop.f32.mrf.mxu0
        %v4430 = vadd.f32 %v4237, %v4429
        %v4431 = vpop.f32.mrf.mxu0
        %v4432 = vadd.f32 %v4239, %v4431
        %4433 = vmatprep.mubr.bf16.mxu0 %v1288
        %4434 = vmatmul.mubr.bf16.gmra.mxu0 %v1287
        %v4435 = vpop.f32.mrf.mxu0
        %v4436 = vadd.f32 %v4243, %v4435
        %v4437 = vpop.f32.mrf.mxu0
        %v4438 = vadd.f32 %v4245, %v4437
        %v4439 = vpop.f32.mrf.mxu0
        %v4440 = vadd.f32 %v4247, %v4439
        %v4441 = vpop.f32.mrf.mxu0
        %v4442 = vadd.f32 %v4249, %v4441
        %4443 = vmatprep.mubr.bf16.mxu0 %v1292
        %4444 = vmatmul.mubr.bf16.gmra.mxu0 %v1291
        %v4445 = vpop.f32.mrf.mxu0
        %v4446 = vadd.f32 %v4253, %v4445
        %v4447 = vpop.f32.mrf.mxu0
        %v4448 = vadd.f32 %v4255, %v4447
        %v4449 = vpop.f32.mrf.mxu0
        %v4450 = vadd.f32 %v4257, %v4449
        %v4451 = vpop.f32.mrf.mxu0
        %v4452 = vadd.f32 %v4259, %v4451
        %4453 = vmatprep.mubr.bf16.mxu0 %v1296
        %4454 = vmatmul.mubr.bf16.gmra.mxu0 %v1295
        %v4455 = vpop.f32.mrf.mxu0
        %v4456 = vadd.f32 %v4263, %v4455
        %v4457 = vpop.f32.mrf.mxu0
        %v4458 = vadd.f32 %v4265, %v4457
        %v4459 = vpop.f32.mrf.mxu0
        %v4460 = vadd.f32 %v4267, %v4459
        %v4461 = vpop.f32.mrf.mxu0
        %v4462 = vadd.f32 %v4269, %v4461
        %4463 = vmatprep.mubr.bf16.mxu0 %v1300
        %4464 = vmatmul.mubr.bf16.gmra.mxu0 %v1299
        %v4465 = vpop.f32.mrf.mxu0
        %v4466 = vadd.f32 %v4273, %v4465
        %v4467 = vpop.f32.mrf.mxu0
        %v4468 = vadd.f32 %v4275, %v4467
        %v4469 = vpop.f32.mrf.mxu0
        %v4470 = vadd.f32 %v4277, %v4469
        %v4471 = vpop.f32.mrf.mxu0
        %v4472 = vadd.f32 %v4279, %v4471
        %4473 = vmatprep.mubr.bf16.mxu0 %v1304
        %4474 = vmatmul.mubr.bf16.gmra.mxu0 %v1303
        %v4475 = vpop.f32.mrf.mxu0
        %v4476 = vadd.f32 %v4283, %v4475
        %v4477 = vpop.f32.mrf.mxu0
        %v4478 = vadd.f32 %v4285, %v4477
        %v4479 = vpop.f32.mrf.mxu0
        %v4480 = vadd.f32 %v4287, %v4479
        %v4481 = vpop.f32.mrf.mxu0
        %v4482 = vadd.f32 %v4289, %v4481
        %4483 = vmatprep.mubr.bf16.mxu0 %v1308
        %4484 = vmatmul.mubr.bf16.gmra.mxu0 %v1307
        %v4485 = vpop.f32.mrf.mxu0
        %v4486 = vadd.f32 %v4293, %v4485
        %v4487 = vpop.f32.mrf.mxu0
        %v4488 = vadd.f32 %v4295, %v4487
        %v4489 = vpop.f32.mrf.mxu0
        %v4490 = vadd.f32 %v4297, %v4489
        %v4491 = vpop.f32.mrf.mxu0
        %v4492 = vadd.f32 %v4299, %v4491
        %4493 = vmatprep.mubr.bf16.mxu0 %v1312
        %4494 = vmatmul.mubr.bf16.gmra.mxu0 %v1311
        %v4495 = vpop.f32.mrf.mxu0
        %v4496 = vadd.f32 %v4303, %v4495
        %v4497 = vpop.f32.mrf.mxu0
        %v4498 = vadd.f32 %v4305, %v4497
        %v4499 = vpop.f32.mrf.mxu0
        %v4500 = vadd.f32 %v4307, %v4499
        %v4501 = vpop.f32.mrf.mxu0
        %v4502 = vadd.f32 %v4309, %v4501
        %4503 = vmatprep.mubr.bf16.mxu0 %v1316
        %4504 = vmatmul.mubr.bf16.gmra.mxu0 %v1315
        %v4505 = vpop.f32.mrf.mxu0
        %v4506 = vadd.f32 %v4313, %v4505
        %v4507 = vpop.f32.mrf.mxu0
        %v4508 = vadd.f32 %v4315, %v4507
        %v4509 = vpop.f32.mrf.mxu0
        %v4510 = vadd.f32 %v4317, %v4509
        %v4511 = vpop.f32.mrf.mxu0
        %v4512 = vadd.f32 %v4319, %v4511
        %4513 = vmatprep.mubr.bf16.mxu0 %v1320
        %4514 = vmatmul.mubr.bf16.gmra.mxu0 %v1319
        %v4515 = vpop.f32.mrf.mxu0
        %v4516 = vadd.f32 %v4323, %v4515
        %v4517 = vpop.f32.mrf.mxu0
        %v4518 = vadd.f32 %v4325, %v4517
        %v4519 = vpop.f32.mrf.mxu0
        %v4520 = vadd.f32 %v4327, %v4519
        %v4521 = vpop.f32.mrf.mxu0
        %v4522 = vadd.f32 %v4329, %v4521
        %4523 = vmatprep.mubr.bf16.mxu0 %v1324
        %4524 = vmatmul.mubr.bf16.gmra.mxu0 %v1323
        %v4525 = vpop.f32.mrf.mxu0
        %v4526 = vadd.f32 %v4333, %v4525
        %v4527 = vpop.f32.mrf.mxu0
        %v4528 = vadd.f32 %v4335, %v4527
        %v4529 = vpop.f32.mrf.mxu0
        %v4530 = vadd.f32 %v4337, %v4529
        %v4531 = vpop.f32.mrf.mxu0
        %v4532 = vadd.f32 %v4339, %v4531
        %4533 = vmatprep.mubr.bf16.mxu0 %v1328
        %4534 = vmatmul.mubr.bf16.gmra.mxu0 %v1327
        %v4535 = vpop.f32.mrf.mxu0
        %v4536 = vadd.f32 %v4343, %v4535
        %v4537 = vpop.f32.mrf.mxu0
        %v4538 = vadd.f32 %v4345, %v4537
        %v4539 = vpop.f32.mrf.mxu0
        %v4540 = vadd.f32 %v4347, %v4539
        %v4541 = vpop.f32.mrf.mxu0
        %v4542 = vadd.f32 %v4349, %v4541
        %4543 = vmatprep.mubr.bf16.mxu0 %v1332
        %4544 = vmatmul.mubr.bf16.gmra.mxu0 %v1331
        %v4545 = vpop.f32.mrf.mxu0
        %v4546 = vadd.f32 %v4353, %v4545
        %v4547 = vpop.f32.mrf.mxu0
        %v4548 = vadd.f32 %v4355, %v4547
        %v4549 = vpop.f32.mrf.mxu0
        %v4550 = vadd.f32 %v4357, %v4549
        %v4551 = vpop.f32.mrf.mxu0
        %v4552 = vadd.f32 %v4359, %v4551
        %4553 = vmatprep.mubr.bf16.mxu0 %v1336
        %4554 = vmatmul.mubr.bf16.gmra.mxu0 %v1335
        %v4555 = vpop.f32.mrf.mxu0
        %v4556 = vadd.f32 %v4363, %v4555
        %v4557 = vpop.f32.mrf.mxu0
        %v4558 = vadd.f32 %v4365, %v4557
        %v4559 = vpop.f32.mrf.mxu0
        %v4560 = vadd.f32 %v4367, %v4559
        %v4561 = vpop.f32.mrf.mxu0
        %v4562 = vadd.f32 %v4369, %v4561
        %4563 = vmatprep.mubr.bf16.mxu0 %v1340
        %4564 = vmatmul.mubr.bf16.gmra.mxu0 %v1339
        %v4565 = vpop.f32.mrf.mxu0
        %v4566 = vadd.f32 %v4373, %v4565
        %v4567 = vpop.f32.mrf.mxu0
        %v4568 = vadd.f32 %v4375, %v4567
        %v4569 = vpop.f32.mrf.mxu0
        %v4570 = vadd.f32 %v4377, %v4569
        %v4571 = vpop.f32.mrf.mxu0
        %v4572 = vadd.f32 %v4379, %v4571
        %4573 = vmatprep.mubr.bf16.mxu0 %v1344
        %4574 = vmatmul.mubr.bf16.gmra.mxu0 %v1343
        %v4575 = vpop.f32.mrf.mxu0
        %v4576 = vadd.f32 %v4383, %v4575
        %v4577 = vpop.f32.mrf.mxu0
        %v4578 = vadd.f32 %v4385, %v4577
        %v4579 = vpop.f32.mrf.mxu0
        %v4580 = vadd.f32 %v4387, %v4579
        %v4581 = vpop.f32.mrf.mxu0
        %v4582 = vadd.f32 %v4389, %v4581
        %4583 = vdwg.mxu0
        %4584 = vmatprep.subr.bf16.mxu0 0
        %4585 = vmatpush1.bf16.msra.mxu0 %v4029
        %4586 = vmatprep.subr.bf16.mxu0 0
        %4587 = vmatpush1.bf16.msra.mxu0 %v4026
        %4588 = vmatprep.subr.bf16.mxu0 0
        %4589 = vmatpush1.bf16.msra.mxu0 %v4023
        %4590 = vmatprep.subr.bf16.mxu0 0
        %4591 = vmatpush1.bf16.msra.mxu0 %v4020
        %4592 = vmatprep.subr.bf16.mxu0 0
        %4593 = vmatpush1.bf16.msra.mxu0 %v4017
        %4594 = vmatprep.subr.bf16.mxu0 0
        %4595 = vmatpush1.bf16.msra.mxu0 %v4014
        %4596 = vmatprep.subr.bf16.mxu0 0
        %4597 = vmatpush1.bf16.msra.mxu0 %v4011
        %4598 = vmatprep.subr.bf16.mxu0 0
        %4599 = vmatpush1.bf16.msra.mxu0 %v4008
        %4600 = vmatprep.subr.bf16.mxu0 0
        %4601 = vmatpush2.bf16.msra.mxu0 %v4053
        %4602 = vmatprep.subr.bf16.mxu0 0
        %4603 = vmatpush2.bf16.msra.mxu0 %v4050
        %4604 = vmatprep.subr.bf16.mxu0 0
        %4605 = vmatpush2.bf16.msra.mxu0 %v4047
        %4606 = vmatprep.subr.bf16.mxu0 0
        %4607 = vmatpush2.bf16.msra.mxu0 %v4044
        %4608 = vmatprep.subr.bf16.mxu0 0
        %4609 = vmatpush2.bf16.msra.mxu0 %v4041
        %4610 = vmatprep.subr.bf16.mxu0 0
        %4611 = vmatpush2.bf16.msra.mxu0 %v4038
        %4612 = vmatprep.subr.bf16.mxu0 0
        %4613 = vmatpush2.bf16.msra.mxu0 %v4035
        %4614 = vmatprep.subr.bf16.mxu0 0
        %4615 = vmatpush2.bf16.msra.mxu0 %v4032
        %4616 = vmatprep.mubr.bf16.mxu0 %v1282
        %4617 = vmatmul.mubr.bf16.gmra.mxu0 %v1281
        %v4618 = vpop.f32.mrf.mxu0
        %v4619 = vadd.f32 0.0, %v4618
        %v4620 = vpop.f32.mrf.mxu0
        %v4621 = vpop.f32.mrf.mxu0
        %v4622 = vadd.f32 0.0, %v4621
        %v4623 = vpop.f32.mrf.mxu0
        %4624 = vmatprep.mubr.bf16.mxu0 %v1286
        %4625 = vmatmul.mubr.bf16.gmra.mxu0 %v1285
        %v4626 = vpop.f32.mrf.mxu0
        %v4627 = vadd.f32 0.0, %v4626
        %v4628 = vpop.f32.mrf.mxu0
        %v4629 = vpop.f32.mrf.mxu0
        %v4630 = vadd.f32 0.0, %v4629
        %v4631 = vpop.f32.mrf.mxu0
        %4632 = vmatprep.mubr.bf16.mxu0 %v1290
        %4633 = vmatmul.mubr.bf16.gmra.mxu0 %v1289
        %v4634 = vpop.f32.mrf.mxu0
        %v4635 = vadd.f32 0.0, %v4634
        %v4636 = vpop.f32.mrf.mxu0
        %v4637 = vpop.f32.mrf.mxu0
        %v4638 = vadd.f32 0.0, %v4637
        %v4639 = vpop.f32.mrf.mxu0
        %4640 = vmatprep.mubr.bf16.mxu0 %v1294
        %4641 = vmatmul.mubr.bf16.gmra.mxu0 %v1293
        %v4642 = vpop.f32.mrf.mxu0
        %v4643 = vadd.f32 0.0, %v4642
        %v4644 = vpop.f32.mrf.mxu0
        %v4645 = vpop.f32.mrf.mxu0
        %v4646 = vadd.f32 0.0, %v4645
        %v4647 = vpop.f32.mrf.mxu0
        %4648 = vmatprep.mubr.bf16.mxu0 %v1298
        %4649 = vmatmul.mubr.bf16.gmra.mxu0 %v1297
        %v4650 = vpop.f32.mrf.mxu0
        %v4651 = vadd.f32 0.0, %v4650
        %v4652 = vpop.f32.mrf.mxu0
        %v4653 = vpop.f32.mrf.mxu0
        %v4654 = vadd.f32 0.0, %v4653
        %v4655 = vpop.f32.mrf.mxu0
        %4656 = vmatprep.mubr.bf16.mxu0 %v1302
        %4657 = vmatmul.mubr.bf16.gmra.mxu0 %v1301
        %v4658 = vpop.f32.mrf.mxu0
        %v4659 = vadd.f32 0.0, %v4658
        %v4660 = vpop.f32.mrf.mxu0
        %v4661 = vpop.f32.mrf.mxu0
        %v4662 = vadd.f32 0.0, %v4661
        %v4663 = vpop.f32.mrf.mxu0
        %4664 = vmatprep.mubr.bf16.mxu0 %v1306
        %4665 = vmatmul.mubr.bf16.gmra.mxu0 %v1305
        %v4666 = vpop.f32.mrf.mxu0
        %v4667 = vadd.f32 0.0, %v4666
        %v4668 = vpop.f32.mrf.mxu0
        %v4669 = vpop.f32.mrf.mxu0
        %v4670 = vadd.f32 0.0, %v4669
        %v4671 = vpop.f32.mrf.mxu0
        %4672 = vmatprep.mubr.bf16.mxu0 %v1310
        %4673 = vmatmul.mubr.bf16.gmra.mxu0 %v1309
        %v4674 = vpop.f32.mrf.mxu0
        %v4675 = vadd.f32 0.0, %v4674
        %v4676 = vpop.f32.mrf.mxu0
        %v4677 = vpop.f32.mrf.mxu0
        %v4678 = vadd.f32 0.0, %v4677
        %v4679 = vpop.f32.mrf.mxu0
        %4680 = vmatprep.mubr.bf16.mxu0 %v1314
        %4681 = vmatmul.mubr.bf16.gmra.mxu0 %v1313
        %v4682 = vpop.f32.mrf.mxu0
        %v4683 = vadd.f32 0.0, %v4682
        %v4684 = vpop.f32.mrf.mxu0
        %v4685 = vpop.f32.mrf.mxu0
        %v4686 = vadd.f32 0.0, %v4685
        %v4687 = vpop.f32.mrf.mxu0
        %4688 = vmatprep.mubr.bf16.mxu0 %v1318
        %4689 = vmatmul.mubr.bf16.gmra.mxu0 %v1317
        %v4690 = vpop.f32.mrf.mxu0
        %v4691 = vadd.f32 0.0, %v4690
        %v4692 = vpop.f32.mrf.mxu0
        %v4693 = vpop.f32.mrf.mxu0
        %v4694 = vadd.f32 0.0, %v4693
        %v4695 = vpop.f32.mrf.mxu0
        %4696 = vmatprep.mubr.bf16.mxu0 %v1322
        %4697 = vmatmul.mubr.bf16.gmra.mxu0 %v1321
        %v4698 = vpop.f32.mrf.mxu0
        %v4699 = vadd.f32 0.0, %v4698
        %v4700 = vpop.f32.mrf.mxu0
        %v4701 = vpop.f32.mrf.mxu0
        %v4702 = vadd.f32 0.0, %v4701
        %v4703 = vpop.f32.mrf.mxu0
        %4704 = vmatprep.mubr.bf16.mxu0 %v1326
        %4705 = vmatmul.mubr.bf16.gmra.mxu0 %v1325
        %v4706 = vpop.f32.mrf.mxu0
        %v4707 = vadd.f32 0.0, %v4706
        %v4708 = vpop.f32.mrf.mxu0
        %v4709 = vpop.f32.mrf.mxu0
        %v4710 = vadd.f32 0.0, %v4709
        %v4711 = vpop.f32.mrf.mxu0
        %4712 = vmatprep.mubr.bf16.mxu0 %v1330
        %4713 = vmatmul.mubr.bf16.gmra.mxu0 %v1329
        %v4714 = vpop.f32.mrf.mxu0
        %v4715 = vadd.f32 0.0, %v4714
        %v4716 = vpop.f32.mrf.mxu0
        %v4717 = vpop.f32.mrf.mxu0
        %v4718 = vadd.f32 0.0, %v4717
        %v4719 = vpop.f32.mrf.mxu0
        %4720 = vmatprep.mubr.bf16.mxu0 %v1334
        %4721 = vmatmul.mubr.bf16.gmra.mxu0 %v1333
        %v4722 = vpop.f32.mrf.mxu0
        %v4723 = vadd.f32 0.0, %v4722
        %v4724 = vpop.f32.mrf.mxu0
        %v4725 = vpop.f32.mrf.mxu0
        %v4726 = vadd.f32 0.0, %v4725
        %v4727 = vpop.f32.mrf.mxu0
        %4728 = vmatprep.mubr.bf16.mxu0 %v1338
        %4729 = vmatmul.mubr.bf16.gmra.mxu0 %v1337
        %v4730 = vpop.f32.mrf.mxu0
        %v4731 = vadd.f32 0.0, %v4730
        %v4732 = vpop.f32.mrf.mxu0
        %v4733 = vpop.f32.mrf.mxu0
        %v4734 = vadd.f32 0.0, %v4733
        %v4735 = vpop.f32.mrf.mxu0
        %4736 = vmatprep.mubr.bf16.mxu0 %v1342
        %4737 = vmatmul.mubr.bf16.gmra.mxu0 %v1341
        %v4738 = vpop.f32.mrf.mxu0
        %v4739 = vadd.f32 0.0, %v4738
        %v4740 = vpop.f32.mrf.mxu0
        %v4741 = vpop.f32.mrf.mxu0
        %v4742 = vadd.f32 0.0, %v4741
        %v4743 = vpop.f32.mrf.mxu0
        %4744 = vdwg.mxu0
        %4745 = vmatprep.subr.bf16.mxu0 0
        %4746 = vmatpush1.bf16.msra.mxu0 %v4077
        %4747 = vmatprep.subr.bf16.mxu0 0
        %4748 = vmatpush1.bf16.msra.mxu0 %v4074
        %4749 = vmatprep.subr.bf16.mxu0 0
        %4750 = vmatpush1.bf16.msra.mxu0 %v4071
        %4751 = vmatprep.subr.bf16.mxu0 0
        %4752 = vmatpush1.bf16.msra.mxu0 %v4068
        %4753 = vmatprep.subr.bf16.mxu0 0
        %4754 = vmatpush1.bf16.msra.mxu0 %v4065
        %4755 = vmatprep.subr.bf16.mxu0 0
        %4756 = vmatpush1.bf16.msra.mxu0 %v4062
        %4757 = vmatprep.subr.bf16.mxu0 0
        %4758 = vmatpush1.bf16.msra.mxu0 %v4059
        %4759 = vmatprep.subr.bf16.mxu0 0
        %4760 = vmatpush1.bf16.msra.mxu0 %v4056
        %4761 = vmatprep.subr.bf16.mxu0 0
        %4762 = vmatpush2.bf16.msra.mxu0 %v4101
        %4763 = vmatprep.subr.bf16.mxu0 0
        %4764 = vmatpush2.bf16.msra.mxu0 %v4098
        %4765 = vmatprep.subr.bf16.mxu0 0
        %4766 = vmatpush2.bf16.msra.mxu0 %v4095
        %4767 = vmatprep.subr.bf16.mxu0 0
        %4768 = vmatpush2.bf16.msra.mxu0 %v4092
        %4769 = vmatprep.subr.bf16.mxu0 0
        %4770 = vmatpush2.bf16.msra.mxu0 %v4089
        %4771 = vmatprep.subr.bf16.mxu0 0
        %4772 = vmatpush2.bf16.msra.mxu0 %v4086
        %4773 = vmatprep.subr.bf16.mxu0 0
        %4774 = vmatpush2.bf16.msra.mxu0 %v4083
        %4775 = vmatprep.subr.bf16.mxu0 0
        %4776 = vmatpush2.bf16.msra.mxu0 %v4080
        %4777 = vmatprep.mubr.bf16.mxu0 %v1284
        %4778 = vmatmul.mubr.bf16.gmra.mxu0 %v1283
        %v4779 = vpop.f32.mrf.mxu0
        %v4780 = vadd.f32 %v4619, %v4779
        %v4781 = vpop.f32.mrf.mxu0
        %v4782 = vpop.f32.mrf.mxu0
        %v4783 = vadd.f32 %v4622, %v4782
        %v4784 = vpop.f32.mrf.mxu0
        %4785 = vmatprep.mubr.bf16.mxu0 %v1288
        %4786 = vmatmul.mubr.bf16.gmra.mxu0 %v1287
        %v4787 = vpop.f32.mrf.mxu0
        %v4788 = vadd.f32 %v4627, %v4787
        %v4789 = vpop.f32.mrf.mxu0
        %v4790 = vpop.f32.mrf.mxu0
        %v4791 = vadd.f32 %v4630, %v4790
        %v4792 = vpop.f32.mrf.mxu0
        %4793 = vmatprep.mubr.bf16.mxu0 %v1292
        %4794 = vmatmul.mubr.bf16.gmra.mxu0 %v1291
        %v4795 = vpop.f32.mrf.mxu0
        %v4796 = vadd.f32 %v4635, %v4795
        %v4797 = vpop.f32.mrf.mxu0
        %v4798 = vpop.f32.mrf.mxu0
        %v4799 = vadd.f32 %v4638, %v4798
        %v4800 = vpop.f32.mrf.mxu0
        %4801 = vmatprep.mubr.bf16.mxu0 %v1296
        %4802 = vmatmul.mubr.bf16.gmra.mxu0 %v1295
        %v4803 = vpop.f32.mrf.mxu0
        %v4804 = vadd.f32 %v4643, %v4803
        %v4805 = vpop.f32.mrf.mxu0
        %v4806 = vpop.f32.mrf.mxu0
        %v4807 = vadd.f32 %v4646, %v4806
        %v4808 = vpop.f32.mrf.mxu0
        %4809 = vmatprep.mubr.bf16.mxu0 %v1300
        %4810 = vmatmul.mubr.bf16.gmra.mxu0 %v1299
        %v4811 = vpop.f32.mrf.mxu0
        %v4812 = vadd.f32 %v4651, %v4811
        %v4813 = vpop.f32.mrf.mxu0
        %v4814 = vpop.f32.mrf.mxu0
        %v4815 = vadd.f32 %v4654, %v4814
        %v4816 = vpop.f32.mrf.mxu0
        %4817 = vmatprep.mubr.bf16.mxu0 %v1304
        %4818 = vmatmul.mubr.bf16.gmra.mxu0 %v1303
        %v4819 = vpop.f32.mrf.mxu0
        %v4820 = vadd.f32 %v4659, %v4819
        %v4821 = vpop.f32.mrf.mxu0
        %v4822 = vpop.f32.mrf.mxu0
        %v4823 = vadd.f32 %v4662, %v4822
        %v4824 = vpop.f32.mrf.mxu0
        %4825 = vmatprep.mubr.bf16.mxu0 %v1308
        %4826 = vmatmul.mubr.bf16.gmra.mxu0 %v1307
        %v4827 = vpop.f32.mrf.mxu0
        %v4828 = vadd.f32 %v4667, %v4827
        %v4829 = vpop.f32.mrf.mxu0
        %v4830 = vpop.f32.mrf.mxu0
        %v4831 = vadd.f32 %v4670, %v4830
        %v4832 = vpop.f32.mrf.mxu0
        %4833 = vmatprep.mubr.bf16.mxu0 %v1312
        %4834 = vmatmul.mubr.bf16.gmra.mxu0 %v1311
        %v4835 = vpop.f32.mrf.mxu0
        %v4836 = vadd.f32 %v4675, %v4835
        %v4837 = vpop.f32.mrf.mxu0
        %v4838 = vpop.f32.mrf.mxu0
        %v4839 = vadd.f32 %v4678, %v4838
        %v4840 = vpop.f32.mrf.mxu0
        %4841 = vmatprep.mubr.bf16.mxu0 %v1316
        %4842 = vmatmul.mubr.bf16.gmra.mxu0 %v1315
        %v4843 = vpop.f32.mrf.mxu0
        %v4844 = vadd.f32 %v4683, %v4843
        %v4845 = vpop.f32.mrf.mxu0
        %v4846 = vpop.f32.mrf.mxu0
        %v4847 = vadd.f32 %v4686, %v4846
        %v4848 = vpop.f32.mrf.mxu0
        %4849 = vmatprep.mubr.bf16.mxu0 %v1320
        %4850 = vmatmul.mubr.bf16.gmra.mxu0 %v1319
        %v4851 = vpop.f32.mrf.mxu0
        %v4852 = vadd.f32 %v4691, %v4851
        %v4853 = vpop.f32.mrf.mxu0
        %v4854 = vpop.f32.mrf.mxu0
        %v4855 = vadd.f32 %v4694, %v4854
        %v4856 = vpop.f32.mrf.mxu0
        %4857 = vmatprep.mubr.bf16.mxu0 %v1324
        %4858 = vmatmul.mubr.bf16.gmra.mxu0 %v1323
        %v4859 = vpop.f32.mrf.mxu0
        %v4860 = vadd.f32 %v4699, %v4859
        %v4861 = vpop.f32.mrf.mxu0
        %v4862 = vpop.f32.mrf.mxu0
        %v4863 = vadd.f32 %v4702, %v4862
        %v4864 = vpop.f32.mrf.mxu0
        %4865 = vmatprep.mubr.bf16.mxu0 %v1328
        %4866 = vmatmul.mubr.bf16.gmra.mxu0 %v1327
        %v4867 = vpop.f32.mrf.mxu0
        %v4868 = vadd.f32 %v4707, %v4867
        %v4869 = vpop.f32.mrf.mxu0
        %v4870 = vpop.f32.mrf.mxu0
        %v4871 = vadd.f32 %v4710, %v4870
        %v4872 = vpop.f32.mrf.mxu0
        %4873 = vmatprep.mubr.bf16.mxu0 %v1332
        %4874 = vmatmul.mubr.bf16.gmra.mxu0 %v1331
        %v4875 = vpop.f32.mrf.mxu0
        %v4876 = vadd.f32 %v4715, %v4875
        %v4877 = vpop.f32.mrf.mxu0
        %v4878 = vpop.f32.mrf.mxu0
        %v4879 = vadd.f32 %v4718, %v4878
        %v4880 = vpop.f32.mrf.mxu0
        %4881 = vmatprep.mubr.bf16.mxu0 %v1336
        %4882 = vmatmul.mubr.bf16.gmra.mxu0 %v1335
        %v4883 = vpop.f32.mrf.mxu0
        %v4884 = vadd.f32 %v4723, %v4883
        %v4885 = vpop.f32.mrf.mxu0
        %v4886 = vpop.f32.mrf.mxu0
        %v4887 = vadd.f32 %v4726, %v4886
        %v4888 = vpop.f32.mrf.mxu0
        %4889 = vmatprep.mubr.bf16.mxu0 %v1340
        %4890 = vmatmul.mubr.bf16.gmra.mxu0 %v1339
        %v4891 = vpop.f32.mrf.mxu0
        %v4892 = vadd.f32 %v4731, %v4891
        %v4893 = vpop.f32.mrf.mxu0
        %v4894 = vpop.f32.mrf.mxu0
        %v4895 = vadd.f32 %v4734, %v4894
        %v4896 = vpop.f32.mrf.mxu0
        %4897 = vmatprep.mubr.bf16.mxu0 %v1344
        %4898 = vmatmul.mubr.bf16.gmra.mxu0 %v1343
        %v4899 = vpop.f32.mrf.mxu0
        %v4900 = vadd.f32 %v4739, %v4899
        %v4901 = vpop.f32.mrf.mxu0
        %v4902 = vpop.f32.mrf.mxu0
        %v4903 = vadd.f32 %v4742, %v4902
        %v4904 = vpop.f32.mrf.mxu0
        %4905 = vdwg.mxu0
        %v4906 = vmul.f32 %v4426, %v1345
        %v4907 = vmul.f32 %v4430, %v1346
        %v4908 = vmul.f32 %v4436, %v1347
        %v4909 = vmul.f32 %v4440, %v1348
        %v4910 = vmul.f32 %v4446, %v1349
        %v4911 = vmul.f32 %v4450, %v1350
        %v4912 = vmul.f32 %v4456, %v1351
        %v4913 = vmul.f32 %v4460, %v1352
        %v4914 = vmul.f32 %v4466, %v1353
        %v4915 = vmul.f32 %v4470, %v1354
        %v4916 = vmul.f32 %v4476, %v1355
        %v4917 = vmul.f32 %v4480, %v1356
        %v4918 = vmul.f32 %v4486, %v1357
        %v4919 = vmul.f32 %v4490, %v1358
        %v4920 = vmul.f32 %v4496, %v1359
        %v4921 = vmul.f32 %v4500, %v1360
        %v4922 = vmul.f32 %v4506, %v1361
        %v4923 = vmul.f32 %v4510, %v1362
        %v4924 = vmul.f32 %v4516, %v1363
        %v4925 = vmul.f32 %v4520, %v1364
        %v4926 = vmul.f32 %v4526, %v1365
        %v4927 = vmul.f32 %v4530, %v1366
        %v4928 = vmul.f32 %v4536, %v1367
        %v4929 = vmul.f32 %v4540, %v1368
        %v4930 = vmul.f32 %v4546, %v1369
        %v4931 = vmul.f32 %v4550, %v1370
        %v4932 = vmul.f32 %v4556, %v1371
        %v4933 = vmul.f32 %v4560, %v1372
        %v4934 = vmul.f32 %v4566, %v1373
        %v4935 = vmul.f32 %v4570, %v1374
        %v4936 = vmul.f32 %v4576, %v1375
        %v4937 = vmul.f32 %v4580, %v1376
        %4938 = vrot.lane.b32.xlu0 %v4426, 64
        %v4939 = vpop.permute.xlu0 %4938
        %4940 = vrot.lane.b32.xlu0 %v4430, 64
        %v4941 = vpop.permute.xlu0 %4940
        %4942 = vrot.lane.b32.xlu0 %v4436, 64
        %v4943 = vpop.permute.xlu0 %4942
        %4944 = vrot.lane.b32.xlu0 %v4440, 64
        %v4945 = vpop.permute.xlu0 %4944
        %4946 = vrot.lane.b32.xlu0 %v4446, 64
        %v4947 = vpop.permute.xlu0 %4946
        %4948 = vrot.lane.b32.xlu0 %v4450, 64
        %v4949 = vpop.permute.xlu0 %4948
        %4950 = vrot.lane.b32.xlu0 %v4456, 64
        %v4951 = vpop.permute.xlu0 %4950
        %4952 = vrot.lane.b32.xlu0 %v4460, 64
        %v4953 = vpop.permute.xlu0 %4952
        %4954 = vrot.lane.b32.xlu0 %v4466, 64
        %v4955 = vpop.permute.xlu0 %4954
        %4956 = vrot.lane.b32.xlu0 %v4470, 64
        %v4957 = vpop.permute.xlu0 %4956
        %4958 = vrot.lane.b32.xlu0 %v4476, 64
        %v4959 = vpop.permute.xlu0 %4958
        %4960 = vrot.lane.b32.xlu0 %v4480, 64
        %v4961 = vpop.permute.xlu0 %4960
        %4962 = vrot.lane.b32.xlu0 %v4486, 64
        %v4963 = vpop.permute.xlu0 %4962
        %4964 = vrot.lane.b32.xlu0 %v4490, 64
        %v4965 = vpop.permute.xlu0 %4964
        %4966 = vrot.lane.b32.xlu0 %v4496, 64
        %v4967 = vpop.permute.xlu0 %4966
        %4968 = vrot.lane.b32.xlu0 %v4500, 64
        %v4969 = vpop.permute.xlu0 %4968
        %4970 = vrot.lane.b32.xlu0 %v4506, 64
        %v4971 = vpop.permute.xlu0 %4970
        %4972 = vrot.lane.b32.xlu0 %v4510, 64
        %v4973 = vpop.permute.xlu0 %4972
        %4974 = vrot.lane.b32.xlu0 %v4516, 64
        %v4975 = vpop.permute.xlu0 %4974
        %4976 = vrot.lane.b32.xlu0 %v4520, 64
        %v4977 = vpop.permute.xlu0 %4976
        %4978 = vrot.lane.b32.xlu0 %v4526, 64
        %v4979 = vpop.permute.xlu0 %4978
        %4980 = vrot.lane.b32.xlu0 %v4530, 64
        %v4981 = vpop.permute.xlu0 %4980
        %4982 = vrot.lane.b32.xlu0 %v4536, 64
        %v4983 = vpop.permute.xlu0 %4982
        %4984 = vrot.lane.b32.xlu0 %v4540, 64
        %v4985 = vpop.permute.xlu0 %4984
        %4986 = vrot.lane.b32.xlu0 %v4546, 64
        %v4987 = vpop.permute.xlu0 %4986
        %4988 = vrot.lane.b32.xlu0 %v4550, 64
        %v4989 = vpop.permute.xlu0 %4988
        %4990 = vrot.lane.b32.xlu0 %v4556, 64
        %v4991 = vpop.permute.xlu0 %4990
        %4992 = vrot.lane.b32.xlu0 %v4560, 64
        %v4993 = vpop.permute.xlu0 %4992
        %4994 = vrot.lane.b32.xlu0 %v4566, 64
        %v4995 = vpop.permute.xlu0 %4994
        %4996 = vrot.lane.b32.xlu0 %v4570, 64
        %v4997 = vpop.permute.xlu0 %4996
        %4998 = vrot.lane.b32.xlu0 %v4576, 64
        %v4999 = vpop.permute.xlu0 %4998
        %5000 = vrot.lane.b32.xlu0 %v4580, 64
        %v5001 = vpop.permute.xlu0 %5000
        %v5002 = vmul.f32 %v4939, %v1377
        %v5003 = vmul.f32 %v4941, %v1378
        %v5004 = vmul.f32 %v4943, %v1379
        %v5005 = vmul.f32 %v4945, %v1380
        %v5006 = vmul.f32 %v4947, %v1381
        %v5007 = vmul.f32 %v4949, %v1382
        %v5008 = vmul.f32 %v4951, %v1383
        %v5009 = vmul.f32 %v4953, %v1384
        %v5010 = vmul.f32 %v4955, %v1385
        %v5011 = vmul.f32 %v4957, %v1386
        %v5012 = vmul.f32 %v4959, %v1387
        %v5013 = vmul.f32 %v4961, %v1388
        %v5014 = vmul.f32 %v4963, %v1389
        %v5015 = vmul.f32 %v4965, %v1390
        %v5016 = vmul.f32 %v4967, %v1391
        %v5017 = vmul.f32 %v4969, %v1392
        %v5018 = vmul.f32 %v4971, %v1393
        %v5019 = vmul.f32 %v4973, %v1394
        %v5020 = vmul.f32 %v4975, %v1395
        %v5021 = vmul.f32 %v4977, %v1396
        %v5022 = vmul.f32 %v4979, %v1397
        %v5023 = vmul.f32 %v4981, %v1398
        %v5024 = vmul.f32 %v4983, %v1399
        %v5025 = vmul.f32 %v4985, %v1400
        %v5026 = vmul.f32 %v4987, %v1401
        %v5027 = vmul.f32 %v4989, %v1402
        %v5028 = vmul.f32 %v4991, %v1403
        %v5029 = vmul.f32 %v4993, %v1404
        %v5030 = vmul.f32 %v4995, %v1405
        %v5031 = vmul.f32 %v4997, %v1406
        %v5032 = vmul.f32 %v4999, %v1407
        %v5033 = vmul.f32 %v5001, %v1408
        %v5034 = vadd.f32 %v4906, %v5002
        %v5035 = vadd.f32 %v4907, %v5003
        %v5036 = vadd.f32 %v4908, %v5004
        %v5037 = vadd.f32 %v4909, %v5005
        %v5038 = vadd.f32 %v4910, %v5006
        %v5039 = vadd.f32 %v4911, %v5007
        %v5040 = vadd.f32 %v4912, %v5008
        %v5041 = vadd.f32 %v4913, %v5009
        %v5042 = vadd.f32 %v4914, %v5010
        %v5043 = vadd.f32 %v4915, %v5011
        %v5044 = vadd.f32 %v4916, %v5012
        %v5045 = vadd.f32 %v4917, %v5013
        %v5046 = vadd.f32 %v4918, %v5014
        %v5047 = vadd.f32 %v4919, %v5015
        %v5048 = vadd.f32 %v4920, %v5016
        %v5049 = vadd.f32 %v4921, %v5017
        %v5050 = vadd.f32 %v4922, %v5018
        %v5051 = vadd.f32 %v4923, %v5019
        %v5052 = vadd.f32 %v4924, %v5020
        %v5053 = vadd.f32 %v4925, %v5021
        %v5054 = vadd.f32 %v4926, %v5022
        %v5055 = vadd.f32 %v4927, %v5023
        %v5056 = vadd.f32 %v4928, %v5024
        %v5057 = vadd.f32 %v4929, %v5025
        %v5058 = vadd.f32 %v4930, %v5026
        %v5059 = vadd.f32 %v4931, %v5027
        %v5060 = vadd.f32 %v4932, %v5028
        %v5061 = vadd.f32 %v4933, %v5029
        %v5062 = vadd.f32 %v4934, %v5030
        %v5063 = vadd.f32 %v4935, %v5031
        %v5064 = vadd.f32 %v4936, %v5032
        %v5065 = vadd.f32 %v4937, %v5033
        %v5066 = vpack.c.bf16 %v5035, %v5034
        %v5067 = vpack.c.bf16 %v5037, %v5036
        %v5068 = vpack.c.bf16 %v5039, %v5038
        %v5069 = vpack.c.bf16 %v5041, %v5040
        %v5070 = vpack.c.bf16 %v5043, %v5042
        %v5071 = vpack.c.bf16 %v5045, %v5044
        %v5072 = vpack.c.bf16 %v5047, %v5046
        %v5073 = vpack.c.bf16 %v5049, %v5048
        %v5074 = vpack.c.bf16 %v5051, %v5050
        %v5075 = vpack.c.bf16 %v5053, %v5052
        %v5076 = vpack.c.bf16 %v5055, %v5054
        %v5077 = vpack.c.bf16 %v5057, %v5056
        %v5078 = vpack.c.bf16 %v5059, %v5058
        %v5079 = vpack.c.bf16 %v5061, %v5060
        %v5080 = vpack.c.bf16 %v5063, %v5062
        %v5081 = vpack.c.bf16 %v5065, %v5064
        %v5098 = vunpack.c.l.b16 %v5066
        %v5099 = vunpack.c.h.b16 %v5066
        %v5100 = vunpack.c.l.b16 %v5067
        %v5101 = vunpack.c.h.b16 %v5067
        %v5102 = vunpack.c.l.b16 %v5068
        %v5103 = vunpack.c.h.b16 %v5068
        %v5104 = vunpack.c.l.b16 %v5069
        %v5105 = vunpack.c.h.b16 %v5069
        %v5106 = vunpack.c.l.b16 %v5070
        %v5107 = vunpack.c.h.b16 %v5070
        %v5108 = vunpack.c.l.b16 %v5071
        %v5109 = vunpack.c.h.b16 %v5071
        %v5110 = vunpack.c.l.b16 %v5072
        %v5111 = vunpack.c.h.b16 %v5072
        %v5112 = vunpack.c.l.b16 %v5073
        %v5113 = vunpack.c.h.b16 %v5073
        %v5114 = vunpack.c.l.b16 %v5074
        %v5115 = vunpack.c.h.b16 %v5074
        %v5116 = vunpack.c.l.b16 %v5075
        %v5117 = vunpack.c.h.b16 %v5075
        %v5118 = vunpack.c.l.b16 %v5076
        %v5119 = vunpack.c.h.b16 %v5076
        %v5120 = vunpack.c.l.b16 %v5077
        %v5121 = vunpack.c.h.b16 %v5077
        %v5122 = vunpack.c.l.b16 %v5078
        %v5123 = vunpack.c.h.b16 %v5078
        %v5124 = vunpack.c.l.b16 %v5079
        %v5125 = vunpack.c.h.b16 %v5079
        %v5126 = vunpack.c.l.b16 %v5080
        %v5127 = vunpack.c.h.b16 %v5080
        %v5128 = vunpack.c.l.b16 %v5081
        %v5129 = vunpack.c.h.b16 %v5081
        %v5130 = vpack.c.b16 %v5098, %v5098
        %v5131 = vpack.c.b16 %v5099, %v5099
        %v5132 = vpack.c.b16 %v5100, %v5100
        %v5133 = vpack.c.b16 %v5101, %v5101
        %v5134 = vpack.c.b16 %v5102, %v5102
        %v5135 = vpack.c.b16 %v5103, %v5103
        %v5136 = vpack.c.b16 %v5104, %v5104
        %v5137 = vpack.c.b16 %v5105, %v5105
        %v5138 = vpack.c.b16 %v5106, %v5106
        %v5139 = vpack.c.b16 %v5107, %v5107
        %v5140 = vpack.c.b16 %v5108, %v5108
        %v5141 = vpack.c.b16 %v5109, %v5109
        %v5142 = vpack.c.b16 %v5110, %v5110
        %v5143 = vpack.c.b16 %v5111, %v5111
        %v5144 = vpack.c.b16 %v5112, %v5112
        %v5145 = vpack.c.b16 %v5113, %v5113
        %v5146 = vpack.c.b16 %v5114, %v5114
        %v5147 = vpack.c.b16 %v5115, %v5115
        %v5148 = vpack.c.b16 %v5116, %v5116
        %v5149 = vpack.c.b16 %v5117, %v5117
        %v5150 = vpack.c.b16 %v5118, %v5118
        %v5151 = vpack.c.b16 %v5119, %v5119
        %v5152 = vpack.c.b16 %v5120, %v5120
        %v5153 = vpack.c.b16 %v5121, %v5121
        %v5154 = vpack.c.b16 %v5122, %v5122
        %v5155 = vpack.c.b16 %v5123, %v5123
        %v5156 = vpack.c.b16 %v5124, %v5124
        %v5157 = vpack.c.b16 %v5125, %v5125
        %v5158 = vpack.c.b16 %v5126, %v5126
        %v5159 = vpack.c.b16 %v5127, %v5127
        %v5160 = vpack.c.b16 %v5128, %v5128
        %v5161 = vpack.c.b16 %v5129, %v5129
        %s5194 = scalar_lea.vmem %s464, 128 [#allocation11]
        %5195 = vst [vmem:[%s5194] sm:$0xf] %v5130
        %5196 = vst [vmem:[%s5194 + $0x4] sm:$0xf] %v5131
        %5197 = vst [vmem:[%s5194 + $0x8] sm:$0xf] %v5132
        %5198 = vst [vmem:[%s5194 + $0xc] sm:$0xf] %v5133
        %5199 = vst [vmem:[%s5194 + $0x10] sm:$0xf] %v5134
        %5200 = vst [vmem:[%s5194 + $0x14] sm:$0xf] %v5135
        %5201 = vst [vmem:[%s5194 + $0x18] sm:$0xf] %v5136
        %5202 = vst [vmem:[%s5194 + $0x1c] sm:$0xf] %v5137
        %5203 = vst [vmem:[%s5194 + $0x20] sm:$0xf] %v5138
        %5204 = vst [vmem:[%s5194 + $0x24] sm:$0xf] %v5139
        %5205 = vst [vmem:[%s5194 + $0x28] sm:$0xf] %v5140
        %5206 = vst [vmem:[%s5194 + $0x2c] sm:$0xf] %v5141
        %5207 = vst [vmem:[%s5194 + $0x30] sm:$0xf] %v5142
        %5208 = vst [vmem:[%s5194 + $0x34] sm:$0xf] %v5143
        %5209 = vst [vmem:[%s5194 + $0x38] sm:$0xf] %v5144
        %5210 = vst [vmem:[%s5194 + $0x3c] sm:$0xf] %v5145
        %5211 = vst [vmem:[%s5194 + $0x40] sm:$0xf] %v5146
        %5212 = vst [vmem:[%s5194 + $0x44] sm:$0xf] %v5147
        %5213 = vst [vmem:[%s5194 + $0x48] sm:$0xf] %v5148
        %5214 = vst [vmem:[%s5194 + $0x4c] sm:$0xf] %v5149
        %5215 = vst [vmem:[%s5194 + $0x50] sm:$0xf] %v5150
        %5216 = vst [vmem:[%s5194 + $0x54] sm:$0xf] %v5151
        %5217 = vst [vmem:[%s5194 + $0x58] sm:$0xf] %v5152
        %5218 = vst [vmem:[%s5194 + $0x5c] sm:$0xf] %v5153
        %5219 = vst [vmem:[%s5194 + $0x60] sm:$0xf] %v5154
        %5220 = vst [vmem:[%s5194 + $0x64] sm:$0xf] %v5155
        %5221 = vst [vmem:[%s5194 + $0x68] sm:$0xf] %v5156
        %5222 = vst [vmem:[%s5194 + $0x6c] sm:$0xf] %v5157
        %5223 = vst [vmem:[%s5194 + $0x70] sm:$0xf] %v5158
        %5224 = vst [vmem:[%s5194 + $0x74] sm:$0xf] %v5159
        %5225 = vst [vmem:[%s5194 + $0x78] sm:$0xf] %v5160
        %5226 = vst [vmem:[%s5194 + $0x7c] sm:$0xf] %v5161
        %v5227 = vmul.f32 %v4428, %v1345
        %v5228 = vmul.f32 %v4432, %v1346
        %v5229 = vmul.f32 %v4438, %v1347
        %v5230 = vmul.f32 %v4442, %v1348
        %v5231 = vmul.f32 %v4448, %v1349
        %v5232 = vmul.f32 %v4452, %v1350
        %v5233 = vmul.f32 %v4458, %v1351
        %v5234 = vmul.f32 %v4462, %v1352
        %v5235 = vmul.f32 %v4468, %v1353
        %v5236 = vmul.f32 %v4472, %v1354
        %v5237 = vmul.f32 %v4478, %v1355
        %v5238 = vmul.f32 %v4482, %v1356
        %v5239 = vmul.f32 %v4488, %v1357
        %v5240 = vmul.f32 %v4492, %v1358
        %v5241 = vmul.f32 %v4498, %v1359
        %v5242 = vmul.f32 %v4502, %v1360
        %v5243 = vmul.f32 %v4508, %v1361
        %v5244 = vmul.f32 %v4512, %v1362
        %v5245 = vmul.f32 %v4518, %v1363
        %v5246 = vmul.f32 %v4522, %v1364
        %v5247 = vmul.f32 %v4528, %v1365
        %v5248 = vmul.f32 %v4532, %v1366
        %v5249 = vmul.f32 %v4538, %v1367
        %v5250 = vmul.f32 %v4542, %v1368
        %v5251 = vmul.f32 %v4548, %v1369
        %v5252 = vmul.f32 %v4552, %v1370
        %v5253 = vmul.f32 %v4558, %v1371
        %v5254 = vmul.f32 %v4562, %v1372
        %v5255 = vmul.f32 %v4568, %v1373
        %v5256 = vmul.f32 %v4572, %v1374
        %v5257 = vmul.f32 %v4578, %v1375
        %v5258 = vmul.f32 %v4582, %v1376
        %5259 = vrot.lane.b32.xlu0 %v4428, 64
        %v5260 = vpop.permute.xlu0 %5259
        %5261 = vrot.lane.b32.xlu0 %v4432, 64
        %v5262 = vpop.permute.xlu0 %5261
        %5263 = vrot.lane.b32.xlu0 %v4438, 64
        %v5264 = vpop.permute.xlu0 %5263
        %5265 = vrot.lane.b32.xlu0 %v4442, 64
        %v5266 = vpop.permute.xlu0 %5265
        %5267 = vrot.lane.b32.xlu0 %v4448, 64
        %v5268 = vpop.permute.xlu0 %5267
        %5269 = vrot.lane.b32.xlu0 %v4452, 64
        %v5270 = vpop.permute.xlu0 %5269
        %5271 = vrot.lane.b32.xlu0 %v4458, 64
        %v5272 = vpop.permute.xlu0 %5271
        %5273 = vrot.lane.b32.xlu0 %v4462, 64
        %v5274 = vpop.permute.xlu0 %5273
        %5275 = vrot.lane.b32.xlu0 %v4468, 64
        %v5276 = vpop.permute.xlu0 %5275
        %5277 = vrot.lane.b32.xlu0 %v4472, 64
        %v5278 = vpop.permute.xlu0 %5277
        %5279 = vrot.lane.b32.xlu0 %v4478, 64
        %v5280 = vpop.permute.xlu0 %5279
        %5281 = vrot.lane.b32.xlu0 %v4482, 64
        %v5282 = vpop.permute.xlu0 %5281
        %5283 = vrot.lane.b32.xlu0 %v4488, 64
        %v5284 = vpop.permute.xlu0 %5283
        %5285 = vrot.lane.b32.xlu0 %v4492, 64
        %v5286 = vpop.permute.xlu0 %5285
        %5287 = vrot.lane.b32.xlu0 %v4498, 64
        %v5288 = vpop.permute.xlu0 %5287
        %5289 = vrot.lane.b32.xlu0 %v4502, 64
        %v5290 = vpop.permute.xlu0 %5289
        %5291 = vrot.lane.b32.xlu0 %v4508, 64
        %v5292 = vpop.permute.xlu0 %5291
        %5293 = vrot.lane.b32.xlu0 %v4512, 64
        %v5294 = vpop.permute.xlu0 %5293
        %5295 = vrot.lane.b32.xlu0 %v4518, 64
        %v5296 = vpop.permute.xlu0 %5295
        %5297 = vrot.lane.b32.xlu0 %v4522, 64
        %v5298 = vpop.permute.xlu0 %5297
        %5299 = vrot.lane.b32.xlu0 %v4528, 64
        %v5300 = vpop.permute.xlu0 %5299
        %5301 = vrot.lane.b32.xlu0 %v4532, 64
        %v5302 = vpop.permute.xlu0 %5301
        %5303 = vrot.lane.b32.xlu0 %v4538, 64
        %v5304 = vpop.permute.xlu0 %5303
        %5305 = vrot.lane.b32.xlu0 %v4542, 64
        %v5306 = vpop.permute.xlu0 %5305
        %5307 = vrot.lane.b32.xlu0 %v4548, 64
        %v5308 = vpop.permute.xlu0 %5307
        %5309 = vrot.lane.b32.xlu0 %v4552, 64
        %v5310 = vpop.permute.xlu0 %5309
        %5311 = vrot.lane.b32.xlu0 %v4558, 64
        %v5312 = vpop.permute.xlu0 %5311
        %5313 = vrot.lane.b32.xlu0 %v4562, 64
        %v5314 = vpop.permute.xlu0 %5313
        %5315 = vrot.lane.b32.xlu0 %v4568, 64
        %v5316 = vpop.permute.xlu0 %5315
        %5317 = vrot.lane.b32.xlu0 %v4572, 64
        %v5318 = vpop.permute.xlu0 %5317
        %5319 = vrot.lane.b32.xlu0 %v4578, 64
        %v5320 = vpop.permute.xlu0 %5319
        %5321 = vrot.lane.b32.xlu0 %v4582, 64
        %v5322 = vpop.permute.xlu0 %5321
        %v5323 = vmul.f32 %v5260, %v1377
        %v5324 = vmul.f32 %v5262, %v1378
        %v5325 = vmul.f32 %v5264, %v1379
        %v5326 = vmul.f32 %v5266, %v1380
        %v5327 = vmul.f32 %v5268, %v1381
        %v5328 = vmul.f32 %v5270, %v1382
        %v5329 = vmul.f32 %v5272, %v1383
        %v5330 = vmul.f32 %v5274, %v1384
        %v5331 = vmul.f32 %v5276, %v1385
        %v5332 = vmul.f32 %v5278, %v1386
        %v5333 = vmul.f32 %v5280, %v1387
        %v5334 = vmul.f32 %v5282, %v1388
        %v5335 = vmul.f32 %v5284, %v1389
        %v5336 = vmul.f32 %v5286, %v1390
        %v5337 = vmul.f32 %v5288, %v1391
        %v5338 = vmul.f32 %v5290, %v1392
        %v5339 = vmul.f32 %v5292, %v1393
        %v5340 = vmul.f32 %v5294, %v1394
        %v5341 = vmul.f32 %v5296, %v1395
        %v5342 = vmul.f32 %v5298, %v1396
        %v5343 = vmul.f32 %v5300, %v1397
        %v5344 = vmul.f32 %v5302, %v1398
        %v5345 = vmul.f32 %v5304, %v1399
        %v5346 = vmul.f32 %v5306, %v1400
        %v5347 = vmul.f32 %v5308, %v1401
        %v5348 = vmul.f32 %v5310, %v1402
        %v5349 = vmul.f32 %v5312, %v1403
        %v5350 = vmul.f32 %v5314, %v1404
        %v5351 = vmul.f32 %v5316, %v1405
        %v5352 = vmul.f32 %v5318, %v1406
        %v5353 = vmul.f32 %v5320, %v1407
        %v5354 = vmul.f32 %v5322, %v1408
        %v5355 = vadd.f32 %v5227, %v5323
        %v5356 = vadd.f32 %v5228, %v5324
        %v5357 = vadd.f32 %v5229, %v5325
        %v5358 = vadd.f32 %v5230, %v5326
        %v5359 = vadd.f32 %v5231, %v5327
        %v5360 = vadd.f32 %v5232, %v5328
        %v5361 = vadd.f32 %v5233, %v5329
        %v5362 = vadd.f32 %v5234, %v5330
        %v5363 = vadd.f32 %v5235, %v5331
        %v5364 = vadd.f32 %v5236, %v5332
        %v5365 = vadd.f32 %v5237, %v5333
        %v5366 = vadd.f32 %v5238, %v5334
        %v5367 = vadd.f32 %v5239, %v5335
        %v5368 = vadd.f32 %v5240, %v5336
        %v5369 = vadd.f32 %v5241, %v5337
        %v5370 = vadd.f32 %v5242, %v5338
        %v5371 = vadd.f32 %v5243, %v5339
        %v5372 = vadd.f32 %v5244, %v5340
        %v5373 = vadd.f32 %v5245, %v5341
        %v5374 = vadd.f32 %v5246, %v5342
        %v5375 = vadd.f32 %v5247, %v5343
        %v5376 = vadd.f32 %v5248, %v5344
        %v5377 = vadd.f32 %v5249, %v5345
        %v5378 = vadd.f32 %v5250, %v5346
        %v5379 = vadd.f32 %v5251, %v5347
        %v5380 = vadd.f32 %v5252, %v5348
        %v5381 = vadd.f32 %v5253, %v5349
        %v5382 = vadd.f32 %v5254, %v5350
        %v5383 = vadd.f32 %v5255, %v5351
        %v5384 = vadd.f32 %v5256, %v5352
        %v5385 = vadd.f32 %v5257, %v5353
        %v5386 = vadd.f32 %v5258, %v5354
        %v5387 = vpack.c.bf16 %v5356, %v5355
        %v5388 = vpack.c.bf16 %v5358, %v5357
        %v5389 = vpack.c.bf16 %v5360, %v5359
        %v5390 = vpack.c.bf16 %v5362, %v5361
        %v5391 = vpack.c.bf16 %v5364, %v5363
        %v5392 = vpack.c.bf16 %v5366, %v5365
        %v5393 = vpack.c.bf16 %v5368, %v5367
        %v5394 = vpack.c.bf16 %v5370, %v5369
        %v5395 = vpack.c.bf16 %v5372, %v5371
        %v5396 = vpack.c.bf16 %v5374, %v5373
        %v5397 = vpack.c.bf16 %v5376, %v5375
        %v5398 = vpack.c.bf16 %v5378, %v5377
        %v5399 = vpack.c.bf16 %v5380, %v5379
        %v5400 = vpack.c.bf16 %v5382, %v5381
        %v5401 = vpack.c.bf16 %v5384, %v5383
        %v5402 = vpack.c.bf16 %v5386, %v5385
        %v5419 = vunpack.c.l.b16 %v5387
        %v5420 = vunpack.c.h.b16 %v5387
        %v5421 = vunpack.c.l.b16 %v5388
        %v5422 = vunpack.c.h.b16 %v5388
        %v5423 = vunpack.c.l.b16 %v5389
        %v5424 = vunpack.c.h.b16 %v5389
        %v5425 = vunpack.c.l.b16 %v5390
        %v5426 = vunpack.c.h.b16 %v5390
        %v5427 = vunpack.c.l.b16 %v5391
        %v5428 = vunpack.c.h.b16 %v5391
        %v5429 = vunpack.c.l.b16 %v5392
        %v5430 = vunpack.c.h.b16 %v5392
        %v5431 = vunpack.c.l.b16 %v5393
        %v5432 = vunpack.c.h.b16 %v5393
        %v5433 = vunpack.c.l.b16 %v5394
        %v5434 = vunpack.c.h.b16 %v5394
        %v5435 = vunpack.c.l.b16 %v5395
        %v5436 = vunpack.c.h.b16 %v5395
        %v5437 = vunpack.c.l.b16 %v5396
        %v5438 = vunpack.c.h.b16 %v5396
        %v5439 = vunpack.c.l.b16 %v5397
        %v5440 = vunpack.c.h.b16 %v5397
        %v5441 = vunpack.c.l.b16 %v5398
        %v5442 = vunpack.c.h.b16 %v5398
        %v5443 = vunpack.c.l.b16 %v5399
        %v5444 = vunpack.c.h.b16 %v5399
        %v5445 = vunpack.c.l.b16 %v5400
        %v5446 = vunpack.c.h.b16 %v5400
        %v5447 = vunpack.c.l.b16 %v5401
        %v5448 = vunpack.c.h.b16 %v5401
        %v5449 = vunpack.c.l.b16 %v5402
        %v5450 = vunpack.c.h.b16 %v5402
        %v5451 = vpack.c.b16 %v5419, %v5419
        %v5452 = vpack.c.b16 %v5420, %v5420
        %v5453 = vpack.c.b16 %v5421, %v5421
        %v5454 = vpack.c.b16 %v5422, %v5422
        %v5455 = vpack.c.b16 %v5423, %v5423
        %v5456 = vpack.c.b16 %v5424, %v5424
        %v5457 = vpack.c.b16 %v5425, %v5425
        %v5458 = vpack.c.b16 %v5426, %v5426
        %v5459 = vpack.c.b16 %v5427, %v5427
        %v5460 = vpack.c.b16 %v5428, %v5428
        %v5461 = vpack.c.b16 %v5429, %v5429
        %v5462 = vpack.c.b16 %v5430, %v5430
        %v5463 = vpack.c.b16 %v5431, %v5431
        %v5464 = vpack.c.b16 %v5432, %v5432
        %v5465 = vpack.c.b16 %v5433, %v5433
        %v5466 = vpack.c.b16 %v5434, %v5434
        %v5467 = vpack.c.b16 %v5435, %v5435
        %v5468 = vpack.c.b16 %v5436, %v5436
        %v5469 = vpack.c.b16 %v5437, %v5437
        %v5470 = vpack.c.b16 %v5438, %v5438
        %v5471 = vpack.c.b16 %v5439, %v5439
        %v5472 = vpack.c.b16 %v5440, %v5440
        %v5473 = vpack.c.b16 %v5441, %v5441
        %v5474 = vpack.c.b16 %v5442, %v5442
        %v5475 = vpack.c.b16 %v5443, %v5443
        %v5476 = vpack.c.b16 %v5444, %v5444
        %v5477 = vpack.c.b16 %v5445, %v5445
        %v5478 = vpack.c.b16 %v5446, %v5446
        %v5479 = vpack.c.b16 %v5447, %v5447
        %v5480 = vpack.c.b16 %v5448, %v5448
        %v5481 = vpack.c.b16 %v5449, %v5449
        %v5482 = vpack.c.b16 %v5450, %v5450
        %s5515 = scalar_lea.vmem %s471, 128 [#allocation12]
        %5516 = vst [vmem:[%s5515] sm:$0xf] %v5451
        %5517 = vst [vmem:[%s5515 + $0x4] sm:$0xf] %v5452
        %5518 = vst [vmem:[%s5515 + $0x8] sm:$0xf] %v5453
        %5519 = vst [vmem:[%s5515 + $0xc] sm:$0xf] %v5454
        %5520 = vst [vmem:[%s5515 + $0x10] sm:$0xf] %v5455
        %5521 = vst [vmem:[%s5515 + $0x14] sm:$0xf] %v5456
        %5522 = vst [vmem:[%s5515 + $0x18] sm:$0xf] %v5457
        %5523 = vst [vmem:[%s5515 + $0x1c] sm:$0xf] %v5458
        %5524 = vst [vmem:[%s5515 + $0x20] sm:$0xf] %v5459
        %5525 = vst [vmem:[%s5515 + $0x24] sm:$0xf] %v5460
        %5526 = vst [vmem:[%s5515 + $0x28] sm:$0xf] %v5461
        %5527 = vst [vmem:[%s5515 + $0x2c] sm:$0xf] %v5462
        %5528 = vst [vmem:[%s5515 + $0x30] sm:$0xf] %v5463
        %5529 = vst [vmem:[%s5515 + $0x34] sm:$0xf] %v5464
        %5530 = vst [vmem:[%s5515 + $0x38] sm:$0xf] %v5465
        %5531 = vst [vmem:[%s5515 + $0x3c] sm:$0xf] %v5466
        %5532 = vst [vmem:[%s5515 + $0x40] sm:$0xf] %v5467
        %5533 = vst [vmem:[%s5515 + $0x44] sm:$0xf] %v5468
        %5534 = vst [vmem:[%s5515 + $0x48] sm:$0xf] %v5469
        %5535 = vst [vmem:[%s5515 + $0x4c] sm:$0xf] %v5470
        %5536 = vst [vmem:[%s5515 + $0x50] sm:$0xf] %v5471
        %5537 = vst [vmem:[%s5515 + $0x54] sm:$0xf] %v5472
        %5538 = vst [vmem:[%s5515 + $0x58] sm:$0xf] %v5473
        %5539 = vst [vmem:[%s5515 + $0x5c] sm:$0xf] %v5474
        %5540 = vst [vmem:[%s5515 + $0x60] sm:$0xf] %v5475
        %5541 = vst [vmem:[%s5515 + $0x64] sm:$0xf] %v5476
        %5542 = vst [vmem:[%s5515 + $0x68] sm:$0xf] %v5477
        %5543 = vst [vmem:[%s5515 + $0x6c] sm:$0xf] %v5478
        %5544 = vst [vmem:[%s5515 + $0x70] sm:$0xf] %v5479
        %5545 = vst [vmem:[%s5515 + $0x74] sm:$0xf] %v5480
        %5546 = vst [vmem:[%s5515 + $0x78] sm:$0xf] %v5481
        %5547 = vst [vmem:[%s5515 + $0x7c] sm:$0xf] %v5482
        %v5548 = vpack.c.bf16 %v4783, %v4780
        %v5549 = vpack.c.bf16 %v4791, %v4788
        %v5550 = vpack.c.bf16 %v4799, %v4796
        %v5551 = vpack.c.bf16 %v4807, %v4804
        %v5552 = vpack.c.bf16 %v4815, %v4812
        %v5553 = vpack.c.bf16 %v4823, %v4820
        %v5554 = vpack.c.bf16 %v4831, %v4828
        %v5555 = vpack.c.bf16 %v4839, %v4836
        %v5556 = vpack.c.bf16 %v4847, %v4844
        %v5557 = vpack.c.bf16 %v4855, %v4852
        %v5558 = vpack.c.bf16 %v4863, %v4860
        %v5559 = vpack.c.bf16 %v4871, %v4868
        %v5560 = vpack.c.bf16 %v4879, %v4876
        %v5561 = vpack.c.bf16 %v4887, %v4884
        %v5562 = vpack.c.bf16 %v4895, %v4892
        %v5563 = vpack.c.bf16 %v4903, %v4900
        %v5580 = vunpack.c.l.b16 %v5548
        %v5581 = vunpack.c.h.b16 %v5548
        %v5582 = vunpack.c.l.b16 %v5549
        %v5583 = vunpack.c.h.b16 %v5549
        %v5584 = vunpack.c.l.b16 %v5550
        %v5585 = vunpack.c.h.b16 %v5550
        %v5586 = vunpack.c.l.b16 %v5551
        %v5587 = vunpack.c.h.b16 %v5551
        %v5588 = vunpack.c.l.b16 %v5552
        %v5589 = vunpack.c.h.b16 %v5552
        %v5590 = vunpack.c.l.b16 %v5553
        %v5591 = vunpack.c.h.b16 %v5553
        %v5592 = vunpack.c.l.b16 %v5554
        %v5593 = vunpack.c.h.b16 %v5554
        %v5594 = vunpack.c.l.b16 %v5555
        %v5595 = vunpack.c.h.b16 %v5555
        %v5596 = vunpack.c.l.b16 %v5556
        %v5597 = vunpack.c.h.b16 %v5556
        %v5598 = vunpack.c.l.b16 %v5557
        %v5599 = vunpack.c.h.b16 %v5557
        %v5600 = vunpack.c.l.b16 %v5558
        %v5601 = vunpack.c.h.b16 %v5558
        %v5602 = vunpack.c.l.b16 %v5559
        %v5603 = vunpack.c.h.b16 %v5559
        %v5604 = vunpack.c.l.b16 %v5560
        %v5605 = vunpack.c.h.b16 %v5560
        %v5606 = vunpack.c.l.b16 %v5561
        %v5607 = vunpack.c.h.b16 %v5561
        %v5608 = vunpack.c.l.b16 %v5562
        %v5609 = vunpack.c.h.b16 %v5562
        %v5610 = vunpack.c.l.b16 %v5563
        %v5611 = vunpack.c.h.b16 %v5563
        %v5612 = vpack.c.b16 %v5580, %v5580
        %v5613 = vpack.c.b16 %v5581, %v5581
        %v5614 = vpack.c.b16 %v5582, %v5582
        %v5615 = vpack.c.b16 %v5583, %v5583
        %v5616 = vpack.c.b16 %v5584, %v5584
        %v5617 = vpack.c.b16 %v5585, %v5585
        %v5618 = vpack.c.b16 %v5586, %v5586
        %v5619 = vpack.c.b16 %v5587, %v5587
        %v5620 = vpack.c.b16 %v5588, %v5588
        %v5621 = vpack.c.b16 %v5589, %v5589
        %v5622 = vpack.c.b16 %v5590, %v5590
        %v5623 = vpack.c.b16 %v5591, %v5591
        %v5624 = vpack.c.b16 %v5592, %v5592
        %v5625 = vpack.c.b16 %v5593, %v5593
        %v5626 = vpack.c.b16 %v5594, %v5594
        %v5627 = vpack.c.b16 %v5595, %v5595
        %v5628 = vpack.c.b16 %v5596, %v5596
        %v5629 = vpack.c.b16 %v5597, %v5597
        %v5630 = vpack.c.b16 %v5598, %v5598
        %v5631 = vpack.c.b16 %v5599, %v5599
        %v5632 = vpack.c.b16 %v5600, %v5600
        %v5633 = vpack.c.b16 %v5601, %v5601
        %v5634 = vpack.c.b16 %v5602, %v5602
        %v5635 = vpack.c.b16 %v5603, %v5603
        %v5636 = vpack.c.b16 %v5604, %v5604
        %v5637 = vpack.c.b16 %v5605, %v5605
        %v5638 = vpack.c.b16 %v5606, %v5606
        %v5639 = vpack.c.b16 %v5607, %v5607
        %v5640 = vpack.c.b16 %v5608, %v5608
        %v5641 = vpack.c.b16 %v5609, %v5609
        %v5642 = vpack.c.b16 %v5610, %v5610
        %v5643 = vpack.c.b16 %v5611, %v5611
        %s5676 = scalar_lea.vmem %s478, 128 [#allocation14]
        %5677 = vst [vmem:[%s5676] sm:$0xf] %v5612
        %5678 = vst [vmem:[%s5676 + $0x4] sm:$0xf] %v5613
        %5679 = vst [vmem:[%s5676 + $0x8] sm:$0xf] %v5614
        %5680 = vst [vmem:[%s5676 + $0xc] sm:$0xf] %v5615
        %5681 = vst [vmem:[%s5676 + $0x10] sm:$0xf] %v5616
        %5682 = vst [vmem:[%s5676 + $0x14] sm:$0xf] %v5617
        %5683 = vst [vmem:[%s5676 + $0x18] sm:$0xf] %v5618
        %5684 = vst [vmem:[%s5676 + $0x1c] sm:$0xf] %v5619
        %5685 = vst [vmem:[%s5676 + $0x20] sm:$0xf] %v5620
        %5686 = vst [vmem:[%s5676 + $0x24] sm:$0xf] %v5621
        %5687 = vst [vmem:[%s5676 + $0x28] sm:$0xf] %v5622
        %5688 = vst [vmem:[%s5676 + $0x2c] sm:$0xf] %v5623
        %5689 = vst [vmem:[%s5676 + $0x30] sm:$0xf] %v5624
        %5690 = vst [vmem:[%s5676 + $0x34] sm:$0xf] %v5625
        %5691 = vst [vmem:[%s5676 + $0x38] sm:$0xf] %v5626
        %5692 = vst [vmem:[%s5676 + $0x3c] sm:$0xf] %v5627
        %5693 = vst [vmem:[%s5676 + $0x40] sm:$0xf] %v5628
        %5694 = vst [vmem:[%s5676 + $0x44] sm:$0xf] %v5629
        %5695 = vst [vmem:[%s5676 + $0x48] sm:$0xf] %v5630
        %5696 = vst [vmem:[%s5676 + $0x4c] sm:$0xf] %v5631
        %5697 = vst [vmem:[%s5676 + $0x50] sm:$0xf] %v5632
        %5698 = vst [vmem:[%s5676 + $0x54] sm:$0xf] %v5633
        %5699 = vst [vmem:[%s5676 + $0x58] sm:$0xf] %v5634
        %5700 = vst [vmem:[%s5676 + $0x5c] sm:$0xf] %v5635
        %5701 = vst [vmem:[%s5676 + $0x60] sm:$0xf] %v5636
        %5702 = vst [vmem:[%s5676 + $0x64] sm:$0xf] %v5637
        %5703 = vst [vmem:[%s5676 + $0x68] sm:$0xf] %v5638
        %5704 = vst [vmem:[%s5676 + $0x6c] sm:$0xf] %v5639
        %5705 = vst [vmem:[%s5676 + $0x70] sm:$0xf] %v5640
        %5706 = vst [vmem:[%s5676 + $0x74] sm:$0xf] %v5641
        %5707 = vst [vmem:[%s5676 + $0x78] sm:$0xf] %v5642
        %5708 = vst [vmem:[%s5676 + $0x7c] sm:$0xf] %v5643
        %s5709 = sand.u32 %s190, 1
        %s5710 = scalar_lea.sflag [#allocation4], %s5709
        %s5711 = sand.u32 %s190, 1
        %s5712 = smul.addr %s5711, 256
        %s5713 = scalar_lea.vmem [#allocation11], %s5712
        %s5714 = sand.u32 %s32, 1
        %s5715 = scalar_lea.sflag [#allocation13], %s5714
        %s5716 = sand.u32 %s220, 1
        %s5717 = smul.addr %s5716, 256
        %s5718 = scalar_lea.vmem [#allocation12], %s5717
        %s5719 = sand.u32 %s32, 1
        %s5720 = scalar_lea.sflag [#allocation13], %s5719
        %s5721 = sand.u32 %s250, 1
        %s5722 = smul.addr %s5721, 256
        %s5723 = scalar_lea.vmem [#allocation14], %s5722
        // Predicated region
        $region61: #{tpu_custom_call.1} parent=39 // pred_check
          %p5724 = pneg %p200
        $region62: #{tpu_custom_call.1} parent=39 // pred_check_branch
          %5726 = sbr.rel (%p5724) target = $region64
        $region63: #{tpu_custom_call.1} parent=39 // pred_region
          #allocation16 [shape = 'u32[6]{0}', space=smem, size = 0x18, scoped, tag = 'DMA stride descriptor']
          %s5727 = smul.u32 2, %s37
          %s5728 = smul.u32 32, %s39
          %s5730 = ssub.s32 4096, 4096
          %5731 = vsyncadd %s5710, %s5730
          %s5732 = smul.addr %s5727, 64
          %s5733 = sadd.s32 %s5728, %s5732
          %s5734 = smul.addr %s38, 256
          %s5735 = sadd.s32 %s5733, %s5734
          %s5736 = smul.addr %s5735, 64
          %s5737 = scalar_lea.hbm %s5, %s5736
          %s5739 = sshll.u32 1, 14
          %s5740 = sxor.u32 4294967295, %s5739
          %s5743 = sshll.u32 7, 18
          %s5744 = sxor.u32 4294967295, %s5743
          %s5745 = sand.u32 0, %s5744
          %s5747 = sor.u32 %s5745, 0
          %s5748 = sshll.u32 %s5713, 4
          %s5749 = int_to_ptr.vmem [resolvable:$true] %s5748
          %5755 = sst [smem:[#allocation16]] 2048
          %s5756 = scalar_lea.smem [#allocation16], 1
          %5757 = sst [smem:[%s5756]] 4096
          %s5758 = scalar_lea.smem [#allocation16], 2
          %5759 = sst [smem:[%s5758]] 32
          %s5760 = scalar_lea.smem [#allocation16], 3
          %5761 = sst [smem:[%s5760]] 64
          %s5762 = scalar_lea.smem [#allocation16], 4
          %5763 = sst [smem:[%s5762]] 64
          %s5764 = scalar_lea.smem [#allocation16], 5
          %5765 = sst [smem:[%s5764]] 4
          %5767 = dma.general %s5749, 4096, %s5737, %s5710, 131072, [#allocation16], %s5747, 0
        $region64: #{tpu_custom_call.1} parent=39 // pred_fallthru
          _
        // Predicated region
        $region65: #{tpu_custom_call.1} parent=39 // pred_check
          %p5768 = pneg %p230
        $region66: #{tpu_custom_call.1} parent=39 // pred_check_branch
          %5770 = sbr.rel (%p5768) target = $region68
        $region67: #{tpu_custom_call.1} parent=39 // pred_region
          #allocation18 [shape = 'u32[6]{0}', space=smem, size = 0x18, scoped, tag = 'DMA stride descriptor']
          %s5771 = smul.u32 2, %s37
          %s5772 = smul.u32 32, %s39
          %s5774 = ssub.s32 4096, 4096
          %5775 = vsyncadd %s5715, %s5774
          %s5776 = smul.addr %s5771, 64
          %s5777 = sadd.s32 %s5772, %s5776
          %s5778 = smul.addr %s38, 256
          %s5779 = sadd.s32 %s5777, %s5778
          %s5780 = smul.addr %s5779, 64
          %s5781 = scalar_lea.hbm %s6, %s5780
          %s5783 = sshll.u32 1, 14
          %s5784 = sxor.u32 4294967295, %s5783
          %s5787 = sshll.u32 7, 18
          %s5788 = sxor.u32 4294967295, %s5787
          %s5789 = sand.u32 0, %s5788
          %s5791 = sor.u32 %s5789, 0
          %s5792 = sshll.u32 %s5718, 4
          %s5793 = int_to_ptr.vmem [resolvable:$true] %s5792
          %5799 = sst [smem:[#allocation18]] 2048
          %s5800 = scalar_lea.smem [#allocation18], 1
          %5801 = sst [smem:[%s5800]] 4096
          %s5802 = scalar_lea.smem [#allocation18], 2
          %5803 = sst [smem:[%s5802]] 32
          %s5804 = scalar_lea.smem [#allocation18], 3
          %5805 = sst [smem:[%s5804]] 64
          %s5806 = scalar_lea.smem [#allocation18], 4
          %5807 = sst [smem:[%s5806]] 64
          %s5808 = scalar_lea.smem [#allocation18], 5
          %5809 = sst [smem:[%s5808]] 4
          %5811 = dma.general %s5793, 4096, %s5781, %s5715, 131072, [#allocation18], %s5791, 0
        $region68: #{tpu_custom_call.1} parent=39 // pred_fallthru
          _
        // Predicated region
        $region69: #{tpu_custom_call.1} parent=39 // pred_check
          %p5812 = pneg %p260
        $region70: #{tpu_custom_call.1} parent=39 // pred_check_branch
          %5814 = sbr.rel (%p5812) target = $region72
        $region71: #{tpu_custom_call.1} parent=39 // pred_region
          #allocation20 [shape = 'u32[6]{0}', space=smem, size = 0x18, scoped, tag = 'DMA stride descriptor']
          %s5815 = smul.u32 2, %s37
          %s5816 = smul.u32 32, %s39
          %s5818 = ssub.s32 4096, 4096
          %5819 = vsyncadd %s5720, %s5818
          %s5820 = smul.addr %s5815, 64
          %s5821 = sadd.s32 %s5816, %s5820
          %s5822 = smul.addr %s38, 256
          %s5823 = sadd.s32 %s5821, %s5822
          %s5824 = smul.addr %s5823, 64
          %s5825 = scalar_lea.hbm %s7, %s5824
          %s5827 = sshll.u32 1, 14
          %s5828 = sxor.u32 4294967295, %s5827
          %s5831 = sshll.u32 7, 18
          %s5832 = sxor.u32 4294967295, %s5831
          %s5833 = sand.u32 0, %s5832
          %s5835 = sor.u32 %s5833, 0
          %s5836 = sshll.u32 %s5723, 4
          %s5837 = int_to_ptr.vmem [resolvable:$true] %s5836
          %5843 = sst [smem:[#allocation20]] 2048
          %s5844 = scalar_lea.smem [#allocation20], 1
          %5845 = sst [smem:[%s5844]] 4096
          %s5846 = scalar_lea.smem [#allocation20], 2
          %5847 = sst [smem:[%s5846]] 32
          %s5848 = scalar_lea.smem [#allocation20], 3
          %5849 = sst [smem:[%s5848]] 64
          %s5850 = scalar_lea.smem [#allocation20], 4
          %5851 = sst [smem:[%s5850]] 64
          %s5852 = scalar_lea.smem [#allocation20], 5
          %5853 = sst [smem:[%s5852]] 4
          %5855 = dma.general %s5837, 4096, %s5825, %s5720, 131072, [#allocation20], %s5835, 0
        $region72: #{tpu_custom_call.1} parent=39 // pred_fallthru
          _
      $region40: #{tpu_custom_call.1} parent=5 // pred_fallthru
        _
      %p5856 = scmp.le.s32.totalorder 2, %s27
      // Predicated region
      $region73: #{tpu_custom_call.1} parent=5 // pred_check
        %p5857 = pneg %p5856
      $region74: #{tpu_custom_call.1} parent=5 // pred_check_branch
        %5859 = sbr.rel (%p5857) target = $region76
      $region75: #{tpu_custom_call.1} parent=5 // pred_region
        %s5860 = ssub.s32 %s27, 2
        // Predicated region
        $region77: #{tpu_custom_call.1} parent=75 // pred_check
          %p5861 = pneg %p206
        $region78: #{tpu_custom_call.1} parent=75 // pred_check_branch
          %5863 = sbr.rel (%p5861) target = $region80
        $region79: #{tpu_custom_call.1} parent=75 // pred_region
          %s5864 = sand.u32 %s191, 1
          %s5865 = scalar_lea.sflag [#allocation4], %s5864
          %s5866 = sand.u32 %s191, 1
          %s5867 = smul.addr %s5866, 256
          %s5868 = scalar_lea.vmem [#allocation11], %s5867
          %5869 = dma.done %s5865, 4096
        $region80: #{tpu_custom_call.1} parent=75 // pred_fallthru
          _
        // Predicated region
        $region81: #{tpu_custom_call.1} parent=75 // pred_check
          %p5870 = pneg %p236
        $region82: #{tpu_custom_call.1} parent=75 // pred_check_branch
          %5872 = sbr.rel (%p5870) target = $region84
        $region83: #{tpu_custom_call.1} parent=75 // pred_region
          %s5873 = sand.u32 %s33, 1
          %s5874 = scalar_lea.sflag [#allocation13], %s5873
          %s5875 = sand.u32 %s221, 1
          %s5876 = smul.addr %s5875, 256
          %s5877 = scalar_lea.vmem [#allocation12], %s5876
          %5878 = dma.done %s5874, 4096
        $region84: #{tpu_custom_call.1} parent=75 // pred_fallthru
          _
        // Predicated region
        $region85: #{tpu_custom_call.1} parent=75 // pred_check
          %p5879 = pneg %p266
        $region86: #{tpu_custom_call.1} parent=75 // pred_check_branch
          %5881 = sbr.rel (%p5879) target = $region88
        $region87: #{tpu_custom_call.1} parent=75 // pred_region
          %s5882 = sand.u32 %s33, 1
          %s5883 = scalar_lea.sflag [#allocation13], %s5882
          %s5884 = sand.u32 %s251, 1
          %s5885 = smul.addr %s5884, 256
          %s5886 = scalar_lea.vmem [#allocation14], %s5885
          %5887 = dma.done %s5883, 4096
        $region88: #{tpu_custom_call.1} parent=75 // pred_fallthru
          _
      $region76: #{tpu_custom_call.1} parent=5 // pred_fallthru
        _
    $region6: #{tpu_custom_call.1} parent=1 // loop_footer
      %s31 = sadd.s32 1, %s27
    $region7: #{tpu_custom_call.1} parent=1 // loop_footer_branch
      %26 = sbr.rel target = $region3
    $region8: #{tpu_custom_call.1} parent=1 // loop_exit
      _
    %5888 = vsyncpa [#allocation3], 1
    %s5889 = scalar_lea.sflag [#allocation3], 1
    %5890 = vsyncpa %s5889, 1
    %5891 = vsyncpa [#allocation6], 1
    %s5892 = scalar_lea.sflag [#allocation6], 1
    %5893 = vsyncpa %s5892, 1
    %5894 = vsyncpa [#allocation9], 1
    %5895 = vsyncpa [#allocation4], 1
    %s5896 = scalar_lea.sflag [#allocation4], 1
    %5897 = vsyncpa %s5896, 1
    %5898 = vsyncpa [#allocation13], 1
    %s5899 = scalar_lea.sflag [#allocation13], 1
    %5900 = vsyncpa %s5899, 1

</llo_original>
